<compile_context>
chip_gen: v6e
topology: v6e:2x2x1
jax: 0.10.0
libtpu: 0.0.40
codegen_flags: <defaults>
</compile_context>

<pallas_src>
import functools
import numpy as np
import jax
import jax.numpy as jnp
from jax import lax
from jax.experimental import pallas as pl
from jax.experimental.pallas import tpu as pltpu

EPS = 1e-5  # PyTorch InstanceNorm3d default eps (affine=False, no running stats)


# ----------------------------- Pallas kernels -----------------------------

def _row_instance_norm(x):
    # x: (C, P) f32 -- InstanceNorm over the spatial (lane) axis, biased variance.
    mean = jnp.mean(x, axis=-1, keepdims=True)
    ctr = x - mean
    var = jnp.mean(ctr * ctr, axis=-1, keepdims=True)
    return ctr * lax.rsqrt(var + EPS)


def _conv_in_act_kernel(p_ref, w_ref, o_ref, *, act):
    # One batch sample: Conv3d as im2col matmul (bf16 MXU operands, f32 acc)
    # + InstanceNorm3d + activation.  No bias: it cancels under the norm.
    acc = jnp.dot(w_ref[...], p_ref[0], preferred_element_type=jnp.float32)
    y = _row_instance_norm(acc)
    if act == "relu":
        y = jnp.maximum(y, 0.0)
    else:                                    # LeakyReLU(0.2)
        y = jnp.where(y > 0.0, y, 0.2 * y)
    o_ref[0] = y.astype(o_ref.dtype)


def _tail_kernel(h_ref, mdown_ref, wres_ref, smat_ref, noise_ref,
                 mu_ref, z_ref, *, inv_p, n_blocks):
    # Whole post-down-1 tail in ONE program, weights VMEM-resident:
    #   a = ReLU(IN(conv_down2(h)))            (folded dense operator)
    #   n_blocks x ResidualBlock (last one is the UNIT shared block)
    #   mu = a ; z = noise + mu
    # Activations live as (N, C*P) rows (256 lanes); all math f32 on the VPU,
    # bf16 only as MXU operands.
    smat = smat_ref[...]                     # (C*P, C*P) block-diag group-sum

    def inorm(a):                            # InstanceNorm3d(affine=False)
        mean = jnp.dot(a, smat, preferred_element_type=jnp.float32) * inv_p
        ctr = a - mean
        var = jnp.dot(ctr * ctr, smat, preferred_element_type=jnp.float32) * inv_p
        return ctr * lax.rsqrt(var + EPS)

    a = jnp.dot(h_ref[...], mdown_ref[...], preferred_element_type=jnp.float32)
    a = jnp.maximum(inorm(a), 0.0)           # down-2: conv + IN + ReLU

    for b in range(n_blocks):                # 3 residual blocks + shared block
        t = jnp.dot(a.astype(jnp.bfloat16), wres_ref[2 * b],
                    preferred_element_type=jnp.float32)
        t = jnp.maximum(inorm(t), 0.0)       # conv1 + IN + ReLU
        t = jnp.dot(t.astype(jnp.bfloat16), wres_ref[2 * b + 1],
                    preferred_element_type=jnp.float32)
        a = a + inorm(t)                     # x + IN(conv2(.))

    mu_ref[...] = a
    z_ref[...] = noise_ref[...] + a          # reparameterization


# ----------------------------- pallas_call wrappers -----------------------------

def fused_conv_in_act(patches, w2, act):
    # patches: (N, K, P) bf16;  w2: (Cout, K) bf16  ->  (N, Cout, P) bf16.
    n, k, p = patches.shape
    cout = w2.shape[0]
    return pl.pallas_call(
        functools.partial(_conv_in_act_kernel, act=act),
        out_shape=jax.ShapeDtypeStruct((n, cout, p), jnp.bfloat16),
        grid=(n,),
        in_specs=[pl.BlockSpec((1, k, p), lambda i: (i, 0, 0)),
                  pl.BlockSpec((cout, k), lambda i: (0, 0))],
        out_specs=pl.BlockSpec((1, cout, p), lambda i: (i, 0, 0)),
        compiler_params=pltpu.CompilerParams(
            dimension_semantics=("parallel",)),   # 2 samples -> 2 v7x TCs
    )(patches, w2)


def fused_tail(h_flat, m_down, w_res, s_mat, noise, *, p_final, n_blocks):
    # Single program, whole arrays as VMEM blocks (total < 2 MB on all gens).
    n = h_flat.shape[0]
    cp = m_down.shape[1]
    return pl.pallas_call(
        functools.partial(_tail_kernel, inv_p=1.0 / p_final, n_blocks=n_blocks),
        out_shape=(jax.ShapeDtypeStruct((n, cp), jnp.float32),
                   jax.ShapeDtypeStruct((n, cp), jnp.float32)),
    )(h_flat, m_down, w_res, s_mat, noise)


# ----------------------------- parameters & folding -----------------------------

def _init_conv_w(key, cout, cin, k):
    # PyTorch Conv3d weight layout (Cout, Cin, k, k, k), kaiming-uniform-like bound.
    fan_in = cin * k ** 3
    bound = float(1.0 / np.sqrt(fan_in))
    return jax.random.uniform(key, (cout, cin, k, k, k), jnp.float32, -bound, bound)


def init_encoder(key, in_channels=1, dim=8, n_downsample=2):
    # No conv biases: every conv feeds InstanceNorm3d(affine=False), under which
    # a per-channel bias cancels exactly.
    keys = iter(jax.random.split(key, 1 + n_downsample + 8))
    params = {"stem": _init_conv_w(next(keys), dim, in_channels, 7)}
    d = dim
    downs = []
    for _ in range(n_downsample):
        downs.append(_init_conv_w(next(keys), 2 * d, d, 4))
        d *= 2
    params["downs"] = downs
    # 3 ResidualBlocks + shared block (UNIT: shared_block = ResidualBlock(final_dim)).
    params["res"] = [(_init_conv_w(next(keys), d, d, 3),
                      _init_conv_w(next(keys), d, d, 3)) for _ in range(4)]
    return params


def _conv3d_as_matrix(w, in_cdhw, stride, pad):
    # Dense operator M with flatten(conv3d(x, w)) == flatten(x) @ M  (no bias).
    # Each entry of M is a single weight value (or 0) => exact reindexing.
    cin, d, h, wd = in_cdhw
    n_in = cin * d * h * wd
    basis = jnp.eye(n_in, dtype=jnp.float32).reshape(n_in, cin, d, h, wd)
    out = lax.conv_general_dilated(
        basis, w, window_strides=(stride,) * 3, padding=[(pad, pad)] * 3,
        dimension_numbers=("NCDHW", "OIDHW", "NCDHW"))
    return out.reshape(n_in, -1)


def prepare_encoder(params, in_size):
    """One-time weight preprocessing (off the forward data path)."""
    n_down = len(params["downs"])
    assert n_down >= 1
    s = in_size - 6                               # after the valid 7^3 stem conv
    for _ in range(n_down - 1):
        s = (s + 2 - 4) // 2 + 1
    s_last_in = s                                 # volume seen by the last downsample
    s_final = (s_last_in + 2 - 4) // 2 + 1
    c_final = params["downs"][-1].shape[0]
    p_final = s_final ** 3

    return {
        # im2col-matmul weights for the patch-based layers, bf16 MXU operands.
        "w_stem": params["stem"].reshape(params["stem"].shape[0], -1)
                                 .astype(jnp.bfloat16),
        "w_downs_patches": [w.reshape(w.shape[0], -1).astype(jnp.bfloat16)
                            for w in params["downs"][:-1]],
        # Last downsample folded to a dense operator on the flattened volume.
        "m_down_last": _conv3d_as_matrix(
            params["downs"][-1],
            (params["downs"][-1].shape[1], s_last_in, s_last_in, s_last_in),
            stride=2, pad=1).astype(jnp.bfloat16),
        # Residual-tail convs folded to (C*P, C*P) operators, stacked.
        "w_res": jnp.stack(
            [_conv3d_as_matrix(w, (c_final, s_final, s_final, s_final), 1, 1)
             for blk in params["res"] for w in blk]).astype(jnp.bfloat16),
        # Block-diagonal group-sum matrix for the in-kernel InstanceNorm.
        "s_mat": jnp.asarray(np.kron(np.eye(c_final, dtype=np.float32),
                                     np.ones((p_final, p_final), np.float32))),
    }


# ----------------------------- encoder forward -----------------------------

@jax.jit
def encoder_forward(prep, x, noise_key):
    """x: (N, C_in, D, H, W) f32 (PyTorch NCDHW).  Returns (mu, z), f32 NCDHW."""
    n = x.shape[0]

    # Stem: Conv3d(in, dim, 7) + InstanceNorm3d + LeakyReLU(0.2).
    pat = lax.conv_general_dilated_patches(
        x.astype(jnp.bfloat16), (7, 7, 7), (1, 1, 1), [(0, 0)] * 3)
    sp = pat.shape[-3:]
    pat = pat.reshape(n, pat.shape[1], sp[0] * sp[1] * sp[2])
    h = fused_conv_in_act(pat, prep["w_stem"], act="lrelu")
    h = h.reshape(n, h.shape[1], *sp)              # free reshape back to NCDHW

    # All but the last downsample: Conv3d(d, 2d, 4, s2, p1) + IN + ReLU.
    for w in prep["w_downs_patches"]:
        pat = lax.conv_general_dilated_patches(
            h, (4, 4, 4), (2, 2, 2), [(1, 1)] * 3)
        sp = pat.shape[-3:]
        pat = pat.reshape(n, pat.shape[1], sp[0] * sp[1] * sp[2])
        h = fused_conv_in_act(pat, w, act="relu")
        h = h.reshape(n, h.shape[1], *sp)

    # Fused tail: last downsample + 3 ResidualBlocks + shared block + reparam.
    d_in = h.shape[2]
    d_out = (d_in + 2 - 4) // 2 + 1
    p_final = d_out ** 3
    c_final = prep["m_down_last"].shape[1] // p_final
    n_blocks = prep["w_res"].shape[0] // 2
    h_flat = h.reshape(n, -1)                      # (N, C*D*H*W) bf16, free reshape
    noise = jax.random.normal(noise_key, (n, c_final * p_final), jnp.float32)
    mu, z = fused_tail(h_flat, prep["m_down_last"], prep["w_res"],
                       prep["s_mat"], noise, p_final=p_final, n_blocks=n_blocks)
    out_shape = (n, c_final, d_out, d_out, d_out)
    return mu.reshape(out_shape), z.reshape(out_shape)


if __name__ == "__main__":
    key = jax.random.PRNGKey(0)
    pkey, xkey, nkey = jax.random.split(key, 3)
    # Small config: in_channels=1, dim=8, n_downsample=2 -> final dim 32.
    params = init_encoder(pkey, in_channels=1, dim=8, n_downsample=2)
    prep = prepare_encoder(params, in_size=14)
    # Input in PyTorch NCDHW layout: (batch=2, C=1, D=H=W=14).
    x = jax.random.normal(xkey, (2, 1, 14, 14, 14), jnp.float32)
    mu, z = encoder_forward(prep, x, nkey)
    jax.block_until_ready((mu, z))
    assert mu.shape == (2, 32, 2, 2, 2) and z.shape == (2, 32, 2, 2, 2)
    assert mu.dtype == jnp.float32 and z.dtype == jnp.float32
    print("KERNEL_OK")
</pallas_src>

<mosaic_0001>
module attributes {stable_mosaic.version = 11 : i64} {
  func.func @_conv_in_act_kernel(%arg0: i32, %arg1: memref<1x343x512xbf16, #tpu.memory_space<vmem>>, %arg2: memref<8x343xbf16, #tpu.memory_space<vmem>>, %arg3: memref<1x8x512xbf16, #tpu.memory_space<vmem>>) attributes {dimension_semantics = [#tpu.dimension_semantics<parallel>], iteration_bounds = array<i64: 2>, scalar_prefetch = 0 : i64, scratch_operands = 0 : i64, tpu.core_type = #tpu.core_type<tc>, window_params = [{transform_indices = @transform_0, window_bounds = array<i64: 1, 343, 512>}, {pipeline_mode = #tpu.pipeline_mode<synchronous>, transform_indices = @transform_1, window_bounds = array<i64: 8, 343>}, {transform_indices = @transform_2, window_bounds = array<i64: 1, 8, 512>}]} {
    %c0 = arith.constant 0 : index
    %c0_0 = arith.constant 0 : index
    %0 = vector.load %arg2[%c0, %c0_0] : memref<8x343xbf16, #tpu.memory_space<vmem>>, vector<8x343xbf16>
    %c0_1 = arith.constant 0 : index
    %c0_2 = arith.constant 0 : index
    %c0_3 = arith.constant 0 : index
    %1 = vector.load %arg1[%c0_1, %c0_2, %c0_3] : memref<1x343x512xbf16, #tpu.memory_space<vmem>>, vector<1x343x512xbf16>
    %2 = vector.shape_cast %1 : vector<1x343x512xbf16> to vector<343x512xbf16>
    %cst = arith.constant dense<0.000000e+00> : vector<8x512xf32>
    %3 = tpu.matmul %0, %2, %cst {dimension_numbers = #tpu.dot_dimension_numbers<[1], [0], [0], [1], [0, 0, 1, 1], [], []>} : vector<8x343xbf16>, vector<343x512xbf16>, vector<8x512xf32> -> vector<8x512xf32>
    %cst_4 = arith.constant dense<0.000000e+00> : vector<8xf32>
    %4 = vector.multi_reduction <add>, %3, %cst_4 [1] : vector<8x512xf32> to vector<8xf32>
    %5 = vector.shape_cast %4 : vector<8xf32> to vector<8x1xf32>
    %cst_5 = arith.constant 5.120000e+02 : f32
    %6 = vector.broadcast %cst_5 : f32 to vector<8x1xf32>
    %7 = arith.divf %5, %6 : vector<8x1xf32>
    %8 = vector.broadcast %7 : vector<8x1xf32> to vector<8x512xf32>
    %9 = arith.subf %3, %8 : vector<8x512xf32>
    %10 = arith.mulf %9, %9 : vector<8x512xf32>
    %cst_6 = arith.constant dense<0.000000e+00> : vector<8xf32>
    %11 = vector.multi_reduction <add>, %10, %cst_6 [1] : vector<8x512xf32> to vector<8xf32>
    %12 = vector.shape_cast %11 : vector<8xf32> to vector<8x1xf32>
    %cst_7 = arith.constant 5.120000e+02 : f32
    %13 = vector.broadcast %cst_7 : f32 to vector<8x1xf32>
    %14 = arith.divf %12, %13 : vector<8x1xf32>
    %cst_8 = arith.constant 9.99999974E-6 : f32
    %15 = vector.broadcast %cst_8 : f32 to vector<8x1xf32>
    %16 = arith.addf %14, %15 : vector<8x1xf32>
    %17 = math.rsqrt %16 : vector<8x1xf32>
    %18 = vector.broadcast %17 : vector<8x1xf32> to vector<8x512xf32>
    %19 = arith.mulf %9, %18 : vector<8x512xf32>
    %cst_9 = arith.constant 0.000000e+00 : f32
    %20 = vector.broadcast %cst_9 : f32 to vector<8x512xf32>
    %21 = arith.cmpf ogt, %19, %20 : vector<8x512xf32>
    %cst_10 = arith.constant 2.000000e-01 : f32
    %22 = vector.broadcast %cst_10 : f32 to vector<8x512xf32>
    %23 = arith.mulf %22, %19 : vector<8x512xf32>
    %24 = arith.select %21, %19, %23 : vector<8x512xi1>, vector<8x512xf32>
    %25 = arith.truncf %24 : vector<8x512xf32> to vector<8x512xbf16>
    %c0_11 = arith.constant 0 : index
    %c0_12 = arith.constant 0 : index
    %c0_13 = arith.constant 0 : index
    %26 = vector.load %arg3[%c0_11, %c0_12, %c0_13] : memref<1x8x512xbf16, #tpu.memory_space<vmem>>, vector<1x8x512xbf16>
    %27 = vector.shape_cast %26 : vector<1x8x512xbf16> to vector<8x512xbf16>
    %28 = vector.shape_cast %25 : vector<8x512xbf16> to vector<1x8x512xbf16>
    tpu.vector_store %arg3[%c0_11, %c0_12, %c0_13], %28 {strides = array<i32>} : memref<1x8x512xbf16, #tpu.memory_space<vmem>>, vector<1x8x512xbf16>,
    return
  }
  func.func @transform_0(%arg0: i32) -> (i32, i32, i32) {
    %c0_i32 = arith.constant 0 : i32
    %c0_i32_0 = arith.constant 0 : i32
    %c0_i32_1 = arith.constant 0 : i32
    return %arg0, %c0_i32, %c0_i32_0 : i32, i32, i32
  }
  func.func @transform_1(%arg0: i32) -> (i32, i32) {
    %c0_i32 = arith.constant 0 : i32
    %c0_i32_0 = arith.constant 0 : i32
    %c0_i32_1 = arith.constant 0 : i32
    return %c0_i32, %c0_i32_0 : i32, i32
  }
  func.func @transform_2(%arg0: i32) -> (i32, i32, i32) {
    %c0_i32 = arith.constant 0 : i32
    %c0_i32_0 = arith.constant 0 : i32
    %c0_i32_1 = arith.constant 0 : i32
    return %arg0, %c0_i32, %c0_i32_0 : i32, i32, i32
  }
}

module attributes {stable_mosaic.version = 11 : i64} {
  func.func @_conv_in_act_kernel(%arg0: i32, %arg1: memref<1x512x64xbf16, #tpu.memory_space<vmem>>, %arg2: memref<16x512xbf16, #tpu.memory_space<vmem>>, %arg3: memref<1x16x64xbf16, #tpu.memory_space<vmem>>) attributes {dimension_semantics = [#tpu.dimension_semantics<parallel>], iteration_bounds = array<i64: 2>, scalar_prefetch = 0 : i64, scratch_operands = 0 : i64, tpu.core_type = #tpu.core_type<tc>, window_params = [{transform_indices = @transform_0, window_bounds = array<i64: 1, 512, 64>}, {pipeline_mode = #tpu.pipeline_mode<synchronous>, transform_indices = @transform_1, window_bounds = array<i64: 16, 512>}, {transform_indices = @transform_2, window_bounds = array<i64: 1, 16, 64>}]} {
    %c0 = arith.constant 0 : index
    %c0_0 = arith.constant 0 : index
    %0 = vector.load %arg2[%c0, %c0_0] : memref<16x512xbf16, #tpu.memory_space<vmem>>, vector<16x512xbf16>
    %c0_1 = arith.constant 0 : index
    %c0_2 = arith.constant 0 : index
    %c0_3 = arith.constant 0 : index
    %1 = vector.load %arg1[%c0_1, %c0_2, %c0_3] : memref<1x512x64xbf16, #tpu.memory_space<vmem>>, vector<1x512x64xbf16>
    %2 = vector.shape_cast %1 : vector<1x512x64xbf16> to vector<512x64xbf16>
    %cst = arith.constant dense<0.000000e+00> : vector<16x64xf32>
    %3 = tpu.matmul %0, %2, %cst {dimension_numbers = #tpu.dot_dimension_numbers<[1], [0], [0], [1], [0, 0, 1, 1], [], []>} : vector<16x512xbf16>, vector<512x64xbf16>, vector<16x64xf32> -> vector<16x64xf32>
    %cst_4 = arith.constant dense<0.000000e+00> : vector<16xf32>
    %4 = vector.multi_reduction <add>, %3, %cst_4 [1] : vector<16x64xf32> to vector<16xf32>
    %5 = vector.shape_cast %4 : vector<16xf32> to vector<16x1xf32>
    %cst_5 = arith.constant 6.400000e+01 : f32
    %6 = vector.broadcast %cst_5 : f32 to vector<16x1xf32>
    %7 = arith.divf %5, %6 : vector<16x1xf32>
    %8 = vector.broadcast %7 : vector<16x1xf32> to vector<16x64xf32>
    %9 = arith.subf %3, %8 : vector<16x64xf32>
    %10 = arith.mulf %9, %9 : vector<16x64xf32>
    %cst_6 = arith.constant dense<0.000000e+00> : vector<16xf32>
    %11 = vector.multi_reduction <add>, %10, %cst_6 [1] : vector<16x64xf32> to vector<16xf32>
    %12 = vector.shape_cast %11 : vector<16xf32> to vector<16x1xf32>
    %cst_7 = arith.constant 6.400000e+01 : f32
    %13 = vector.broadcast %cst_7 : f32 to vector<16x1xf32>
    %14 = arith.divf %12, %13 : vector<16x1xf32>
    %cst_8 = arith.constant 9.99999974E-6 : f32
    %15 = vector.broadcast %cst_8 : f32 to vector<16x1xf32>
    %16 = arith.addf %14, %15 : vector<16x1xf32>
    %17 = math.rsqrt %16 : vector<16x1xf32>
    %18 = vector.broadcast %17 : vector<16x1xf32> to vector<16x64xf32>
    %19 = arith.mulf %9, %18 : vector<16x64xf32>
    %cst_9 = arith.constant 0.000000e+00 : f32
    %20 = vector.broadcast %cst_9 : f32 to vector<16x64xf32>
    %21 = arith.maximumf %19, %20 : vector<16x64xf32>
    %22 = arith.truncf %21 : vector<16x64xf32> to vector<16x64xbf16>
    %c0_10 = arith.constant 0 : index
    %c0_11 = arith.constant 0 : index
    %c0_12 = arith.constant 0 : index
    %23 = vector.load %arg3[%c0_10, %c0_11, %c0_12] : memref<1x16x64xbf16, #tpu.memory_space<vmem>>, vector<1x16x64xbf16>
    %24 = vector.shape_cast %23 : vector<1x16x64xbf16> to vector<16x64xbf16>
    %25 = vector.shape_cast %22 : vector<16x64xbf16> to vector<1x16x64xbf16>
    tpu.vector_store %arg3[%c0_10, %c0_11, %c0_12], %25 {strides = array<i32>} : memref<1x16x64xbf16, #tpu.memory_space<vmem>>, vector<1x16x64xbf16>,
    return
  }
  func.func @transform_0(%arg0: i32) -> (i32, i32, i32) {
    %c0_i32 = arith.constant 0 : i32
    %c0_i32_0 = arith.constant 0 : i32
    %c0_i32_1 = arith.constant 0 : i32
    return %arg0, %c0_i32, %c0_i32_0 : i32, i32, i32
  }
  func.func @transform_1(%arg0: i32) -> (i32, i32) {
    %c0_i32 = arith.constant 0 : i32
    %c0_i32_0 = arith.constant 0 : i32
    %c0_i32_1 = arith.constant 0 : i32
    return %c0_i32, %c0_i32_0 : i32, i32
  }
  func.func @transform_2(%arg0: i32) -> (i32, i32, i32) {
    %c0_i32 = arith.constant 0 : i32
    %c0_i32_0 = arith.constant 0 : i32
    %c0_i32_1 = arith.constant 0 : i32
    return %arg0, %c0_i32, %c0_i32_0 : i32, i32, i32
  }
}

module attributes {stable_mosaic.version = 11 : i64} {
  func.func @_tail_kernel(%arg0: memref<2x1024xbf16, #tpu.memory_space<vmem>>, %arg1: memref<1024x256xbf16, #tpu.memory_space<vmem>>, %arg2: memref<8x256x256xbf16, #tpu.memory_space<vmem>>, %arg3: memref<256x256xf32, #tpu.memory_space<vmem>>, %arg4: memref<2x256xf32, #tpu.memory_space<vmem>>, %arg5: memref<2x256xf32, #tpu.memory_space<vmem>>, %arg6: memref<2x256xf32, #tpu.memory_space<vmem>>) attributes {dimension_semantics = [], scalar_prefetch = 0 : i64, scratch_operands = 0 : i64, tpu.core_type = #tpu.core_type<tc>} {
    %c0 = arith.constant 0 : index
    %c0_0 = arith.constant 0 : index
    %0 = vector.load %arg3[%c0, %c0_0] : memref<256x256xf32, #tpu.memory_space<vmem>>, vector<256x256xf32>
    %c0_1 = arith.constant 0 : index
    %c0_2 = arith.constant 0 : index
    %1 = vector.load %arg0[%c0_1, %c0_2] : memref<2x1024xbf16, #tpu.memory_space<vmem>>, vector<2x1024xbf16>
    %c0_3 = arith.constant 0 : index
    %c0_4 = arith.constant 0 : index
    %2 = vector.load %arg1[%c0_3, %c0_4] : memref<1024x256xbf16, #tpu.memory_space<vmem>>, vector<1024x256xbf16>
    %cst = arith.constant dense<0.000000e+00> : vector<2x256xf32>
    %3 = tpu.matmul %1, %2, %cst {dimension_numbers = #tpu.dot_dimension_numbers<[1], [0], [0], [1], [0, 0, 1, 1], [], []>} : vector<2x1024xbf16>, vector<1024x256xbf16>, vector<2x256xf32> -> vector<2x256xf32>
    %cst_5 = arith.constant dense<0.000000e+00> : vector<2x256xf32>
    %4 = tpu.matmul %3, %0, %cst_5 {dimension_numbers = #tpu.dot_dimension_numbers<[1], [0], [0], [1], [0, 0, 1, 1], [], []>} : vector<2x256xf32>, vector<256x256xf32>, vector<2x256xf32> -> vector<2x256xf32>
    %cst_6 = arith.constant 1.250000e-01 : f32
    %5 = vector.broadcast %cst_6 : f32 to vector<2x256xf32>
    %6 = arith.mulf %4, %5 : vector<2x256xf32>
    %7 = arith.subf %3, %6 : vector<2x256xf32>
    %8 = arith.mulf %7, %7 : vector<2x256xf32>
    %cst_7 = arith.constant dense<0.000000e+00> : vector<2x256xf32>
    %9 = tpu.matmul %8, %0, %cst_7 {dimension_numbers = #tpu.dot_dimension_numbers<[1], [0], [0], [1], [0, 0, 1, 1], [], []>} : vector<2x256xf32>, vector<256x256xf32>, vector<2x256xf32> -> vector<2x256xf32>
    %cst_8 = arith.constant 1.250000e-01 : f32
    %10 = vector.broadcast %cst_8 : f32 to vector<2x256xf32>
    %11 = arith.mulf %9, %10 : vector<2x256xf32>
    %cst_9 = arith.constant 9.99999974E-6 : f32
    %12 = vector.broadcast %cst_9 : f32 to vector<2x256xf32>
    %13 = arith.addf %11, %12 : vector<2x256xf32>
    %14 = math.rsqrt %13 : vector<2x256xf32>
    %15 = arith.mulf %7, %14 : vector<2x256xf32>
    %cst_10 = arith.constant 0.000000e+00 : f32
    %16 = vector.broadcast %cst_10 : f32 to vector<2x256xf32>
    %17 = arith.maximumf %15, %16 : vector<2x256xf32>
    %18 = arith.truncf %17 : vector<2x256xf32> to vector<2x256xbf16>
    %c0_11 = arith.constant 0 : index
    %c0_12 = arith.constant 0 : index
    %c0_13 = arith.constant 0 : index
    %19 = vector.load %arg2[%c0_11, %c0_12, %c0_13] : memref<8x256x256xbf16, #tpu.memory_space<vmem>>, vector<1x256x256xbf16>
    %20 = vector.shape_cast %19 : vector<1x256x256xbf16> to vector<256x256xbf16>
    %cst_14 = arith.constant dense<0.000000e+00> : vector<2x256xf32>
    %21 = tpu.matmul %18, %20, %cst_14 {dimension_numbers = #tpu.dot_dimension_numbers<[1], [0], [0], [1], [0, 0, 1, 1], [], []>} : vector<2x256xbf16>, vector<256x256xbf16>, vector<2x256xf32> -> vector<2x256xf32>
    %cst_15 = arith.constant dense<0.000000e+00> : vector<2x256xf32>
    %22 = tpu.matmul %21, %0, %cst_15 {dimension_numbers = #tpu.dot_dimension_numbers<[1], [0], [0], [1], [0, 0, 1, 1], [], []>} : vector<2x256xf32>, vector<256x256xf32>, vector<2x256xf32> -> vector<2x256xf32>
    %cst_16 = arith.constant 1.250000e-01 : f32
    %23 = vector.broadcast %cst_16 : f32 to vector<2x256xf32>
    %24 = arith.mulf %22, %23 : vector<2x256xf32>
    %25 = arith.subf %21, %24 : vector<2x256xf32>
    %26 = arith.mulf %25, %25 : vector<2x256xf32>
    %cst_17 = arith.constant dense<0.000000e+00> : vector<2x256xf32>
    %27 = tpu.matmul %26, %0, %cst_17 {dimension_numbers = #tpu.dot_dimension_numbers<[1], [0], [0], [1], [0, 0, 1, 1], [], []>} : vector<2x256xf32>, vector<256x256xf32>, vector<2x256xf32> -> vector<2x256xf32>
    %cst_18 = arith.constant 1.250000e-01 : f32
    %28 = vector.broadcast %cst_18 : f32 to vector<2x256xf32>
    %29 = arith.mulf %27, %28 : vector<2x256xf32>
    %cst_19 = arith.constant 9.99999974E-6 : f32
    %30 = vector.broadcast %cst_19 : f32 to vector<2x256xf32>
    %31 = arith.addf %29, %30 : vector<2x256xf32>
    %32 = math.rsqrt %31 : vector<2x256xf32>
    %33 = arith.mulf %25, %32 : vector<2x256xf32>
    %cst_20 = arith.constant 0.000000e+00 : f32
    %34 = vector.broadcast %cst_20 : f32 to vector<2x256xf32>
    %35 = arith.maximumf %33, %34 : vector<2x256xf32>
    %36 = arith.truncf %35 : vector<2x256xf32> to vector<2x256xbf16>
    %c1 = arith.constant 1 : index
    %c0_21 = arith.constant 0 : index
    %c0_22 = arith.constant 0 : index
    %37 = vector.load %arg2[%c1, %c0_21, %c0_22] : memref<8x256x256xbf16, #tpu.memory_space<vmem>>, vector<1x256x256xbf16>
    %38 = vector.shape_cast %37 : vector<1x256x256xbf16> to vector<256x256xbf16>
    %cst_23 = arith.constant dense<0.000000e+00> : vector<2x256xf32>
    %39 = tpu.matmul %36, %38, %cst_23 {dimension_numbers = #tpu.dot_dimension_numbers<[1], [0], [0], [1], [0, 0, 1, 1], [], []>} : vector<2x256xbf16>, vector<256x256xbf16>, vector<2x256xf32> -> vector<2x256xf32>
    %cst_24 = arith.constant dense<0.000000e+00> : vector<2x256xf32>
    %40 = tpu.matmul %39, %0, %cst_24 {dimension_numbers = #tpu.dot_dimension_numbers<[1], [0], [0], [1], [0, 0, 1, 1], [], []>} : vector<2x256xf32>, vector<256x256xf32>, vector<2x256xf32> -> vector<2x256xf32>
    %cst_25 = arith.constant 1.250000e-01 : f32
    %41 = vector.broadcast %cst_25 : f32 to vector<2x256xf32>
    %42 = arith.mulf %40, %41 : vector<2x256xf32>
    %43 = arith.subf %39, %42 : vector<2x256xf32>
    %44 = arith.mulf %43, %43 : vector<2x256xf32>
    %cst_26 = arith.constant dense<0.000000e+00> : vector<2x256xf32>
    %45 = tpu.matmul %44, %0, %cst_26 {dimension_numbers = #tpu.dot_dimension_numbers<[1], [0], [0], [1], [0, 0, 1, 1], [], []>} : vector<2x256xf32>, vector<256x256xf32>, vector<2x256xf32> -> vector<2x256xf32>
    %cst_27 = arith.constant 1.250000e-01 : f32
    %46 = vector.broadcast %cst_27 : f32 to vector<2x256xf32>
    %47 = arith.mulf %45, %46 : vector<2x256xf32>
    %cst_28 = arith.constant 9.99999974E-6 : f32
    %48 = vector.broadcast %cst_28 : f32 to vector<2x256xf32>
    %49 = arith.addf %47, %48 : vector<2x256xf32>
    %50 = math.rsqrt %49 : vector<2x256xf32>
    %51 = arith.mulf %43, %50 : vector<2x256xf32>
    %52 = arith.addf %17, %51 : vector<2x256xf32>
    %53 = arith.truncf %52 : vector<2x256xf32> to vector<2x256xbf16>
    %c2 = arith.constant 2 : index
    %c0_29 = arith.constant 0 : index
    %c0_30 = arith.constant 0 : index
    %54 = vector.load %arg2[%c2, %c0_29, %c0_30] : memref<8x256x256xbf16, #tpu.memory_space<vmem>>, vector<1x256x256xbf16>
    %55 = vector.shape_cast %54 : vector<1x256x256xbf16> to vector<256x256xbf16>
    %cst_31 = arith.constant dense<0.000000e+00> : vector<2x256xf32>
    %56 = tpu.matmul %53, %55, %cst_31 {dimension_numbers = #tpu.dot_dimension_numbers<[1], [0], [0], [1], [0, 0, 1, 1], [], []>} : vector<2x256xbf16>, vector<256x256xbf16>, vector<2x256xf32> -> vector<2x256xf32>
    %cst_32 = arith.constant dense<0.000000e+00> : vector<2x256xf32>
    %57 = tpu.matmul %56, %0, %cst_32 {dimension_numbers = #tpu.dot_dimension_numbers<[1], [0], [0], [1], [0, 0, 1, 1], [], []>} : vector<2x256xf32>, vector<256x256xf32>, vector<2x256xf32> -> vector<2x256xf32>
    %cst_33 = arith.constant 1.250000e-01 : f32
    %58 = vector.broadcast %cst_33 : f32 to vector<2x256xf32>
    %59 = arith.mulf %57, %58 : vector<2x256xf32>
    %60 = arith.subf %56, %59 : vector<2x256xf32>
    %61 = arith.mulf %60, %60 : vector<2x256xf32>
    %cst_34 = arith.constant dense<0.000000e+00> : vector<2x256xf32>
    %62 = tpu.matmul %61, %0, %cst_34 {dimension_numbers = #tpu.dot_dimension_numbers<[1], [0], [0], [1], [0, 0, 1, 1], [], []>} : vector<2x256xf32>, vector<256x256xf32>, vector<2x256xf32> -> vector<2x256xf32>
    %cst_35 = arith.constant 1.250000e-01 : f32
    %63 = vector.broadcast %cst_35 : f32 to vector<2x256xf32>
    %64 = arith.mulf %62, %63 : vector<2x256xf32>
    %cst_36 = arith.constant 9.99999974E-6 : f32
    %65 = vector.broadcast %cst_36 : f32 to vector<2x256xf32>
    %66 = arith.addf %64, %65 : vector<2x256xf32>
    %67 = math.rsqrt %66 : vector<2x256xf32>
    %68 = arith.mulf %60, %67 : vector<2x256xf32>
    %cst_37 = arith.constant 0.000000e+00 : f32
    %69 = vector.broadcast %cst_37 : f32 to vector<2x256xf32>
    %70 = arith.maximumf %68, %69 : vector<2x256xf32>
    %71 = arith.truncf %70 : vector<2x256xf32> to vector<2x256xbf16>
    %c3 = arith.constant 3 : index
    %c0_38 = arith.constant 0 : index
    %c0_39 = arith.constant 0 : index
    %72 = vector.load %arg2[%c3, %c0_38, %c0_39] : memref<8x256x256xbf16, #tpu.memory_space<vmem>>, vector<1x256x256xbf16>
    %73 = vector.shape_cast %72 : vector<1x256x256xbf16> to vector<256x256xbf16>
    %cst_40 = arith.constant dense<0.000000e+00> : vector<2x256xf32>
    %74 = tpu.matmul %71, %73, %cst_40 {dimension_numbers = #tpu.dot_dimension_numbers<[1], [0], [0], [1], [0, 0, 1, 1], [], []>} : vector<2x256xbf16>, vector<256x256xbf16>, vector<2x256xf32> -> vector<2x256xf32>
    %cst_41 = arith.constant dense<0.000000e+00> : vector<2x256xf32>
    %75 = tpu.matmul %74, %0, %cst_41 {dimension_numbers = #tpu.dot_dimension_numbers<[1], [0], [0], [1], [0, 0, 1, 1], [], []>} : vector<2x256xf32>, vector<256x256xf32>, vector<2x256xf32> -> vector<2x256xf32>
    %cst_42 = arith.constant 1.250000e-01 : f32
    %76 = vector.broadcast %cst_42 : f32 to vector<2x256xf32>
    %77 = arith.mulf %75, %76 : vector<2x256xf32>
    %78 = arith.subf %74, %77 : vector<2x256xf32>
    %79 = arith.mulf %78, %78 : vector<2x256xf32>
    %cst_43 = arith.constant dense<0.000000e+00> : vector<2x256xf32>
    %80 = tpu.matmul %79, %0, %cst_43 {dimension_numbers = #tpu.dot_dimension_numbers<[1], [0], [0], [1], [0, 0, 1, 1], [], []>} : vector<2x256xf32>, vector<256x256xf32>, vector<2x256xf32> -> vector<2x256xf32>
    %cst_44 = arith.constant 1.250000e-01 : f32
    %81 = vector.broadcast %cst_44 : f32 to vector<2x256xf32>
    %82 = arith.mulf %80, %81 : vector<2x256xf32>
    %cst_45 = arith.constant 9.99999974E-6 : f32
    %83 = vector.broadcast %cst_45 : f32 to vector<2x256xf32>
    %84 = arith.addf %82, %83 : vector<2x256xf32>
    %85 = math.rsqrt %84 : vector<2x256xf32>
    %86 = arith.mulf %78, %85 : vector<2x256xf32>
    %87 = arith.addf %52, %86 : vector<2x256xf32>
    %88 = arith.truncf %87 : vector<2x256xf32> to vector<2x256xbf16>
    %c4 = arith.constant 4 : index
    %c0_46 = arith.constant 0 : index
    %c0_47 = arith.constant 0 : index
    %89 = vector.load %arg2[%c4, %c0_46, %c0_47] : memref<8x256x256xbf16, #tpu.memory_space<vmem>>, vector<1x256x256xbf16>
    %90 = vector.shape_cast %89 : vector<1x256x256xbf16> to vector<256x256xbf16>
    %cst_48 = arith.constant dense<0.000000e+00> : vector<2x256xf32>
    %91 = tpu.matmul %88, %90, %cst_48 {dimension_numbers = #tpu.dot_dimension_numbers<[1], [0], [0], [1], [0, 0, 1, 1], [], []>} : vector<2x256xbf16>, vector<256x256xbf16>, vector<2x256xf32> -> vector<2x256xf32>
    %cst_49 = arith.constant dense<0.000000e+00> : vector<2x256xf32>
    %92 = tpu.matmul %91, %0, %cst_49 {dimension_numbers = #tpu.dot_dimension_numbers<[1], [0], [0], [1], [0, 0, 1, 1], [], []>} : vector<2x256xf32>, vector<256x256xf32>, vector<2x256xf32> -> vector<2x256xf32>
    %cst_50 = arith.constant 1.250000e-01 : f32
    %93 = vector.broadcast %cst_50 : f32 to vector<2x256xf32>
    %94 = arith.mulf %92, %93 : vector<2x256xf32>
    %95 = arith.subf %91, %94 : vector<2x256xf32>
    %96 = arith.mulf %95, %95 : vector<2x256xf32>
    %cst_51 = arith.constant dense<0.000000e+00> : vector<2x256xf32>
    %97 = tpu.matmul %96, %0, %cst_51 {dimension_numbers = #tpu.dot_dimension_numbers<[1], [0], [0], [1], [0, 0, 1, 1], [], []>} : vector<2x256xf32>, vector<256x256xf32>, vector<2x256xf32> -> vector<2x256xf32>
    %cst_52 = arith.constant 1.250000e-01 : f32
    %98 = vector.broadcast %cst_52 : f32 to vector<2x256xf32>
    %99 = arith.mulf %97, %98 : vector<2x256xf32>
    %cst_53 = arith.constant 9.99999974E-6 : f32
    %100 = vector.broadcast %cst_53 : f32 to vector<2x256xf32>
    %101 = arith.addf %99, %100 : vector<2x256xf32>
    %102 = math.rsqrt %101 : vector<2x256xf32>
    %103 = arith.mulf %95, %102 : vector<2x256xf32>
    %cst_54 = arith.constant 0.000000e+00 : f32
    %104 = vector.broadcast %cst_54 : f32 to vector<2x256xf32>
    %105 = arith.maximumf %103, %104 : vector<2x256xf32>
    %106 = arith.truncf %105 : vector<2x256xf32> to vector<2x256xbf16>
    %c5 = arith.constant 5 : index
    %c0_55 = arith.constant 0 : index
    %c0_56 = arith.constant 0 : index
    %107 = vector.load %arg2[%c5, %c0_55, %c0_56] : memref<8x256x256xbf16, #tpu.memory_space<vmem>>, vector<1x256x256xbf16>
    %108 = vector.shape_cast %107 : vector<1x256x256xbf16> to vector<256x256xbf16>
    %cst_57 = arith.constant dense<0.000000e+00> : vector<2x256xf32>
    %109 = tpu.matmul %106, %108, %cst_57 {dimension_numbers = #tpu.dot_dimension_numbers<[1], [0], [0], [1], [0, 0, 1, 1], [], []>} : vector<2x256xbf16>, vector<256x256xbf16>, vector<2x256xf32> -> vector<2x256xf32>
    %cst_58 = arith.constant dense<0.000000e+00> : vector<2x256xf32>
    %110 = tpu.matmul %109, %0, %cst_58 {dimension_numbers = #tpu.dot_dimension_numbers<[1], [0], [0], [1], [0, 0, 1, 1], [], []>} : vector<2x256xf32>, vector<256x256xf32>, vector<2x256xf32> -> vector<2x256xf32>
    %cst_59 = arith.constant 1.250000e-01 : f32
    %111 = vector.broadcast %cst_59 : f32 to vector<2x256xf32>
    %112 = arith.mulf %110, %111 : vector<2x256xf32>
    %113 = arith.subf %109, %112 : vector<2x256xf32>
    %114 = arith.mulf %113, %113 : vector<2x256xf32>
    %cst_60 = arith.constant dense<0.000000e+00> : vector<2x256xf32>
    %115 = tpu.matmul %114, %0, %cst_60 {dimension_numbers = #tpu.dot_dimension_numbers<[1], [0], [0], [1], [0, 0, 1, 1], [], []>} : vector<2x256xf32>, vector<256x256xf32>, vector<2x256xf32> -> vector<2x256xf32>
    %cst_61 = arith.constant 1.250000e-01 : f32
    %116 = vector.broadcast %cst_61 : f32 to vector<2x256xf32>
    %117 = arith.mulf %115, %116 : vector<2x256xf32>
    %cst_62 = arith.constant 9.99999974E-6 : f32
    %118 = vector.broadcast %cst_62 : f32 to vector<2x256xf32>
    %119 = arith.addf %117, %118 : vector<2x256xf32>
    %120 = math.rsqrt %119 : vector<2x256xf32>
    %121 = arith.mulf %113, %120 : vector<2x256xf32>
    %122 = arith.addf %87, %121 : vector<2x256xf32>
    %123 = arith.truncf %122 : vector<2x256xf32> to vector<2x256xbf16>
    %c6 = arith.constant 6 : index
    %c0_63 = arith.constant 0 : index
    %c0_64 = arith.constant 0 : index
    %124 = vector.load %arg2[%c6, %c0_63, %c0_64] : memref<8x256x256xbf16, #tpu.memory_space<vmem>>, vector<1x256x256xbf16>
    %125 = vector.shape_cast %124 : vector<1x256x256xbf16> to vector<256x256xbf16>
    %cst_65 = arith.constant dense<0.000000e+00> : vector<2x256xf32>
    %126 = tpu.matmul %123, %125, %cst_65 {dimension_numbers = #tpu.dot_dimension_numbers<[1], [0], [0], [1], [0, 0, 1, 1], [], []>} : vector<2x256xbf16>, vector<256x256xbf16>, vector<2x256xf32> -> vector<2x256xf32>
    %cst_66 = arith.constant dense<0.000000e+00> : vector<2x256xf32>
    %127 = tpu.matmul %126, %0, %cst_66 {dimension_numbers = #tpu.dot_dimension_numbers<[1], [0], [0], [1], [0, 0, 1, 1], [], []>} : vector<2x256xf32>, vector<256x256xf32>, vector<2x256xf32> -> vector<2x256xf32>
    %cst_67 = arith.constant 1.250000e-01 : f32
    %128 = vector.broadcast %cst_67 : f32 to vector<2x256xf32>
    %129 = arith.mulf %127, %128 : vector<2x256xf32>
    %130 = arith.subf %126, %129 : vector<2x256xf32>
    %131 = arith.mulf %130, %130 : vector<2x256xf32>
    %cst_68 = arith.constant dense<0.000000e+00> : vector<2x256xf32>
    %132 = tpu.matmul %131, %0, %cst_68 {dimension_numbers = #tpu.dot_dimension_numbers<[1], [0], [0], [1], [0, 0, 1, 1], [], []>} : vector<2x256xf32>, vector<256x256xf32>, vector<2x256xf32> -> vector<2x256xf32>
    %cst_69 = arith.constant 1.250000e-01 : f32
    %133 = vector.broadcast %cst_69 : f32 to vector<2x256xf32>
    %134 = arith.mulf %132, %133 : vector<2x256xf32>
    %cst_70 = arith.constant 9.99999974E-6 : f32
    %135 = vector.broadcast %cst_70 : f32 to vector<2x256xf32>
    %136 = arith.addf %134, %135 : vector<2x256xf32>
    %137 = math.rsqrt %136 : vector<2x256xf32>
    %138 = arith.mulf %130, %137 : vector<2x256xf32>
    %cst_71 = arith.constant 0.000000e+00 : f32
    %139 = vector.broadcast %cst_71 : f32 to vector<2x256xf32>
    %140 = arith.maximumf %138, %139 : vector<2x256xf32>
    %141 = arith.truncf %140 : vector<2x256xf32> to vector<2x256xbf16>
    %c7 = arith.constant 7 : index
    %c0_72 = arith.constant 0 : index
    %c0_73 = arith.constant 0 : index
    %142 = vector.load %arg2[%c7, %c0_72, %c0_73] : memref<8x256x256xbf16, #tpu.memory_space<vmem>>, vector<1x256x256xbf16>
    %143 = vector.shape_cast %142 : vector<1x256x256xbf16> to vector<256x256xbf16>
    %cst_74 = arith.constant dense<0.000000e+00> : vector<2x256xf32>
    %144 = tpu.matmul %141, %143, %cst_74 {dimension_numbers = #tpu.dot_dimension_numbers<[1], [0], [0], [1], [0, 0, 1, 1], [], []>} : vector<2x256xbf16>, vector<256x256xbf16>, vector<2x256xf32> -> vector<2x256xf32>
    %cst_75 = arith.constant dense<0.000000e+00> : vector<2x256xf32>
    %145 = tpu.matmul %144, %0, %cst_75 {dimension_numbers = #tpu.dot_dimension_numbers<[1], [0], [0], [1], [0, 0, 1, 1], [], []>} : vector<2x256xf32>, vector<256x256xf32>, vector<2x256xf32> -> vector<2x256xf32>
    %cst_76 = arith.constant 1.250000e-01 : f32
    %146 = vector.broadcast %cst_76 : f32 to vector<2x256xf32>
    %147 = arith.mulf %145, %146 : vector<2x256xf32>
    %148 = arith.subf %144, %147 : vector<2x256xf32>
    %149 = arith.mulf %148, %148 : vector<2x256xf32>
    %cst_77 = arith.constant dense<0.000000e+00> : vector<2x256xf32>
    %150 = tpu.matmul %149, %0, %cst_77 {dimension_numbers = #tpu.dot_dimension_numbers<[1], [0], [0], [1], [0, 0, 1, 1], [], []>} : vector<2x256xf32>, vector<256x256xf32>, vector<2x256xf32> -> vector<2x256xf32>
    %cst_78 = arith.constant 1.250000e-01 : f32
    %151 = vector.broadcast %cst_78 : f32 to vector<2x256xf32>
    %152 = arith.mulf %150, %151 : vector<2x256xf32>
    %cst_79 = arith.constant 9.99999974E-6 : f32
    %153 = vector.broadcast %cst_79 : f32 to vector<2x256xf32>
    %154 = arith.addf %152, %153 : vector<2x256xf32>
    %155 = math.rsqrt %154 : vector<2x256xf32>
    %156 = arith.mulf %148, %155 : vector<2x256xf32>
    %157 = arith.addf %122, %156 : vector<2x256xf32>
    %c0_80 = arith.constant 0 : index
    %c0_81 = arith.constant 0 : index
    %158 = vector.load %arg5[%c0_80, %c0_81] : memref<2x256xf32, #tpu.memory_space<vmem>>, vector<2x256xf32>
    tpu.vector_store %arg5[%c0_80, %c0_81], %157 {strides = array<i32>} : memref<2x256xf32, #tpu.memory_space<vmem>>, vector<2x256xf32>,
    %c0_82 = arith.constant 0 : index
    %c0_83 = arith.constant 0 : index
    %159 = vector.load %arg4[%c0_82, %c0_83] : memref<2x256xf32, #tpu.memory_space<vmem>>, vector<2x256xf32>
    %160 = arith.addf %159, %157 : vector<2x256xf32>
    %c0_84 = arith.constant 0 : index
    %c0_85 = arith.constant 0 : index
    %161 = vector.load %arg6[%c0_84, %c0_85] : memref<2x256xf32, #tpu.memory_space<vmem>>, vector<2x256xf32>
    tpu.vector_store %arg6[%c0_84, %c0_85], %160 {strides = array<i32>} : memref<2x256xf32, #tpu.memory_space<vmem>>, vector<2x256xf32>,
    return
  }
}

</mosaic_0001>

<llo_original>
// kernel: encoder_forward.3
$region0: #{encoder_forward.3}
  #allocation0 [shape = 'u32[]', space=smem, size = 0x4, offset = 0x4, fixed_abs, tag = 'smem constant byte address 0x4 - core index']
  #allocation1 [shape = 'u32[144,128]{1,0:T(1,128)}', space=vmem, size = 0x12000, scoped, tag = 'internal scratch']
  %s0 = inlined_call_operand.vmem [shape: bf16[2,343,512], index: 0, kind: input, shape index: {}]
  %s1 = inlined_call_operand.vmem [shape: bf16[8,343], index: 1, kind: input, shape index: {}]
  %s2 = inlined_call_operand.vmem [shape: bf16[2,8,512], index: 2, kind: output, shape index: {}]
  %s3 = sld [smem:[#allocation0]]
  $region41: #{encoder_forward.3} parent=0
    _
  %s5 = ssub.s32 1, %s3
  %s6 = scalar_select 0, %s5, %s3
  loop: start=0, step=1, limit=4
  $region2: #{encoder_forward.3} parent=0 // loop_pre_header
    _
  $region3: #{encoder_forward.3} parent=0 // loop_header
    %s8 = sphi 0, %s12
    %p9 = scmp.ge.s32.totalorder %s8, 4
    %s18 = sphi 0, %s20
    %s21 = sphi 0, %s18
    %s22 = sphi 0, %s21
    %s38 = sphi 0, %s22
    %s42 = sphi 0, %s42
    %s44 = sphi 0, %s42
    %s45 = sphi 0, %s44
    %s59 = sphi 0, %s45
    %s65 = sphi 0, %s67
    %s68 = sphi 0, %s65
    %s69 = sphi 0, %s68
    %s85 = sphi 0, %s69
  $region4: #{encoder_forward.3} parent=0 // loop_header_branch
    %11 = sbr.rel (%p9) target = $region8
  $region5: #{encoder_forward.3} parent=0 // loop_body
    %s13 = ssub.s32 %s8, 1
    %s14 = ssub.s32 %s8, 2
    %s15 = sadd.s32 %s8, 1
    %s16 = ssub.s32 %s8, %s15
    %p17 = scmp.eq.s32.totalorder %s16, 0
    %s19 = sadd.s32 %s18, 1
    %s20 = scalar_select %p17, %s18, %s19
    %p23 = pneg %p17
    %p24 = scmp.eq.s32.totalorder %s8, 1
    %p25 = por %p23, %p24
    %p26 = scmp.ne.s32.totalorder %s18, %s21
    %p27 = scmp.eq.s32.totalorder %s8, 0
    %p28 = por %p26, %p27
    %p29 = scmp.ne.s32.totalorder %s18, %s21
    %p30 = scmp.eq.s32.totalorder %s13, 1
    %p31 = por %p29, %p30
    %p32 = scmp.ne.s32.totalorder %s21, %s22
    %p33 = scmp.eq.s32.totalorder %s13, 0
    %p34 = por %p32, %p33
    %p35 = scmp.ne.s32.totalorder %s21, %s22
    %p36 = scmp.eq.s32.totalorder %s14, 1
    %p37 = por %p35, %p36
    %p39 = scmp.ne.s32.totalorder %s22, %s38
    %p40 = scmp.eq.s32.totalorder %s14, 0
    %p41 = por %p39, %p40
    %s43 = sadd.s32 %s42, 1
    %p46 = scmp.eq.s32.totalorder %s8, 1
    %p47 = scmp.ne.s32.totalorder %s42, %s44
    %p48 = scmp.eq.s32.totalorder %s8, 0
    %p49 = por %p47, %p48
    %p50 = scmp.ne.s32.totalorder %s42, %s44
    %p51 = scmp.eq.s32.totalorder %s13, 1
    %p52 = por %p50, %p51
    %p53 = scmp.ne.s32.totalorder %s44, %s45
    %p54 = scmp.eq.s32.totalorder %s13, 0
    %p55 = por %p53, %p54
    %p56 = scmp.ne.s32.totalorder %s44, %s45
    %p57 = scmp.eq.s32.totalorder %s14, 1
    %p58 = por %p56, %p57
    %p60 = scmp.ne.s32.totalorder %s45, %s59
    %p61 = scmp.eq.s32.totalorder %s14, 0
    %p62 = por %p60, %p61
    %s63 = ssub.s32 %s8, %s15
    %p64 = scmp.eq.s32.totalorder %s63, 0
    %s66 = sadd.s32 %s65, 1
    %s67 = scalar_select %p64, %s65, %s66
    %p70 = pneg %p64
    %p71 = scmp.eq.s32.totalorder %s8, 1
    %p72 = por %p70, %p71
    %p73 = scmp.ne.s32.totalorder %s65, %s68
    %p74 = scmp.eq.s32.totalorder %s8, 0
    %p75 = por %p73, %p74
    %p76 = scmp.ne.s32.totalorder %s65, %s68
    %p77 = scmp.eq.s32.totalorder %s13, 1
    %p78 = por %p76, %p77
    %p79 = scmp.ne.s32.totalorder %s68, %s69
    %p80 = scmp.eq.s32.totalorder %s13, 0
    %p81 = por %p79, %p80
    %p82 = scmp.ne.s32.totalorder %s68, %s69
    %p83 = scmp.eq.s32.totalorder %s14, 1
    %p84 = por %p82, %p83
    %p86 = scmp.ne.s32.totalorder %s69, %s85
    %p87 = scmp.eq.s32.totalorder %s14, 0
    %p88 = por %p86, %p87
    %p89 = scmp.le.s32.totalorder 1, %s8
    %p90 = scmp.lt.s32.totalorder %s8, 3
    %p91 = pnand %p89, %p90
    %p92 = pneg %p91
    // Predicated region
    $region9: #{encoder_forward.3} parent=5 // pred_check
      _
    $region10: #{encoder_forward.3} parent=5 // pred_check_branch
      %94 = sbr.rel (%p91) target = $region12
    $region11: #{encoder_forward.3} parent=5 // pred_region
      %s95 = ssub.s32 %s8, 1
      // Predicated region
      $region13: #{encoder_forward.3} parent=11 // pred_check
        %p96 = pneg %p55
      $region14: #{encoder_forward.3} parent=11 // pred_check_branch
        %98 = sbr.rel (%p96) target = $region16
      $region15: #{encoder_forward.3} parent=11 // pred_region
        _
      $region16: #{encoder_forward.3} parent=11 // pred_fallthru
        _
    $region12: #{encoder_forward.3} parent=5 // pred_fallthru
      _
    %p99 = scmp.lt.s32.totalorder %s8, 2
    // Predicated region
    $region17: #{encoder_forward.3} parent=5 // pred_check
      %p100 = pneg %p99
    $region18: #{encoder_forward.3} parent=5 // pred_check_branch
      %102 = sbr.rel (%p100) target = $region20
    $region19: #{encoder_forward.3} parent=5 // pred_region
      // Predicated region
      $region21: #{encoder_forward.3} parent=19 // pred_check
        %p103 = pneg %p28
      $region22: #{encoder_forward.3} parent=19 // pred_check_branch
        %105 = sbr.rel (%p103) target = $region24
      $region23: #{encoder_forward.3} parent=19 // pred_region
        %p106 = scmp.lt.s32.totalorder %s8, 1
        %s107 = scalar_select %p106, %s8, 1
        %s108 = smul.addr %s107, 172
        %s109 = smul.addr %s108, 4
        %s110 = scalar_lea.vmem %s0, %s109
      $region24: #{encoder_forward.3} parent=19 // pred_fallthru
        _
    $region20: #{encoder_forward.3} parent=5 // pred_fallthru
      _
    %p111 = scmp.le.s32.totalorder 1, %s8
    %p112 = scmp.lt.s32.totalorder %s8, 3
    %p113 = pnand %p111, %p112
    %p114 = pneg %p113
    // Predicated region
    $region25: #{encoder_forward.3} parent=5 // pred_check
      _
    $region26: #{encoder_forward.3} parent=5 // pred_check_branch
      %116 = sbr.rel (%p113) target = $region28
    $region27: #{encoder_forward.3} parent=5 // pred_region
      %s117 = ssub.s32 %s8, 1
      %p118 = scmp.lt.s32.totalorder %s13, 1
      %s119 = scalar_select %p118, %s13, 1
      %s120 = smul.addr %s119, 172
      %s121 = smul.addr %s120, 4
      %s122 = scalar_lea.vmem %s0, %s121
      %p123 = pneg %p34
      %p124 = pneg %p31
      %p125 = pneg %p55
      %p126 = pneg %p52
      %p127 = pneg %p81
      %p128 = pneg %p78
      %p129 = scmp.lt.s32.totalorder %s13, 1
      %s130 = scalar_select %p129, %s13, 1
      %s131 = smul.addr %s130, 4
      %s132 = smul.addr %s131, 4
      %s133 = scalar_lea.vmem %s2, %s132
      %p134 = scmp.lt.s32.totalorder %s13, 1
      %s135 = scalar_select %p134, %s13, 1
      %s136 = smul.addr %s135, 172
      %s137 = smul.addr %s136, 4
      %s138 = scalar_lea.vmem %s0, %s137
      %p139 = scmp.lt.s32.totalorder %s13, 1
      %s140 = scalar_select %p139, %s13, 1
      %s141 = smul.addr %s140, 4
      %s142 = smul.addr %s141, 4
      %s143 = scalar_lea.vmem %s2, %s142
      %v145 = vld [vmem:[%s1] sm:$0xff]
      %v146 = vld [vmem:[%s1 + $0x8] sm:$0xf]
      %v147 = vld [vmem:[%s138] sm:$0xff]
      %v148 = vld [vmem:[%s138 + $0x8] sm:$0xff]
      %v149 = vld [vmem:[%s138 + $0x10] sm:$0xff]
      %v150 = vld [vmem:[%s138 + $0x18] sm:$0xff]
      %v151 = vld [vmem:[%s138 + $0x20] sm:$0xff]
      %v152 = vld [vmem:[%s138 + $0x28] sm:$0xff]
      %v153 = vld [vmem:[%s138 + $0x30] sm:$0xff]
      %v154 = vld [vmem:[%s138 + $0x38] sm:$0xff]
      %v155 = vld [vmem:[%s138 + $0x40] sm:$0xff]
      %v156 = vld [vmem:[%s138 + $0x48] sm:$0xff]
      %v157 = vld [vmem:[%s138 + $0x50] sm:$0xff]
      %v158 = vld [vmem:[%s138 + $0x58] sm:$0xff]
      %v159 = vld [vmem:[%s138 + $0x60] sm:$0xff]
      %v160 = vld [vmem:[%s138 + $0x68] sm:$0xff]
      %v161 = vld [vmem:[%s138 + $0x70] sm:$0xff]
      %v162 = vld [vmem:[%s138 + $0x78] sm:$0xff]
      %v163 = vld [vmem:[%s138 + $0x80] sm:$0xff]
      %v164 = vld [vmem:[%s138 + $0x88] sm:$0xff]
      %v165 = vld [vmem:[%s138 + $0x90] sm:$0xff]
      %v166 = vld [vmem:[%s138 + $0x98] sm:$0xff]
      %v167 = vld [vmem:[%s138 + $0xa0] sm:$0xff]
      %v168 = vld [vmem:[%s138 + $0xa8] sm:$0xff]
      %v169 = vld [vmem:[%s138 + $0xb0] sm:$0xff]
      %v170 = vld [vmem:[%s138 + $0xb8] sm:$0xff]
      %v171 = vld [vmem:[%s138 + $0xc0] sm:$0xff]
      %v172 = vld [vmem:[%s138 + $0xc8] sm:$0xff]
      %v173 = vld [vmem:[%s138 + $0xd0] sm:$0xff]
      %v174 = vld [vmem:[%s138 + $0xd8] sm:$0xff]
      %v175 = vld [vmem:[%s138 + $0xe0] sm:$0xff]
      %v176 = vld [vmem:[%s138 + $0xe8] sm:$0xff]
      %v177 = vld [vmem:[%s138 + $0xf0] sm:$0xff]
      %v178 = vld [vmem:[%s138 + $0xf8] sm:$0xff]
      %v179 = vld [vmem:[%s138 + $0x100] sm:$0xff]
      %v180 = vld [vmem:[%s138 + $0x108] sm:$0xff]
      %v181 = vld [vmem:[%s138 + $0x110] sm:$0xff]
      %v182 = vld [vmem:[%s138 + $0x118] sm:$0xff]
      %v183 = vld [vmem:[%s138 + $0x120] sm:$0xff]
      %v184 = vld [vmem:[%s138 + $0x128] sm:$0xff]
      %v185 = vld [vmem:[%s138 + $0x130] sm:$0xff]
      %v186 = vld [vmem:[%s138 + $0x138] sm:$0xff]
      %v187 = vld [vmem:[%s138 + $0x140] sm:$0xff]
      %v188 = vld [vmem:[%s138 + $0x148] sm:$0xff]
      %v189 = vld [vmem:[%s138 + $0x150] sm:$0xff]
      %v190 = vld [vmem:[%s138 + $0x158] sm:$0xff]
      %v191 = vld [vmem:[%s138 + $0x160] sm:$0xff]
      %v192 = vld [vmem:[%s138 + $0x168] sm:$0xff]
      %v193 = vld [vmem:[%s138 + $0x170] sm:$0xff]
      %v194 = vld [vmem:[%s138 + $0x178] sm:$0xff]
      %v195 = vld [vmem:[%s138 + $0x180] sm:$0xff]
      %v196 = vld [vmem:[%s138 + $0x188] sm:$0xff]
      %v197 = vld [vmem:[%s138 + $0x190] sm:$0xff]
      %v198 = vld [vmem:[%s138 + $0x198] sm:$0xff]
      %v199 = vld [vmem:[%s138 + $0x1a0] sm:$0xff]
      %v200 = vld [vmem:[%s138 + $0x1a8] sm:$0xff]
      %v201 = vld [vmem:[%s138 + $0x1b0] sm:$0xff]
      %v202 = vld [vmem:[%s138 + $0x1b8] sm:$0xff]
      %v203 = vld [vmem:[%s138 + $0x1c0] sm:$0xff]
      %v204 = vld [vmem:[%s138 + $0x1c8] sm:$0xff]
      %v205 = vld [vmem:[%s138 + $0x1d0] sm:$0xff]
      %v206 = vld [vmem:[%s138 + $0x1d8] sm:$0xff]
      %v207 = vld [vmem:[%s138 + $0x1e0] sm:$0xff]
      %v208 = vld [vmem:[%s138 + $0x1e8] sm:$0xff]
      %v209 = vld [vmem:[%s138 + $0x1f0] sm:$0xff]
      %v210 = vld [vmem:[%s138 + $0x1f8] sm:$0xff]
      %v211 = vld [vmem:[%s138 + $0x200] sm:$0xff]
      %v212 = vld [vmem:[%s138 + $0x208] sm:$0xff]
      %v213 = vld [vmem:[%s138 + $0x210] sm:$0xff]
      %v214 = vld [vmem:[%s138 + $0x218] sm:$0xff]
      %v215 = vld [vmem:[%s138 + $0x220] sm:$0xff]
      %v216 = vld [vmem:[%s138 + $0x228] sm:$0xff]
      %v217 = vld [vmem:[%s138 + $0x230] sm:$0xff]
      %v218 = vld [vmem:[%s138 + $0x238] sm:$0xff]
      %v219 = vld [vmem:[%s138 + $0x240] sm:$0xff]
      %v220 = vld [vmem:[%s138 + $0x248] sm:$0xff]
      %v221 = vld [vmem:[%s138 + $0x250] sm:$0xff]
      %v222 = vld [vmem:[%s138 + $0x258] sm:$0xff]
      %v223 = vld [vmem:[%s138 + $0x260] sm:$0xff]
      %v224 = vld [vmem:[%s138 + $0x268] sm:$0xff]
      %v225 = vld [vmem:[%s138 + $0x270] sm:$0xff]
      %v226 = vld [vmem:[%s138 + $0x278] sm:$0xff]
      %v227 = vld [vmem:[%s138 + $0x280] sm:$0xff]
      %v228 = vld [vmem:[%s138 + $0x288] sm:$0xff]
      %v229 = vld [vmem:[%s138 + $0x290] sm:$0xff]
      %v230 = vld [vmem:[%s138 + $0x298] sm:$0xff]
      %v231 = vld [vmem:[%s138 + $0x2a0] sm:$0xff]
      %v232 = vld [vmem:[%s138 + $0x2a8] sm:$0xff]
      %v235 = vunpack.c.l.b16 %v145
      %v236 = vunpack.c.h.b16 %v145
      %v237 = vunpack.c.l.b16 %v146
      %v238 = vpack.c.b16 %v235, %v235
      %v239 = vpack.c.b16 %v236, %v236
      %v240 = vpack.c.b16 %v237, %v237
      %v329 = vunpack.c.l.b16 %v147
      %v330 = vunpack.c.h.b16 %v147
      %v331 = vunpack.c.l.b16 %v148
      %v332 = vunpack.c.h.b16 %v148
      %v333 = vunpack.c.l.b16 %v149
      %v334 = vunpack.c.h.b16 %v149
      %v335 = vunpack.c.l.b16 %v150
      %v336 = vunpack.c.h.b16 %v150
      %v337 = vunpack.c.l.b16 %v151
      %v338 = vunpack.c.h.b16 %v151
      %v339 = vunpack.c.l.b16 %v152
      %v340 = vunpack.c.h.b16 %v152
      %v341 = vunpack.c.l.b16 %v153
      %v342 = vunpack.c.h.b16 %v153
      %v343 = vunpack.c.l.b16 %v154
      %v344 = vunpack.c.h.b16 %v154
      %v345 = vunpack.c.l.b16 %v155
      %v346 = vunpack.c.h.b16 %v155
      %v347 = vunpack.c.l.b16 %v156
      %v348 = vunpack.c.h.b16 %v156
      %v349 = vunpack.c.l.b16 %v157
      %v350 = vunpack.c.h.b16 %v157
      %v351 = vunpack.c.l.b16 %v158
      %v352 = vunpack.c.h.b16 %v158
      %v353 = vunpack.c.l.b16 %v159
      %v354 = vunpack.c.h.b16 %v159
      %v355 = vunpack.c.l.b16 %v160
      %v356 = vunpack.c.h.b16 %v160
      %v357 = vunpack.c.l.b16 %v161
      %v358 = vunpack.c.h.b16 %v161
      %v359 = vunpack.c.l.b16 %v162
      %v360 = vunpack.c.h.b16 %v162
      %v361 = vunpack.c.l.b16 %v163
      %v362 = vunpack.c.h.b16 %v163
      %v363 = vunpack.c.l.b16 %v164
      %v364 = vunpack.c.h.b16 %v164
      %v365 = vunpack.c.l.b16 %v165
      %v366 = vunpack.c.h.b16 %v165
      %v367 = vunpack.c.l.b16 %v166
      %v368 = vunpack.c.h.b16 %v166
      %v369 = vunpack.c.l.b16 %v167
      %v370 = vunpack.c.h.b16 %v167
      %v371 = vunpack.c.l.b16 %v168
      %v372 = vunpack.c.h.b16 %v168
      %v373 = vunpack.c.l.b16 %v169
      %v374 = vunpack.c.h.b16 %v169
      %v375 = vunpack.c.l.b16 %v170
      %v376 = vunpack.c.h.b16 %v170
      %v377 = vunpack.c.l.b16 %v171
      %v378 = vunpack.c.h.b16 %v171
      %v379 = vunpack.c.l.b16 %v172
      %v380 = vunpack.c.h.b16 %v172
      %v381 = vunpack.c.l.b16 %v173
      %v382 = vunpack.c.h.b16 %v173
      %v383 = vunpack.c.l.b16 %v174
      %v384 = vunpack.c.h.b16 %v174
      %v385 = vunpack.c.l.b16 %v175
      %v386 = vunpack.c.h.b16 %v175
      %v387 = vunpack.c.l.b16 %v176
      %v388 = vunpack.c.h.b16 %v176
      %v389 = vunpack.c.l.b16 %v177
      %v390 = vunpack.c.h.b16 %v177
      %v391 = vunpack.c.l.b16 %v178
      %v392 = vunpack.c.h.b16 %v178
      %v393 = vunpack.c.l.b16 %v179
      %v394 = vunpack.c.h.b16 %v179
      %v395 = vunpack.c.l.b16 %v180
      %v396 = vunpack.c.h.b16 %v180
      %v397 = vunpack.c.l.b16 %v181
      %v398 = vunpack.c.h.b16 %v181
      %v399 = vunpack.c.l.b16 %v182
      %v400 = vunpack.c.h.b16 %v182
      %v401 = vunpack.c.l.b16 %v183
      %v402 = vunpack.c.h.b16 %v183
      %v403 = vunpack.c.l.b16 %v184
      %v404 = vunpack.c.h.b16 %v184
      %v405 = vunpack.c.l.b16 %v185
      %v406 = vunpack.c.h.b16 %v185
      %v407 = vunpack.c.l.b16 %v186
      %v408 = vunpack.c.h.b16 %v186
      %v409 = vunpack.c.l.b16 %v187
      %v410 = vunpack.c.h.b16 %v187
      %v411 = vunpack.c.l.b16 %v188
      %v412 = vunpack.c.h.b16 %v188
      %v413 = vunpack.c.l.b16 %v189
      %v414 = vunpack.c.h.b16 %v189
      %v415 = vunpack.c.l.b16 %v190
      %v416 = vunpack.c.h.b16 %v190
      %v417 = vunpack.c.l.b16 %v191
      %v418 = vunpack.c.h.b16 %v191
      %v419 = vunpack.c.l.b16 %v192
      %v420 = vunpack.c.h.b16 %v192
      %v421 = vunpack.c.l.b16 %v193
      %v422 = vunpack.c.h.b16 %v193
      %v423 = vunpack.c.l.b16 %v194
      %v424 = vunpack.c.h.b16 %v194
      %v425 = vunpack.c.l.b16 %v195
      %v426 = vunpack.c.h.b16 %v195
      %v427 = vunpack.c.l.b16 %v196
      %v428 = vunpack.c.h.b16 %v196
      %v429 = vunpack.c.l.b16 %v197
      %v430 = vunpack.c.h.b16 %v197
      %v431 = vunpack.c.l.b16 %v198
      %v432 = vunpack.c.h.b16 %v198
      %v433 = vunpack.c.l.b16 %v199
      %v434 = vunpack.c.h.b16 %v199
      %v435 = vunpack.c.l.b16 %v200
      %v436 = vunpack.c.h.b16 %v200
      %v437 = vunpack.c.l.b16 %v201
      %v438 = vunpack.c.h.b16 %v201
      %v439 = vunpack.c.l.b16 %v202
      %v440 = vunpack.c.h.b16 %v202
      %v441 = vunpack.c.l.b16 %v203
      %v442 = vunpack.c.h.b16 %v203
      %v443 = vunpack.c.l.b16 %v204
      %v444 = vunpack.c.h.b16 %v204
      %v445 = vunpack.c.l.b16 %v205
      %v446 = vunpack.c.h.b16 %v205
      %v447 = vunpack.c.l.b16 %v206
      %v448 = vunpack.c.h.b16 %v206
      %v449 = vunpack.c.l.b16 %v207
      %v450 = vunpack.c.h.b16 %v207
      %v451 = vunpack.c.l.b16 %v208
      %v452 = vunpack.c.h.b16 %v208
      %v453 = vunpack.c.l.b16 %v209
      %v454 = vunpack.c.h.b16 %v209
      %v455 = vunpack.c.l.b16 %v210
      %v456 = vunpack.c.h.b16 %v210
      %v457 = vunpack.c.l.b16 %v211
      %v458 = vunpack.c.h.b16 %v211
      %v459 = vunpack.c.l.b16 %v212
      %v460 = vunpack.c.h.b16 %v212
      %v461 = vunpack.c.l.b16 %v213
      %v462 = vunpack.c.h.b16 %v213
      %v463 = vunpack.c.l.b16 %v214
      %v464 = vunpack.c.h.b16 %v214
      %v465 = vunpack.c.l.b16 %v215
      %v466 = vunpack.c.h.b16 %v215
      %v467 = vunpack.c.l.b16 %v216
      %v468 = vunpack.c.h.b16 %v216
      %v469 = vunpack.c.l.b16 %v217
      %v470 = vunpack.c.h.b16 %v217
      %v471 = vunpack.c.l.b16 %v218
      %v472 = vunpack.c.h.b16 %v218
      %v473 = vunpack.c.l.b16 %v219
      %v474 = vunpack.c.h.b16 %v219
      %v475 = vunpack.c.l.b16 %v220
      %v476 = vunpack.c.h.b16 %v220
      %v477 = vunpack.c.l.b16 %v221
      %v478 = vunpack.c.h.b16 %v221
      %v479 = vunpack.c.l.b16 %v222
      %v480 = vunpack.c.h.b16 %v222
      %v481 = vunpack.c.l.b16 %v223
      %v482 = vunpack.c.h.b16 %v223
      %v483 = vunpack.c.l.b16 %v224
      %v484 = vunpack.c.h.b16 %v224
      %v485 = vunpack.c.l.b16 %v225
      %v486 = vunpack.c.h.b16 %v225
      %v487 = vunpack.c.l.b16 %v226
      %v488 = vunpack.c.h.b16 %v226
      %v489 = vunpack.c.l.b16 %v227
      %v490 = vunpack.c.h.b16 %v227
      %v491 = vunpack.c.l.b16 %v228
      %v492 = vunpack.c.h.b16 %v228
      %v493 = vunpack.c.l.b16 %v229
      %v494 = vunpack.c.h.b16 %v229
      %v495 = vunpack.c.l.b16 %v230
      %v496 = vunpack.c.h.b16 %v230
      %v497 = vunpack.c.l.b16 %v231
      %v498 = vunpack.c.h.b16 %v231
      %v499 = vunpack.c.l.b16 %v232
      %v500 = vunpack.c.h.b16 %v232
      %v501 = vpack.c.b16 %v333, %v329
      %v502 = vpack.c.b16 %v334, %v330
      %v503 = vpack.c.b16 %v335, %v331
      %v504 = vpack.c.b16 %v336, %v332
      %v505 = vpack.c.b16 %v341, %v337
      %v506 = vpack.c.b16 %v342, %v338
      %v507 = vpack.c.b16 %v343, %v339
      %v508 = vpack.c.b16 %v344, %v340
      %v509 = vpack.c.b16 %v349, %v345
      %v510 = vpack.c.b16 %v350, %v346
      %v511 = vpack.c.b16 %v351, %v347
      %v512 = vpack.c.b16 %v352, %v348
      %v513 = vpack.c.b16 %v357, %v353
      %v514 = vpack.c.b16 %v358, %v354
      %v515 = vpack.c.b16 %v359, %v355
      %v516 = vpack.c.b16 %v360, %v356
      %v517 = vpack.c.b16 %v365, %v361
      %v518 = vpack.c.b16 %v366, %v362
      %v519 = vpack.c.b16 %v367, %v363
      %v520 = vpack.c.b16 %v368, %v364
      %v521 = vpack.c.b16 %v373, %v369
      %v522 = vpack.c.b16 %v374, %v370
      %v523 = vpack.c.b16 %v375, %v371
      %v524 = vpack.c.b16 %v376, %v372
      %v525 = vpack.c.b16 %v381, %v377
      %v526 = vpack.c.b16 %v382, %v378
      %v527 = vpack.c.b16 %v383, %v379
      %v528 = vpack.c.b16 %v384, %v380
      %v529 = vpack.c.b16 %v389, %v385
      %v530 = vpack.c.b16 %v390, %v386
      %v531 = vpack.c.b16 %v391, %v387
      %v532 = vpack.c.b16 %v392, %v388
      %v533 = vpack.c.b16 %v397, %v393
      %v534 = vpack.c.b16 %v398, %v394
      %v535 = vpack.c.b16 %v399, %v395
      %v536 = vpack.c.b16 %v400, %v396
      %v537 = vpack.c.b16 %v405, %v401
      %v538 = vpack.c.b16 %v406, %v402
      %v539 = vpack.c.b16 %v407, %v403
      %v540 = vpack.c.b16 %v408, %v404
      %v541 = vpack.c.b16 %v413, %v409
      %v542 = vpack.c.b16 %v414, %v410
      %v543 = vpack.c.b16 %v415, %v411
      %v544 = vpack.c.b16 %v416, %v412
      %v545 = vpack.c.b16 %v421, %v417
      %v546 = vpack.c.b16 %v422, %v418
      %v547 = vpack.c.b16 %v423, %v419
      %v548 = vpack.c.b16 %v424, %v420
      %v549 = vpack.c.b16 %v429, %v425
      %v550 = vpack.c.b16 %v430, %v426
      %v551 = vpack.c.b16 %v431, %v427
      %v552 = vpack.c.b16 %v432, %v428
      %v553 = vpack.c.b16 %v437, %v433
      %v554 = vpack.c.b16 %v438, %v434
      %v555 = vpack.c.b16 %v439, %v435
      %v556 = vpack.c.b16 %v440, %v436
      %v557 = vpack.c.b16 %v445, %v441
      %v558 = vpack.c.b16 %v446, %v442
      %v559 = vpack.c.b16 %v447, %v443
      %v560 = vpack.c.b16 %v448, %v444
      %v561 = vpack.c.b16 %v453, %v449
      %v562 = vpack.c.b16 %v454, %v450
      %v563 = vpack.c.b16 %v455, %v451
      %v564 = vpack.c.b16 %v456, %v452
      %v565 = vpack.c.b16 %v461, %v457
      %v566 = vpack.c.b16 %v462, %v458
      %v567 = vpack.c.b16 %v463, %v459
      %v568 = vpack.c.b16 %v464, %v460
      %v569 = vpack.c.b16 %v469, %v465
      %v570 = vpack.c.b16 %v470, %v466
      %v571 = vpack.c.b16 %v471, %v467
      %v572 = vpack.c.b16 %v472, %v468
      %v573 = vpack.c.b16 %v477, %v473
      %v574 = vpack.c.b16 %v478, %v474
      %v575 = vpack.c.b16 %v479, %v475
      %v576 = vpack.c.b16 %v480, %v476
      %v577 = vpack.c.b16 %v485, %v481
      %v578 = vpack.c.b16 %v486, %v482
      %v579 = vpack.c.b16 %v487, %v483
      %v580 = vpack.c.b16 %v488, %v484
      %v581 = vpack.c.b16 %v493, %v489
      %v582 = vpack.c.b16 %v494, %v490
      %v583 = vpack.c.b16 %v495, %v491
      %v584 = vpack.c.b16 %v496, %v492
      %v585 = vpack.c.b16 %v497, %v497
      %v586 = vpack.c.b16 %v498, %v498
      %v587 = vpack.c.b16 %v499, %v499
      %v588 = vpack.c.b16 %v500, %v500
      %vm673 = vcmask 711680
      %v675 = vsel %vm673, %v240, 0
      %vm677 = vcmask 1042432
      %vm678 = vcmask 1043456
      %v679 = vsel %vm677, 4294967295, 65535
      %v680 = vsel %vm678, %v679, 0
      %v682 = vand.u32 %v585, %v680
      %v685 = vand.u32 %v586, %v680
      %v688 = vand.u32 %v587, %v680
      %v691 = vand.u32 %v588, %v680
      %693 = vmatprep.subr.bf16.mxu0 %v530
      %694 = vmatpush1.bf16.msra.mxu0 %v529
      %695 = vmatprep.subr.bf16.mxu0 %v526
      %696 = vmatpush1.bf16.msra.mxu0 %v525
      %697 = vmatprep.subr.bf16.mxu0 %v522
      %698 = vmatpush1.bf16.msra.mxu0 %v521
      %699 = vmatprep.subr.bf16.mxu0 %v518
      %700 = vmatpush1.bf16.msra.mxu0 %v517
      %701 = vmatprep.subr.bf16.mxu0 %v514
      %702 = vmatpush1.bf16.msra.mxu0 %v513
      %703 = vmatprep.subr.bf16.mxu0 %v510
      %704 = vmatpush1.bf16.msra.mxu0 %v509
      %705 = vmatprep.subr.bf16.mxu0 %v506
      %706 = vmatpush1.bf16.msra.mxu0 %v505
      %707 = vmatprep.subr.bf16.mxu0 %v502
      %708 = vmatpush1.bf16.msra.mxu0 %v501
      %709 = vmatprep.subr.bf16.mxu0 %v562
      %710 = vmatpush2.bf16.msra.mxu0 %v561
      %711 = vmatprep.subr.bf16.mxu0 %v558
      %712 = vmatpush2.bf16.msra.mxu0 %v557
      %713 = vmatprep.subr.bf16.mxu0 %v554
      %714 = vmatpush2.bf16.msra.mxu0 %v553
      %715 = vmatprep.subr.bf16.mxu0 %v550
      %716 = vmatpush2.bf16.msra.mxu0 %v549
      %717 = vmatprep.subr.bf16.mxu0 %v546
      %718 = vmatpush2.bf16.msra.mxu0 %v545
      %719 = vmatprep.subr.bf16.mxu0 %v542
      %720 = vmatpush2.bf16.msra.mxu0 %v541
      %721 = vmatprep.subr.bf16.mxu0 %v538
      %722 = vmatpush2.bf16.msra.mxu0 %v537
      %723 = vmatprep.subr.bf16.mxu0 %v534
      %724 = vmatpush2.bf16.msra.mxu0 %v533
      %725 = vmatprep.mubr.bf16.mxu0 %v239
      %726 = vmatmul.mubr.bf16.gmra.mxu0 %v238
      %v727 = vpop.f32.mrf.mxu0
      %v728 = vadd.f32 0.0, %v727
      %v729 = vpop.f32.mrf.mxu0
      %v730 = vadd.f32 0.0, %v729
      %v731 = vpop.f32.mrf.mxu0
      %v732 = vpop.f32.mrf.mxu0
      %733 = vdwg.mxu0
      %734 = vmatprep.subr.bf16.mxu0 0
      %735 = vmatpush1.bf16.msra.mxu0 0
      %736 = vmatprep.subr.bf16.mxu0 0
      %737 = vmatpush1.bf16.msra.mxu0 0
      %738 = vmatprep.subr.bf16.mxu0 %v685
      %739 = vmatpush1.bf16.msra.mxu0 %v682
      %740 = vmatprep.subr.bf16.mxu0 %v582
      %741 = vmatpush1.bf16.msra.mxu0 %v581
      %742 = vmatprep.subr.bf16.mxu0 %v578
      %743 = vmatpush1.bf16.msra.mxu0 %v577
      %744 = vmatprep.subr.bf16.mxu0 %v574
      %745 = vmatpush1.bf16.msra.mxu0 %v573
      %746 = vmatprep.subr.bf16.mxu0 %v570
      %747 = vmatpush1.bf16.msra.mxu0 %v569
      %748 = vmatprep.subr.bf16.mxu0 %v566
      %749 = vmatpush1.bf16.msra.mxu0 %v565
      %750 = vmatprep.subr.bf16.mxu0 0
      %751 = vmatpush2.bf16.msra.mxu0 0
      %752 = vmatprep.subr.bf16.mxu0 0
      %753 = vmatpush2.bf16.msra.mxu0 0
      %754 = vmatprep.subr.bf16.mxu0 0
      %755 = vmatpush2.bf16.msra.mxu0 0
      %756 = vmatprep.subr.bf16.mxu0 0
      %757 = vmatpush2.bf16.msra.mxu0 0
      %758 = vmatprep.subr.bf16.mxu0 0
      %759 = vmatpush2.bf16.msra.mxu0 0
      %760 = vmatprep.subr.bf16.mxu0 0
      %761 = vmatpush2.bf16.msra.mxu0 0
      %762 = vmatprep.subr.bf16.mxu0 0
      %763 = vmatpush2.bf16.msra.mxu0 0
      %764 = vmatprep.subr.bf16.mxu0 0
      %765 = vmatpush2.bf16.msra.mxu0 0
      %766 = vmatprep.mubr.bf16.mxu0 0
      %767 = vmatmul.mubr.bf16.gmra.mxu0 %v675
      %v768 = vpop.f32.mrf.mxu0
      %v769 = vadd.f32 %v728, %v768
      %v770 = vpop.f32.mrf.mxu0
      %v771 = vadd.f32 %v730, %v770
      %v772 = vpop.f32.mrf.mxu0
      %v773 = vpop.f32.mrf.mxu0
      %774 = vdwg.mxu0
      %775 = vmatprep.subr.bf16.mxu0 %v532
      %776 = vmatpush1.bf16.msra.mxu0 %v531
      %777 = vmatprep.subr.bf16.mxu0 %v528
      %778 = vmatpush1.bf16.msra.mxu0 %v527
      %779 = vmatprep.subr.bf16.mxu0 %v524
      %780 = vmatpush1.bf16.msra.mxu0 %v523
      %781 = vmatprep.subr.bf16.mxu0 %v520
      %782 = vmatpush1.bf16.msra.mxu0 %v519
      %783 = vmatprep.subr.bf16.mxu0 %v516
      %784 = vmatpush1.bf16.msra.mxu0 %v515
      %785 = vmatprep.subr.bf16.mxu0 %v512
      %786 = vmatpush1.bf16.msra.mxu0 %v511
      %787 = vmatprep.subr.bf16.mxu0 %v508
      %788 = vmatpush1.bf16.msra.mxu0 %v507
      %789 = vmatprep.subr.bf16.mxu0 %v504
      %790 = vmatpush1.bf16.msra.mxu0 %v503
      %791 = vmatprep.subr.bf16.mxu0 %v564
      %792 = vmatpush2.bf16.msra.mxu0 %v563
      %793 = vmatprep.subr.bf16.mxu0 %v560
      %794 = vmatpush2.bf16.msra.mxu0 %v559
      %795 = vmatprep.subr.bf16.mxu0 %v556
      %796 = vmatpush2.bf16.msra.mxu0 %v555
      %797 = vmatprep.subr.bf16.mxu0 %v552
      %798 = vmatpush2.bf16.msra.mxu0 %v551
      %799 = vmatprep.subr.bf16.mxu0 %v548
      %800 = vmatpush2.bf16.msra.mxu0 %v547
      %801 = vmatprep.subr.bf16.mxu0 %v544
      %802 = vmatpush2.bf16.msra.mxu0 %v543
      %803 = vmatprep.subr.bf16.mxu0 %v540
      %804 = vmatpush2.bf16.msra.mxu0 %v539
      %805 = vmatprep.subr.bf16.mxu0 %v536
      %806 = vmatpush2.bf16.msra.mxu0 %v535
      %807 = vmatprep.mubr.bf16.mxu0 %v239
      %808 = vmatmul.mubr.bf16.gmra.mxu0 %v238
      %v809 = vpop.f32.mrf.mxu0
      %v810 = vadd.f32 0.0, %v809
      %v811 = vpop.f32.mrf.mxu0
      %v812 = vadd.f32 0.0, %v811
      %v813 = vpop.f32.mrf.mxu0
      %v814 = vpop.f32.mrf.mxu0
      %815 = vdwg.mxu0
      %816 = vmatprep.subr.bf16.mxu0 0
      %817 = vmatpush1.bf16.msra.mxu0 0
      %818 = vmatprep.subr.bf16.mxu0 0
      %819 = vmatpush1.bf16.msra.mxu0 0
      %820 = vmatprep.subr.bf16.mxu0 %v691
      %821 = vmatpush1.bf16.msra.mxu0 %v688
      %822 = vmatprep.subr.bf16.mxu0 %v584
      %823 = vmatpush1.bf16.msra.mxu0 %v583
      %824 = vmatprep.subr.bf16.mxu0 %v580
      %825 = vmatpush1.bf16.msra.mxu0 %v579
      %826 = vmatprep.subr.bf16.mxu0 %v576
      %827 = vmatpush1.bf16.msra.mxu0 %v575
      %828 = vmatprep.subr.bf16.mxu0 %v572
      %829 = vmatpush1.bf16.msra.mxu0 %v571
      %830 = vmatprep.subr.bf16.mxu0 %v568
      %831 = vmatpush1.bf16.msra.mxu0 %v567
      %832 = vmatprep.subr.bf16.mxu0 0
      %833 = vmatpush2.bf16.msra.mxu0 0
      %834 = vmatprep.subr.bf16.mxu0 0
      %835 = vmatpush2.bf16.msra.mxu0 0
      %836 = vmatprep.subr.bf16.mxu0 0
      %837 = vmatpush2.bf16.msra.mxu0 0
      %838 = vmatprep.subr.bf16.mxu0 0
      %839 = vmatpush2.bf16.msra.mxu0 0
      %840 = vmatprep.subr.bf16.mxu0 0
      %841 = vmatpush2.bf16.msra.mxu0 0
      %842 = vmatprep.subr.bf16.mxu0 0
      %843 = vmatpush2.bf16.msra.mxu0 0
      %844 = vmatprep.subr.bf16.mxu0 0
      %845 = vmatpush2.bf16.msra.mxu0 0
      %846 = vmatprep.subr.bf16.mxu0 0
      %847 = vmatpush2.bf16.msra.mxu0 0
      %848 = vmatprep.mubr.bf16.mxu0 0
      %849 = vmatmul.mubr.bf16.gmra.mxu0 %v675
      %v850 = vpop.f32.mrf.mxu0
      %v851 = vadd.f32 %v810, %v850
      %v852 = vpop.f32.mrf.mxu0
      %v853 = vadd.f32 %v812, %v852
      %v854 = vpop.f32.mrf.mxu0
      %v855 = vpop.f32.mrf.mxu0
      %856 = vdwg.mxu0
      %v857 = vadd.f32 %v769, %v771
      %v858 = vadd.f32 %v857, %v851
      %v859 = vadd.f32 %v858, %v853
      %860 = vadd.xlane.f32.xlu0 %v859
      %v861 = vpop.xlane.xlu0 %860
      %v862 = vrcp.pop 512.0
      %v863 = vmul.f32 %v861, %v862
      %v864 = vsub.f32 %v769, %v863
      %v865 = vsub.f32 %v771, %v863
      %v866 = vsub.f32 %v851, %v863
      %v867 = vsub.f32 %v853, %v863
      %v868 = vmul.f32 %v864, %v864
      %v869 = vmul.f32 %v865, %v865
      %v870 = vmul.f32 %v866, %v866
      %v871 = vmul.f32 %v867, %v867
      %v872 = vadd.f32 %v868, %v869
      %v873 = vadd.f32 %v872, %v870
      %v874 = vadd.f32 %v873, %v871
      %875 = vadd.xlane.f32.xlu0 %v874
      %v876 = vpop.xlane.xlu0 %875
      %v877 = vmul.f32 %v876, %v862
      %v878 = vadd.f32 %v877, 1e-05
      %v879 = vrsqrt.pop %v878
      %v880 = vmul.f32 %v864, %v879
      %v881 = vmul.f32 %v865, %v879
      %v882 = vmul.f32 %v866, %v879
      %v883 = vmul.f32 %v867, %v879
      %vm884 = vcmp.gt.f32.partialorder %v880, 0.0
      %vm885 = vcmp.gt.f32.partialorder %v881, 0.0
      %vm886 = vcmp.gt.f32.partialorder %v882, 0.0
      %vm887 = vcmp.gt.f32.partialorder %v883, 0.0
      %v888 = vmul.f32 %v880, 0.2
      %v889 = vmul.f32 %v881, 0.2
      %v890 = vmul.f32 %v882, 0.2
      %v891 = vmul.f32 %v883, 0.2
      %v892 = vsel %vm884, %v880, %v888
      %v893 = vsel %vm885, %v881, %v889
      %v894 = vsel %vm886, %v882, %v890
      %v895 = vsel %vm887, %v883, %v891
      %v896 = vpack.c.bf16 %v892, %v892
      %v897 = vpack.c.bf16 %v893, %v893
      %v898 = vpack.c.bf16 %v894, %v894
      %v899 = vpack.c.bf16 %v895, %v895
      %v904 = vunpack.c.l.b16 %v896
      %v905 = vunpack.c.l.b16 %v897
      %v906 = vunpack.c.l.b16 %v898
      %v907 = vunpack.c.l.b16 %v899
      %v908 = vpack.c.b16 %v905, %v904
      %v909 = vpack.c.b16 %v907, %v906
      %912 = vst [vmem:[%s143] sm:$0xff] %v908
      %913 = vst [vmem:[%s143 + $0x8] sm:$0xff] %v909
      %p914 = scmp.lt.s32.totalorder %s13, 1
      %s915 = scalar_select %p914, %s13, 1
      %s916 = smul.addr %s915, 4
      %s917 = smul.addr %s916, 4
      %s918 = scalar_lea.vmem %s2, %s917
      // Predicated region
      $region29: #{encoder_forward.3} parent=27 // pred_check
        %p919 = pneg %p78
      $region30: #{encoder_forward.3} parent=27 // pred_check_branch
        %921 = sbr.rel (%p919) target = $region32
      $region31: #{encoder_forward.3} parent=27 // pred_region
        _
      $region32: #{encoder_forward.3} parent=27 // pred_fallthru
        _
    $region28: #{encoder_forward.3} parent=5 // pred_fallthru
      _
    %p922 = scmp.le.s32.totalorder 2, %s8
    // Predicated region
    $region33: #{encoder_forward.3} parent=5 // pred_check
      %p923 = pneg %p922
    $region34: #{encoder_forward.3} parent=5 // pred_check_branch
      %925 = sbr.rel (%p923) target = $region36
    $region35: #{encoder_forward.3} parent=5 // pred_region
      %s926 = ssub.s32 %s8, 2
      // Predicated region
      $region37: #{encoder_forward.3} parent=35 // pred_check
        %p927 = pneg %p84
      $region38: #{encoder_forward.3} parent=35 // pred_check_branch
        %929 = sbr.rel (%p927) target = $region40
      $region39: #{encoder_forward.3} parent=35 // pred_region
        %p930 = scmp.lt.s32.totalorder %s14, 1
        %s931 = scalar_select %p930, %s14, 1
        %s932 = smul.addr %s931, 4
        %s933 = smul.addr %s932, 4
        %s934 = scalar_lea.vmem %s2, %s933
      $region40: #{encoder_forward.3} parent=35 // pred_fallthru
        _
    $region36: #{encoder_forward.3} parent=5 // pred_fallthru
      _
  $region6: #{encoder_forward.3} parent=0 // loop_footer
    %s12 = sadd.s32 1, %s8
  $region7: #{encoder_forward.3} parent=0 // loop_footer_branch
    %7 = sbr.rel target = $region3
  $region8: #{encoder_forward.3} parent=0 // loop_exit
    _

// kernel: encoder_forward.4
$region0: #{encoder_forward.4}
  #allocation0 [shape = 'u32[]', space=smem, size = 0x4, offset = 0x4, fixed_abs, tag = 'smem constant byte address 0x4 - core index']
  #allocation1 [shape = 'u32[144,128]{1,0:T(1,128)}', space=vmem, size = 0x12000, scoped, tag = 'internal scratch']
  %s0 = inlined_call_operand.vmem [shape: bf16[2,512,64], index: 0, kind: input, shape index: {}]
  %s1 = inlined_call_operand.vmem [shape: bf16[16,512], index: 1, kind: input, shape index: {}]
  %s2 = inlined_call_operand.vmem [shape: bf16[2,16,64], index: 2, kind: output, shape index: {}]
  %s3 = sld [smem:[#allocation0]]
  $region41: #{encoder_forward.4} parent=0
    _
  %s5 = ssub.s32 1, %s3
  %s6 = scalar_select 0, %s5, %s3
  loop: start=0, step=1, limit=4
  $region2: #{encoder_forward.4} parent=0 // loop_pre_header
    _
  $region3: #{encoder_forward.4} parent=0 // loop_header
    %s8 = sphi 0, %s12
    %p9 = scmp.ge.s32.totalorder %s8, 4
    %s18 = sphi 0, %s20
    %s21 = sphi 0, %s18
    %s22 = sphi 0, %s21
    %s38 = sphi 0, %s22
    %s42 = sphi 0, %s42
    %s44 = sphi 0, %s42
    %s45 = sphi 0, %s44
    %s59 = sphi 0, %s45
    %s65 = sphi 0, %s67
    %s68 = sphi 0, %s65
    %s69 = sphi 0, %s68
    %s85 = sphi 0, %s69
  $region4: #{encoder_forward.4} parent=0 // loop_header_branch
    %11 = sbr.rel (%p9) target = $region8
  $region5: #{encoder_forward.4} parent=0 // loop_body
    %s13 = ssub.s32 %s8, 1
    %s14 = ssub.s32 %s8, 2
    %s15 = sadd.s32 %s8, 1
    %s16 = ssub.s32 %s8, %s15
    %p17 = scmp.eq.s32.totalorder %s16, 0
    %s19 = sadd.s32 %s18, 1
    %s20 = scalar_select %p17, %s18, %s19
    %p23 = pneg %p17
    %p24 = scmp.eq.s32.totalorder %s8, 1
    %p25 = por %p23, %p24
    %p26 = scmp.ne.s32.totalorder %s18, %s21
    %p27 = scmp.eq.s32.totalorder %s8, 0
    %p28 = por %p26, %p27
    %p29 = scmp.ne.s32.totalorder %s18, %s21
    %p30 = scmp.eq.s32.totalorder %s13, 1
    %p31 = por %p29, %p30
    %p32 = scmp.ne.s32.totalorder %s21, %s22
    %p33 = scmp.eq.s32.totalorder %s13, 0
    %p34 = por %p32, %p33
    %p35 = scmp.ne.s32.totalorder %s21, %s22
    %p36 = scmp.eq.s32.totalorder %s14, 1
    %p37 = por %p35, %p36
    %p39 = scmp.ne.s32.totalorder %s22, %s38
    %p40 = scmp.eq.s32.totalorder %s14, 0
    %p41 = por %p39, %p40
    %s43 = sadd.s32 %s42, 1
    %p46 = scmp.eq.s32.totalorder %s8, 1
    %p47 = scmp.ne.s32.totalorder %s42, %s44
    %p48 = scmp.eq.s32.totalorder %s8, 0
    %p49 = por %p47, %p48
    %p50 = scmp.ne.s32.totalorder %s42, %s44
    %p51 = scmp.eq.s32.totalorder %s13, 1
    %p52 = por %p50, %p51
    %p53 = scmp.ne.s32.totalorder %s44, %s45
    %p54 = scmp.eq.s32.totalorder %s13, 0
    %p55 = por %p53, %p54
    %p56 = scmp.ne.s32.totalorder %s44, %s45
    %p57 = scmp.eq.s32.totalorder %s14, 1
    %p58 = por %p56, %p57
    %p60 = scmp.ne.s32.totalorder %s45, %s59
    %p61 = scmp.eq.s32.totalorder %s14, 0
    %p62 = por %p60, %p61
    %s63 = ssub.s32 %s8, %s15
    %p64 = scmp.eq.s32.totalorder %s63, 0
    %s66 = sadd.s32 %s65, 1
    %s67 = scalar_select %p64, %s65, %s66
    %p70 = pneg %p64
    %p71 = scmp.eq.s32.totalorder %s8, 1
    %p72 = por %p70, %p71
    %p73 = scmp.ne.s32.totalorder %s65, %s68
    %p74 = scmp.eq.s32.totalorder %s8, 0
    %p75 = por %p73, %p74
    %p76 = scmp.ne.s32.totalorder %s65, %s68
    %p77 = scmp.eq.s32.totalorder %s13, 1
    %p78 = por %p76, %p77
    %p79 = scmp.ne.s32.totalorder %s68, %s69
    %p80 = scmp.eq.s32.totalorder %s13, 0
    %p81 = por %p79, %p80
    %p82 = scmp.ne.s32.totalorder %s68, %s69
    %p83 = scmp.eq.s32.totalorder %s14, 1
    %p84 = por %p82, %p83
    %p86 = scmp.ne.s32.totalorder %s69, %s85
    %p87 = scmp.eq.s32.totalorder %s14, 0
    %p88 = por %p86, %p87
    %p89 = scmp.le.s32.totalorder 1, %s8
    %p90 = scmp.lt.s32.totalorder %s8, 3
    %p91 = pnand %p89, %p90
    %p92 = pneg %p91
    // Predicated region
    $region9: #{encoder_forward.4} parent=5 // pred_check
      _
    $region10: #{encoder_forward.4} parent=5 // pred_check_branch
      %94 = sbr.rel (%p91) target = $region12
    $region11: #{encoder_forward.4} parent=5 // pred_region
      %s95 = ssub.s32 %s8, 1
      // Predicated region
      $region13: #{encoder_forward.4} parent=11 // pred_check
        %p96 = pneg %p55
      $region14: #{encoder_forward.4} parent=11 // pred_check_branch
        %98 = sbr.rel (%p96) target = $region16
      $region15: #{encoder_forward.4} parent=11 // pred_region
        _
      $region16: #{encoder_forward.4} parent=11 // pred_fallthru
        _
    $region12: #{encoder_forward.4} parent=5 // pred_fallthru
      _
    %p99 = scmp.lt.s32.totalorder %s8, 2
    // Predicated region
    $region17: #{encoder_forward.4} parent=5 // pred_check
      %p100 = pneg %p99
    $region18: #{encoder_forward.4} parent=5 // pred_check_branch
      %102 = sbr.rel (%p100) target = $region20
    $region19: #{encoder_forward.4} parent=5 // pred_region
      // Predicated region
      $region21: #{encoder_forward.4} parent=19 // pred_check
        %p103 = pneg %p28
      $region22: #{encoder_forward.4} parent=19 // pred_check_branch
        %105 = sbr.rel (%p103) target = $region24
      $region23: #{encoder_forward.4} parent=19 // pred_region
        %p106 = scmp.lt.s32.totalorder %s8, 1
        %s107 = scalar_select %p106, %s8, 1
        %s108 = smul.addr %s107, 64
        %s109 = smul.addr %s108, 4
        %s110 = scalar_lea.vmem %s0, %s109
      $region24: #{encoder_forward.4} parent=19 // pred_fallthru
        _
    $region20: #{encoder_forward.4} parent=5 // pred_fallthru
      _
    %p111 = scmp.le.s32.totalorder 1, %s8
    %p112 = scmp.lt.s32.totalorder %s8, 3
    %p113 = pnand %p111, %p112
    %p114 = pneg %p113
    // Predicated region
    $region25: #{encoder_forward.4} parent=5 // pred_check
      _
    $region26: #{encoder_forward.4} parent=5 // pred_check_branch
      %116 = sbr.rel (%p113) target = $region28
    $region27: #{encoder_forward.4} parent=5 // pred_region
      %s117 = ssub.s32 %s8, 1
      %p118 = scmp.lt.s32.totalorder %s13, 1
      %s119 = scalar_select %p118, %s13, 1
      %s120 = smul.addr %s119, 64
      %s121 = smul.addr %s120, 4
      %s122 = scalar_lea.vmem %s0, %s121
      %p123 = pneg %p34
      %p124 = pneg %p31
      %p125 = pneg %p55
      %p126 = pneg %p52
      %p127 = pneg %p81
      %p128 = pneg %p78
      %p129 = scmp.lt.s32.totalorder %s13, 1
      %s130 = scalar_select %p129, %s13, 1
      %s131 = smul.addr %s130, 2
      %s132 = smul.addr %s131, 4
      %s133 = scalar_lea.vmem %s2, %s132
      %p134 = scmp.lt.s32.totalorder %s13, 1
      %s135 = scalar_select %p134, %s13, 1
      %s136 = smul.addr %s135, 64
      %s137 = smul.addr %s136, 4
      %s138 = scalar_lea.vmem %s0, %s137
      %p139 = scmp.lt.s32.totalorder %s13, 1
      %s140 = scalar_select %p139, %s13, 1
      %s141 = smul.addr %s140, 2
      %s142 = smul.addr %s141, 4
      %s143 = scalar_lea.vmem %s2, %s142
      %v145 = vld [vmem:[%s1] sm:$0xff]
      %v146 = vld [vmem:[%s1 + $0x8] sm:$0xff]
      %v147 = vld [vmem:[%s1 + $0x10] sm:$0xff]
      %v148 = vld [vmem:[%s1 + $0x18] sm:$0xff]
      %v149 = vld [vmem:[%s138] sm:$0xf]
      %v150 = vld [vmem:[%s138 + $0x4] sm:$0xf]
      %v151 = vld [vmem:[%s138 + $0x8] sm:$0xf]
      %v152 = vld [vmem:[%s138 + $0xc] sm:$0xf]
      %v153 = vld [vmem:[%s138 + $0x10] sm:$0xf]
      %v154 = vld [vmem:[%s138 + $0x14] sm:$0xf]
      %v155 = vld [vmem:[%s138 + $0x18] sm:$0xf]
      %v156 = vld [vmem:[%s138 + $0x1c] sm:$0xf]
      %v157 = vld [vmem:[%s138 + $0x20] sm:$0xf]
      %v158 = vld [vmem:[%s138 + $0x24] sm:$0xf]
      %v159 = vld [vmem:[%s138 + $0x28] sm:$0xf]
      %v160 = vld [vmem:[%s138 + $0x2c] sm:$0xf]
      %v161 = vld [vmem:[%s138 + $0x30] sm:$0xf]
      %v162 = vld [vmem:[%s138 + $0x34] sm:$0xf]
      %v163 = vld [vmem:[%s138 + $0x38] sm:$0xf]
      %v164 = vld [vmem:[%s138 + $0x3c] sm:$0xf]
      %v165 = vld [vmem:[%s138 + $0x40] sm:$0xf]
      %v166 = vld [vmem:[%s138 + $0x44] sm:$0xf]
      %v167 = vld [vmem:[%s138 + $0x48] sm:$0xf]
      %v168 = vld [vmem:[%s138 + $0x4c] sm:$0xf]
      %v169 = vld [vmem:[%s138 + $0x50] sm:$0xf]
      %v170 = vld [vmem:[%s138 + $0x54] sm:$0xf]
      %v171 = vld [vmem:[%s138 + $0x58] sm:$0xf]
      %v172 = vld [vmem:[%s138 + $0x5c] sm:$0xf]
      %v173 = vld [vmem:[%s138 + $0x60] sm:$0xf]
      %v174 = vld [vmem:[%s138 + $0x64] sm:$0xf]
      %v175 = vld [vmem:[%s138 + $0x68] sm:$0xf]
      %v176 = vld [vmem:[%s138 + $0x6c] sm:$0xf]
      %v177 = vld [vmem:[%s138 + $0x70] sm:$0xf]
      %v178 = vld [vmem:[%s138 + $0x74] sm:$0xf]
      %v179 = vld [vmem:[%s138 + $0x78] sm:$0xf]
      %v180 = vld [vmem:[%s138 + $0x7c] sm:$0xf]
      %v181 = vld [vmem:[%s138 + $0x80] sm:$0xf]
      %v182 = vld [vmem:[%s138 + $0x84] sm:$0xf]
      %v183 = vld [vmem:[%s138 + $0x88] sm:$0xf]
      %v184 = vld [vmem:[%s138 + $0x8c] sm:$0xf]
      %v185 = vld [vmem:[%s138 + $0x90] sm:$0xf]
      %v186 = vld [vmem:[%s138 + $0x94] sm:$0xf]
      %v187 = vld [vmem:[%s138 + $0x98] sm:$0xf]
      %v188 = vld [vmem:[%s138 + $0x9c] sm:$0xf]
      %v189 = vld [vmem:[%s138 + $0xa0] sm:$0xf]
      %v190 = vld [vmem:[%s138 + $0xa4] sm:$0xf]
      %v191 = vld [vmem:[%s138 + $0xa8] sm:$0xf]
      %v192 = vld [vmem:[%s138 + $0xac] sm:$0xf]
      %v193 = vld [vmem:[%s138 + $0xb0] sm:$0xf]
      %v194 = vld [vmem:[%s138 + $0xb4] sm:$0xf]
      %v195 = vld [vmem:[%s138 + $0xb8] sm:$0xf]
      %v196 = vld [vmem:[%s138 + $0xbc] sm:$0xf]
      %v197 = vld [vmem:[%s138 + $0xc0] sm:$0xf]
      %v198 = vld [vmem:[%s138 + $0xc4] sm:$0xf]
      %v199 = vld [vmem:[%s138 + $0xc8] sm:$0xf]
      %v200 = vld [vmem:[%s138 + $0xcc] sm:$0xf]
      %v201 = vld [vmem:[%s138 + $0xd0] sm:$0xf]
      %v202 = vld [vmem:[%s138 + $0xd4] sm:$0xf]
      %v203 = vld [vmem:[%s138 + $0xd8] sm:$0xf]
      %v204 = vld [vmem:[%s138 + $0xdc] sm:$0xf]
      %v205 = vld [vmem:[%s138 + $0xe0] sm:$0xf]
      %v206 = vld [vmem:[%s138 + $0xe4] sm:$0xf]
      %v207 = vld [vmem:[%s138 + $0xe8] sm:$0xf]
      %v208 = vld [vmem:[%s138 + $0xec] sm:$0xf]
      %v209 = vld [vmem:[%s138 + $0xf0] sm:$0xf]
      %v210 = vld [vmem:[%s138 + $0xf4] sm:$0xf]
      %v211 = vld [vmem:[%s138 + $0xf8] sm:$0xf]
      %v212 = vld [vmem:[%s138 + $0xfc] sm:$0xf]
      %v217 = vunpack.c.l.b16 %v145
      %v218 = vunpack.c.h.b16 %v145
      %v219 = vunpack.c.l.b16 %v146
      %v220 = vunpack.c.h.b16 %v146
      %v221 = vunpack.c.l.b16 %v147
      %v222 = vunpack.c.h.b16 %v147
      %v223 = vunpack.c.l.b16 %v148
      %v224 = vunpack.c.h.b16 %v148
      %v225 = vpack.c.b16 %v221, %v217
      %v226 = vpack.c.b16 %v222, %v218
      %v227 = vpack.c.b16 %v223, %v219
      %v228 = vpack.c.b16 %v224, %v220
      %v297 = vunpack.c.l.b16 %v149
      %v298 = vunpack.c.l.b16 %v150
      %v299 = vunpack.c.l.b16 %v151
      %v300 = vunpack.c.l.b16 %v152
      %v301 = vunpack.c.l.b16 %v153
      %v302 = vunpack.c.l.b16 %v154
      %v303 = vunpack.c.l.b16 %v155
      %v304 = vunpack.c.l.b16 %v156
      %v305 = vunpack.c.l.b16 %v157
      %v306 = vunpack.c.l.b16 %v158
      %v307 = vunpack.c.l.b16 %v159
      %v308 = vunpack.c.l.b16 %v160
      %v309 = vunpack.c.l.b16 %v161
      %v310 = vunpack.c.l.b16 %v162
      %v311 = vunpack.c.l.b16 %v163
      %v312 = vunpack.c.l.b16 %v164
      %v313 = vunpack.c.l.b16 %v165
      %v314 = vunpack.c.l.b16 %v166
      %v315 = vunpack.c.l.b16 %v167
      %v316 = vunpack.c.l.b16 %v168
      %v317 = vunpack.c.l.b16 %v169
      %v318 = vunpack.c.l.b16 %v170
      %v319 = vunpack.c.l.b16 %v171
      %v320 = vunpack.c.l.b16 %v172
      %v321 = vunpack.c.l.b16 %v173
      %v322 = vunpack.c.l.b16 %v174
      %v323 = vunpack.c.l.b16 %v175
      %v324 = vunpack.c.l.b16 %v176
      %v325 = vunpack.c.l.b16 %v177
      %v326 = vunpack.c.l.b16 %v178
      %v327 = vunpack.c.l.b16 %v179
      %v328 = vunpack.c.l.b16 %v180
      %v329 = vunpack.c.l.b16 %v181
      %v330 = vunpack.c.l.b16 %v182
      %v331 = vunpack.c.l.b16 %v183
      %v332 = vunpack.c.l.b16 %v184
      %v333 = vunpack.c.l.b16 %v185
      %v334 = vunpack.c.l.b16 %v186
      %v335 = vunpack.c.l.b16 %v187
      %v336 = vunpack.c.l.b16 %v188
      %v337 = vunpack.c.l.b16 %v189
      %v338 = vunpack.c.l.b16 %v190
      %v339 = vunpack.c.l.b16 %v191
      %v340 = vunpack.c.l.b16 %v192
      %v341 = vunpack.c.l.b16 %v193
      %v342 = vunpack.c.l.b16 %v194
      %v343 = vunpack.c.l.b16 %v195
      %v344 = vunpack.c.l.b16 %v196
      %v345 = vunpack.c.l.b16 %v197
      %v346 = vunpack.c.l.b16 %v198
      %v347 = vunpack.c.l.b16 %v199
      %v348 = vunpack.c.l.b16 %v200
      %v349 = vunpack.c.l.b16 %v201
      %v350 = vunpack.c.l.b16 %v202
      %v351 = vunpack.c.l.b16 %v203
      %v352 = vunpack.c.l.b16 %v204
      %v353 = vunpack.c.l.b16 %v205
      %v354 = vunpack.c.l.b16 %v206
      %v355 = vunpack.c.l.b16 %v207
      %v356 = vunpack.c.l.b16 %v208
      %v357 = vunpack.c.l.b16 %v209
      %v358 = vunpack.c.l.b16 %v210
      %v359 = vunpack.c.l.b16 %v211
      %v360 = vunpack.c.l.b16 %v212
      %v361 = vpack.c.b16 %v298, %v297
      %v362 = vpack.c.b16 %v300, %v299
      %v363 = vpack.c.b16 %v302, %v301
      %v364 = vpack.c.b16 %v304, %v303
      %v365 = vpack.c.b16 %v306, %v305
      %v366 = vpack.c.b16 %v308, %v307
      %v367 = vpack.c.b16 %v310, %v309
      %v368 = vpack.c.b16 %v312, %v311
      %v369 = vpack.c.b16 %v314, %v313
      %v370 = vpack.c.b16 %v316, %v315
      %v371 = vpack.c.b16 %v318, %v317
      %v372 = vpack.c.b16 %v320, %v319
      %v373 = vpack.c.b16 %v322, %v321
      %v374 = vpack.c.b16 %v324, %v323
      %v375 = vpack.c.b16 %v326, %v325
      %v376 = vpack.c.b16 %v328, %v327
      %v377 = vpack.c.b16 %v330, %v329
      %v378 = vpack.c.b16 %v332, %v331
      %v379 = vpack.c.b16 %v334, %v333
      %v380 = vpack.c.b16 %v336, %v335
      %v381 = vpack.c.b16 %v338, %v337
      %v382 = vpack.c.b16 %v340, %v339
      %v383 = vpack.c.b16 %v342, %v341
      %v384 = vpack.c.b16 %v344, %v343
      %v385 = vpack.c.b16 %v346, %v345
      %v386 = vpack.c.b16 %v348, %v347
      %v387 = vpack.c.b16 %v350, %v349
      %v388 = vpack.c.b16 %v352, %v351
      %v389 = vpack.c.b16 %v354, %v353
      %v390 = vpack.c.b16 %v356, %v355
      %v391 = vpack.c.b16 %v358, %v357
      %v392 = vpack.c.b16 %v360, %v359
      %425 = vmatprep.subr.bf16.mxu0 0
      %426 = vmatpush1.bf16.msra.mxu0 %v368
      %427 = vmatprep.subr.bf16.mxu0 0
      %428 = vmatpush1.bf16.msra.mxu0 %v367
      %429 = vmatprep.subr.bf16.mxu0 0
      %430 = vmatpush1.bf16.msra.mxu0 %v366
      %431 = vmatprep.subr.bf16.mxu0 0
      %432 = vmatpush1.bf16.msra.mxu0 %v365
      %433 = vmatprep.subr.bf16.mxu0 0
      %434 = vmatpush1.bf16.msra.mxu0 %v364
      %435 = vmatprep.subr.bf16.mxu0 0
      %436 = vmatpush1.bf16.msra.mxu0 %v363
      %437 = vmatprep.subr.bf16.mxu0 0
      %438 = vmatpush1.bf16.msra.mxu0 %v362
      %439 = vmatprep.subr.bf16.mxu0 0
      %440 = vmatpush1.bf16.msra.mxu0 %v361
      %441 = vmatprep.subr.bf16.mxu0 0
      %442 = vmatpush2.bf16.msra.mxu0 %v376
      %443 = vmatprep.subr.bf16.mxu0 0
      %444 = vmatpush2.bf16.msra.mxu0 %v375
      %445 = vmatprep.subr.bf16.mxu0 0
      %446 = vmatpush2.bf16.msra.mxu0 %v374
      %447 = vmatprep.subr.bf16.mxu0 0
      %448 = vmatpush2.bf16.msra.mxu0 %v373
      %449 = vmatprep.subr.bf16.mxu0 0
      %450 = vmatpush2.bf16.msra.mxu0 %v372
      %451 = vmatprep.subr.bf16.mxu0 0
      %452 = vmatpush2.bf16.msra.mxu0 %v371
      %453 = vmatprep.subr.bf16.mxu0 0
      %454 = vmatpush2.bf16.msra.mxu0 %v370
      %455 = vmatprep.subr.bf16.mxu0 0
      %456 = vmatpush2.bf16.msra.mxu0 %v369
      %457 = vmatprep.mubr.bf16.mxu0 %v226
      %458 = vmatmul.mubr.bf16.gmra.mxu0 %v225
      %v459 = vpop.f32.mrf.mxu0
      %v460 = vadd.f32 0.0, %v459
      %v461 = vpop.f32.mrf.mxu0
      %v462 = vpop.f32.mrf.mxu0
      %v463 = vadd.f32 0.0, %v462
      %v464 = vpop.f32.mrf.mxu0
      %465 = vdwg.mxu0
      %466 = vmatprep.subr.bf16.mxu0 0
      %467 = vmatpush1.bf16.msra.mxu0 %v384
      %468 = vmatprep.subr.bf16.mxu0 0
      %469 = vmatpush1.bf16.msra.mxu0 %v383
      %470 = vmatprep.subr.bf16.mxu0 0
      %471 = vmatpush1.bf16.msra.mxu0 %v382
      %472 = vmatprep.subr.bf16.mxu0 0
      %473 = vmatpush1.bf16.msra.mxu0 %v381
      %474 = vmatprep.subr.bf16.mxu0 0
      %475 = vmatpush1.bf16.msra.mxu0 %v380
      %476 = vmatprep.subr.bf16.mxu0 0
      %477 = vmatpush1.bf16.msra.mxu0 %v379
      %478 = vmatprep.subr.bf16.mxu0 0
      %479 = vmatpush1.bf16.msra.mxu0 %v378
      %480 = vmatprep.subr.bf16.mxu0 0
      %481 = vmatpush1.bf16.msra.mxu0 %v377
      %482 = vmatprep.subr.bf16.mxu0 0
      %483 = vmatpush2.bf16.msra.mxu0 %v392
      %484 = vmatprep.subr.bf16.mxu0 0
      %485 = vmatpush2.bf16.msra.mxu0 %v391
      %486 = vmatprep.subr.bf16.mxu0 0
      %487 = vmatpush2.bf16.msra.mxu0 %v390
      %488 = vmatprep.subr.bf16.mxu0 0
      %489 = vmatpush2.bf16.msra.mxu0 %v389
      %490 = vmatprep.subr.bf16.mxu0 0
      %491 = vmatpush2.bf16.msra.mxu0 %v388
      %492 = vmatprep.subr.bf16.mxu0 0
      %493 = vmatpush2.bf16.msra.mxu0 %v387
      %494 = vmatprep.subr.bf16.mxu0 0
      %495 = vmatpush2.bf16.msra.mxu0 %v386
      %496 = vmatprep.subr.bf16.mxu0 0
      %497 = vmatpush2.bf16.msra.mxu0 %v385
      %498 = vmatprep.mubr.bf16.mxu0 %v228
      %499 = vmatmul.mubr.bf16.gmra.mxu0 %v227
      %v500 = vpop.f32.mrf.mxu0
      %v501 = vadd.f32 %v460, %v500
      %v502 = vpop.f32.mrf.mxu0
      %v503 = vpop.f32.mrf.mxu0
      %v504 = vadd.f32 %v463, %v503
      %v505 = vpop.f32.mrf.mxu0
      %506 = vdwg.mxu0
      %vm507 = vcmask 523264
      %v508 = vsel %vm507, %v501, 0.0
      %509 = vadd.xlane.f32.xlu0 %v508
      %v510 = vpop.xlane.xlu0 %509
      %v511 = vsel %vm507, %v504, 0.0
      %512 = vadd.xlane.f32.xlu0 %v511
      %v513 = vpop.xlane.xlu0 %512
      %v514 = vrcp.pop 64.0
      %v515 = vmul.f32 %v510, %v514
      %v516 = vmul.f32 %v513, %v514
      %v517 = vsub.f32 %v501, %v515
      %v518 = vsub.f32 %v504, %v516
      %v519 = vmul.f32 %v517, %v517
      %v520 = vmul.f32 %v518, %v518
      %v521 = vsel %vm507, %v519, 0.0
      %522 = vadd.xlane.f32.xlu0 %v521
      %v523 = vpop.xlane.xlu0 %522
      %v524 = vsel %vm507, %v520, 0.0
      %525 = vadd.xlane.f32.xlu0 %v524
      %v526 = vpop.xlane.xlu0 %525
      %v527 = vmul.f32 %v523, %v514
      %v528 = vmul.f32 %v526, %v514
      %v529 = vadd.f32 %v527, 1e-05
      %v530 = vadd.f32 %v528, 1e-05
      %v531 = vrsqrt.pop %v529
      %v532 = vrsqrt.pop %v530
      %v533 = vmul.f32 %v517, %v531
      %v534 = vmul.f32 %v518, %v532
      %v535 = vmax.f32 %v533, 0.0
      %v536 = vmax.f32 %v534, 0.0
      %v537 = vpack.c.bf16 %v536, %v535
      %v539 = vunpack.c.l.b16 %v537
      %v540 = vunpack.c.h.b16 %v537
      %v541 = vpack.c.b16 %v539, %v539
      %v542 = vpack.c.b16 %v540, %v540
      %vm545 = vcmask 519168
      %546 = vst.msk [vmem:[%s143] sm:$0xf] %vm545, %v541
      %547 = vst.msk [vmem:[%s143 + $0x4] sm:$0xf] %vm545, %v542
      %p548 = scmp.lt.s32.totalorder %s13, 1
      %s549 = scalar_select %p548, %s13, 1
      %s550 = smul.addr %s549, 2
      %s551 = smul.addr %s550, 4
      %s552 = scalar_lea.vmem %s2, %s551
      // Predicated region
      $region29: #{encoder_forward.4} parent=27 // pred_check
        %p553 = pneg %p78
      $region30: #{encoder_forward.4} parent=27 // pred_check_branch
        %555 = sbr.rel (%p553) target = $region32
      $region31: #{encoder_forward.4} parent=27 // pred_region
        _
      $region32: #{encoder_forward.4} parent=27 // pred_fallthru
        _
    $region28: #{encoder_forward.4} parent=5 // pred_fallthru
      _
    %p556 = scmp.le.s32.totalorder 2, %s8
    // Predicated region
    $region33: #{encoder_forward.4} parent=5 // pred_check
      %p557 = pneg %p556
    $region34: #{encoder_forward.4} parent=5 // pred_check_branch
      %559 = sbr.rel (%p557) target = $region36
    $region35: #{encoder_forward.4} parent=5 // pred_region
      %s560 = ssub.s32 %s8, 2
      // Predicated region
      $region37: #{encoder_forward.4} parent=35 // pred_check
        %p561 = pneg %p84
      $region38: #{encoder_forward.4} parent=35 // pred_check_branch
        %563 = sbr.rel (%p561) target = $region40
      $region39: #{encoder_forward.4} parent=35 // pred_region
        %p564 = scmp.lt.s32.totalorder %s14, 1
        %s565 = scalar_select %p564, %s14, 1
        %s566 = smul.addr %s565, 2
        %s567 = smul.addr %s566, 4
        %s568 = scalar_lea.vmem %s2, %s567
      $region40: #{encoder_forward.4} parent=35 // pred_fallthru
        _
    $region36: #{encoder_forward.4} parent=5 // pred_fallthru
      _
  $region6: #{encoder_forward.4} parent=0 // loop_footer
    %s12 = sadd.s32 1, %s8
  $region7: #{encoder_forward.4} parent=0 // loop_footer_branch
    %7 = sbr.rel target = $region3
  $region8: #{encoder_forward.4} parent=0 // loop_exit
    _

// kernel: encoder_forward.5
$region0: #{encoder_forward.5}
  #allocation0 [shape = 'u32[]', space=smem, size = 0x4, offset = 0x4, fixed_abs, tag = 'smem constant byte address 0x4 - core index']
  #allocation1 [shape = 'u32[144,128]{1,0:T(1,128)}', space=vmem, size = 0x12000, scoped, tag = 'internal scratch']
  %s0 = inlined_call_operand.vmem [shape: bf16[2,1024], index: 0, kind: input, shape index: {}]
  %s1 = inlined_call_operand.vmem [shape: bf16[1024,256], index: 1, kind: input, shape index: {}]
  %s2 = inlined_call_operand.vmem [shape: bf16[8,256,256], index: 2, kind: input, shape index: {}]
  %s3 = inlined_call_operand.vmem [shape: f32[256,256], index: 3, kind: input, shape index: {}]
  %s4 = inlined_call_operand.vmem [shape: f32[2,256], index: 4, kind: input, shape index: {}]
  %s5 = inlined_call_operand.vmem [shape: f32[2,256], index: 5, kind: output, shape index: {0}]
  %s6 = inlined_call_operand.vmem [shape: f32[2,256], index: 6, kind: output, shape index: {1}]
  %7 = xla_tuple %s5, %s6
  %s8 = sld [smem:[#allocation0]]
  $region38: #{encoder_forward.5} parent=0
    _
  %s10 = ssub.s32 1, %s8
  %s11 = scalar_select 0, %s10, %s8
  // Predicated region
  $region2: #{encoder_forward.5} parent=0 // pred_check
    _
  $region3: #{encoder_forward.5} parent=0 // pred_check_branch
    %13 = sbr.rel (0) target = $region5
  $region4: #{encoder_forward.5} parent=0 // pred_region
    _
  $region5: #{encoder_forward.5} parent=0 // pred_fallthru
    _
  // Predicated region
  $region6: #{encoder_forward.5} parent=0 // pred_check
    _
  $region7: #{encoder_forward.5} parent=0 // pred_check_branch
    %15 = sbr.rel (0) target = $region9
  $region8: #{encoder_forward.5} parent=0 // pred_region
    _
  $region9: #{encoder_forward.5} parent=0 // pred_fallthru
    _
  // Predicated region
  $region10: #{encoder_forward.5} parent=0 // pred_check
    _
  $region11: #{encoder_forward.5} parent=0 // pred_check_branch
    %17 = sbr.rel (0) target = $region13
  $region12: #{encoder_forward.5} parent=0 // pred_region
    _
  $region13: #{encoder_forward.5} parent=0 // pred_fallthru
    _
  // Predicated region
  $region14: #{encoder_forward.5} parent=0 // pred_check
    _
  $region15: #{encoder_forward.5} parent=0 // pred_check_branch
    %19 = sbr.rel (0) target = $region17
  $region16: #{encoder_forward.5} parent=0 // pred_region
    _
  $region17: #{encoder_forward.5} parent=0 // pred_fallthru
    _
  // Predicated region
  $region18: #{encoder_forward.5} parent=0 // pred_check
    _
  $region19: #{encoder_forward.5} parent=0 // pred_check_branch
    %21 = sbr.rel (0) target = $region21
  $region20: #{encoder_forward.5} parent=0 // pred_region
    _
  $region21: #{encoder_forward.5} parent=0 // pred_fallthru
    _
  %v22 = vld [vmem:[%s3] sm:$0xff]
  %v23 = vld [vmem:[%s3 + $0x8] sm:$0xff]
  %v24 = vld [vmem:[%s3 + $0x10] sm:$0xff]
  %v25 = vld [vmem:[%s3 + $0x18] sm:$0xff]
  %v26 = vld [vmem:[%s3 + $0x20] sm:$0xff]
  %v27 = vld [vmem:[%s3 + $0x28] sm:$0xff]
  %v28 = vld [vmem:[%s3 + $0x30] sm:$0xff]
  %v29 = vld [vmem:[%s3 + $0x38] sm:$0xff]
  %v30 = vld [vmem:[%s3 + $0x40] sm:$0xff]
  %v31 = vld [vmem:[%s3 + $0x48] sm:$0xff]
  %v32 = vld [vmem:[%s3 + $0x50] sm:$0xff]
  %v33 = vld [vmem:[%s3 + $0x58] sm:$0xff]
  %v34 = vld [vmem:[%s3 + $0x60] sm:$0xff]
  %v35 = vld [vmem:[%s3 + $0x68] sm:$0xff]
  %v36 = vld [vmem:[%s3 + $0x70] sm:$0xff]
  %v37 = vld [vmem:[%s3 + $0x78] sm:$0xff]
  %v38 = vld [vmem:[%s3 + $0x80] sm:$0xff]
  %v39 = vld [vmem:[%s3 + $0x88] sm:$0xff]
  %v40 = vld [vmem:[%s3 + $0x90] sm:$0xff]
  %v41 = vld [vmem:[%s3 + $0x98] sm:$0xff]
  %v42 = vld [vmem:[%s3 + $0xa0] sm:$0xff]
  %v43 = vld [vmem:[%s3 + $0xa8] sm:$0xff]
  %v44 = vld [vmem:[%s3 + $0xb0] sm:$0xff]
  %v45 = vld [vmem:[%s3 + $0xb8] sm:$0xff]
  %v46 = vld [vmem:[%s3 + $0xc0] sm:$0xff]
  %v47 = vld [vmem:[%s3 + $0xc8] sm:$0xff]
  %v48 = vld [vmem:[%s3 + $0xd0] sm:$0xff]
  %v49 = vld [vmem:[%s3 + $0xd8] sm:$0xff]
  %v50 = vld [vmem:[%s3 + $0xe0] sm:$0xff]
  %v51 = vld [vmem:[%s3 + $0xe8] sm:$0xff]
  %v52 = vld [vmem:[%s3 + $0xf0] sm:$0xff]
  %v53 = vld [vmem:[%s3 + $0xf8] sm:$0xff]
  %v54 = vld [vmem:[%s3 + $0x100] sm:$0xff]
  %v55 = vld [vmem:[%s3 + $0x108] sm:$0xff]
  %v56 = vld [vmem:[%s3 + $0x110] sm:$0xff]
  %v57 = vld [vmem:[%s3 + $0x118] sm:$0xff]
  %v58 = vld [vmem:[%s3 + $0x120] sm:$0xff]
  %v59 = vld [vmem:[%s3 + $0x128] sm:$0xff]
  %v60 = vld [vmem:[%s3 + $0x130] sm:$0xff]
  %v61 = vld [vmem:[%s3 + $0x138] sm:$0xff]
  %v62 = vld [vmem:[%s3 + $0x140] sm:$0xff]
  %v63 = vld [vmem:[%s3 + $0x148] sm:$0xff]
  %v64 = vld [vmem:[%s3 + $0x150] sm:$0xff]
  %v65 = vld [vmem:[%s3 + $0x158] sm:$0xff]
  %v66 = vld [vmem:[%s3 + $0x160] sm:$0xff]
  %v67 = vld [vmem:[%s3 + $0x168] sm:$0xff]
  %v68 = vld [vmem:[%s3 + $0x170] sm:$0xff]
  %v69 = vld [vmem:[%s3 + $0x178] sm:$0xff]
  %v70 = vld [vmem:[%s3 + $0x180] sm:$0xff]
  %v71 = vld [vmem:[%s3 + $0x188] sm:$0xff]
  %v72 = vld [vmem:[%s3 + $0x190] sm:$0xff]
  %v73 = vld [vmem:[%s3 + $0x198] sm:$0xff]
  %v74 = vld [vmem:[%s3 + $0x1a0] sm:$0xff]
  %v75 = vld [vmem:[%s3 + $0x1a8] sm:$0xff]
  %v76 = vld [vmem:[%s3 + $0x1b0] sm:$0xff]
  %v77 = vld [vmem:[%s3 + $0x1b8] sm:$0xff]
  %v78 = vld [vmem:[%s3 + $0x1c0] sm:$0xff]
  %v79 = vld [vmem:[%s3 + $0x1c8] sm:$0xff]
  %v80 = vld [vmem:[%s3 + $0x1d0] sm:$0xff]
  %v81 = vld [vmem:[%s3 + $0x1d8] sm:$0xff]
  %v82 = vld [vmem:[%s3 + $0x1e0] sm:$0xff]
  %v83 = vld [vmem:[%s3 + $0x1e8] sm:$0xff]
  %v84 = vld [vmem:[%s3 + $0x1f0] sm:$0xff]
  %v85 = vld [vmem:[%s3 + $0x1f8] sm:$0xff]
  %v86 = vld [vmem:[%s0] sm:$0xff]
  %v87 = vld [vmem:[%s1] sm:$0xff]
  %v88 = vld [vmem:[%s1 + $0x8] sm:$0xff]
  %v89 = vld [vmem:[%s1 + $0x10] sm:$0xff]
  %v90 = vld [vmem:[%s1 + $0x18] sm:$0xff]
  %v91 = vld [vmem:[%s1 + $0x20] sm:$0xff]
  %v92 = vld [vmem:[%s1 + $0x28] sm:$0xff]
  %v93 = vld [vmem:[%s1 + $0x30] sm:$0xff]
  %v94 = vld [vmem:[%s1 + $0x38] sm:$0xff]
  %v95 = vld [vmem:[%s1 + $0x40] sm:$0xff]
  %v96 = vld [vmem:[%s1 + $0x48] sm:$0xff]
  %v97 = vld [vmem:[%s1 + $0x50] sm:$0xff]
  %v98 = vld [vmem:[%s1 + $0x58] sm:$0xff]
  %v99 = vld [vmem:[%s1 + $0x60] sm:$0xff]
  %v100 = vld [vmem:[%s1 + $0x68] sm:$0xff]
  %v101 = vld [vmem:[%s1 + $0x70] sm:$0xff]
  %v102 = vld [vmem:[%s1 + $0x78] sm:$0xff]
  %v103 = vld [vmem:[%s1 + $0x80] sm:$0xff]
  %v104 = vld [vmem:[%s1 + $0x88] sm:$0xff]
  %v105 = vld [vmem:[%s1 + $0x90] sm:$0xff]
  %v106 = vld [vmem:[%s1 + $0x98] sm:$0xff]
  %v107 = vld [vmem:[%s1 + $0xa0] sm:$0xff]
  %v108 = vld [vmem:[%s1 + $0xa8] sm:$0xff]
  %v109 = vld [vmem:[%s1 + $0xb0] sm:$0xff]
  %v110 = vld [vmem:[%s1 + $0xb8] sm:$0xff]
  %v111 = vld [vmem:[%s1 + $0xc0] sm:$0xff]
  %v112 = vld [vmem:[%s1 + $0xc8] sm:$0xff]
  %v113 = vld [vmem:[%s1 + $0xd0] sm:$0xff]
  %v114 = vld [vmem:[%s1 + $0xd8] sm:$0xff]
  %v115 = vld [vmem:[%s1 + $0xe0] sm:$0xff]
  %v116 = vld [vmem:[%s1 + $0xe8] sm:$0xff]
  %v117 = vld [vmem:[%s1 + $0xf0] sm:$0xff]
  %v118 = vld [vmem:[%s1 + $0xf8] sm:$0xff]
  %v119 = vld [vmem:[%s1 + $0x100] sm:$0xff]
  %v120 = vld [vmem:[%s1 + $0x108] sm:$0xff]
  %v121 = vld [vmem:[%s1 + $0x110] sm:$0xff]
  %v122 = vld [vmem:[%s1 + $0x118] sm:$0xff]
  %v123 = vld [vmem:[%s1 + $0x120] sm:$0xff]
  %v124 = vld [vmem:[%s1 + $0x128] sm:$0xff]
  %v125 = vld [vmem:[%s1 + $0x130] sm:$0xff]
  %v126 = vld [vmem:[%s1 + $0x138] sm:$0xff]
  %v127 = vld [vmem:[%s1 + $0x140] sm:$0xff]
  %v128 = vld [vmem:[%s1 + $0x148] sm:$0xff]
  %v129 = vld [vmem:[%s1 + $0x150] sm:$0xff]
  %v130 = vld [vmem:[%s1 + $0x158] sm:$0xff]
  %v131 = vld [vmem:[%s1 + $0x160] sm:$0xff]
  %v132 = vld [vmem:[%s1 + $0x168] sm:$0xff]
  %v133 = vld [vmem:[%s1 + $0x170] sm:$0xff]
  %v134 = vld [vmem:[%s1 + $0x178] sm:$0xff]
  %v135 = vld [vmem:[%s1 + $0x180] sm:$0xff]
  %v136 = vld [vmem:[%s1 + $0x188] sm:$0xff]
  %v137 = vld [vmem:[%s1 + $0x190] sm:$0xff]
  %v138 = vld [vmem:[%s1 + $0x198] sm:$0xff]
  %v139 = vld [vmem:[%s1 + $0x1a0] sm:$0xff]
  %v140 = vld [vmem:[%s1 + $0x1a8] sm:$0xff]
  %v141 = vld [vmem:[%s1 + $0x1b0] sm:$0xff]
  %v142 = vld [vmem:[%s1 + $0x1b8] sm:$0xff]
  %v143 = vld [vmem:[%s1 + $0x1c0] sm:$0xff]
  %v144 = vld [vmem:[%s1 + $0x1c8] sm:$0xff]
  %v145 = vld [vmem:[%s1 + $0x1d0] sm:$0xff]
  %v146 = vld [vmem:[%s1 + $0x1d8] sm:$0xff]
  %v147 = vld [vmem:[%s1 + $0x1e0] sm:$0xff]
  %v148 = vld [vmem:[%s1 + $0x1e8] sm:$0xff]
  %v149 = vld [vmem:[%s1 + $0x1f0] sm:$0xff]
  %v150 = vld [vmem:[%s1 + $0x1f8] sm:$0xff]
  %v151 = vld [vmem:[%s1 + $0x200] sm:$0xff]
  %v152 = vld [vmem:[%s1 + $0x208] sm:$0xff]
  %v153 = vld [vmem:[%s1 + $0x210] sm:$0xff]
  %v154 = vld [vmem:[%s1 + $0x218] sm:$0xff]
  %v155 = vld [vmem:[%s1 + $0x220] sm:$0xff]
  %v156 = vld [vmem:[%s1 + $0x228] sm:$0xff]
  %v157 = vld [vmem:[%s1 + $0x230] sm:$0xff]
  %v158 = vld [vmem:[%s1 + $0x238] sm:$0xff]
  %v159 = vld [vmem:[%s1 + $0x240] sm:$0xff]
  %v160 = vld [vmem:[%s1 + $0x248] sm:$0xff]
  %v161 = vld [vmem:[%s1 + $0x250] sm:$0xff]
  %v162 = vld [vmem:[%s1 + $0x258] sm:$0xff]
  %v163 = vld [vmem:[%s1 + $0x260] sm:$0xff]
  %v164 = vld [vmem:[%s1 + $0x268] sm:$0xff]
  %v165 = vld [vmem:[%s1 + $0x270] sm:$0xff]
  %v166 = vld [vmem:[%s1 + $0x278] sm:$0xff]
  %v167 = vld [vmem:[%s1 + $0x280] sm:$0xff]
  %v168 = vld [vmem:[%s1 + $0x288] sm:$0xff]
  %v169 = vld [vmem:[%s1 + $0x290] sm:$0xff]
  %v170 = vld [vmem:[%s1 + $0x298] sm:$0xff]
  %v171 = vld [vmem:[%s1 + $0x2a0] sm:$0xff]
  %v172 = vld [vmem:[%s1 + $0x2a8] sm:$0xff]
  %v173 = vld [vmem:[%s1 + $0x2b0] sm:$0xff]
  %v174 = vld [vmem:[%s1 + $0x2b8] sm:$0xff]
  %v175 = vld [vmem:[%s1 + $0x2c0] sm:$0xff]
  %v176 = vld [vmem:[%s1 + $0x2c8] sm:$0xff]
  %v177 = vld [vmem:[%s1 + $0x2d0] sm:$0xff]
  %v178 = vld [vmem:[%s1 + $0x2d8] sm:$0xff]
  %v179 = vld [vmem:[%s1 + $0x2e0] sm:$0xff]
  %v180 = vld [vmem:[%s1 + $0x2e8] sm:$0xff]
  %v181 = vld [vmem:[%s1 + $0x2f0] sm:$0xff]
  %v182 = vld [vmem:[%s1 + $0x2f8] sm:$0xff]
  %v183 = vld [vmem:[%s1 + $0x300] sm:$0xff]
  %v184 = vld [vmem:[%s1 + $0x308] sm:$0xff]
  %v185 = vld [vmem:[%s1 + $0x310] sm:$0xff]
  %v186 = vld [vmem:[%s1 + $0x318] sm:$0xff]
  %v187 = vld [vmem:[%s1 + $0x320] sm:$0xff]
  %v188 = vld [vmem:[%s1 + $0x328] sm:$0xff]
  %v189 = vld [vmem:[%s1 + $0x330] sm:$0xff]
  %v190 = vld [vmem:[%s1 + $0x338] sm:$0xff]
  %v191 = vld [vmem:[%s1 + $0x340] sm:$0xff]
  %v192 = vld [vmem:[%s1 + $0x348] sm:$0xff]
  %v193 = vld [vmem:[%s1 + $0x350] sm:$0xff]
  %v194 = vld [vmem:[%s1 + $0x358] sm:$0xff]
  %v195 = vld [vmem:[%s1 + $0x360] sm:$0xff]
  %v196 = vld [vmem:[%s1 + $0x368] sm:$0xff]
  %v197 = vld [vmem:[%s1 + $0x370] sm:$0xff]
  %v198 = vld [vmem:[%s1 + $0x378] sm:$0xff]
  %v199 = vld [vmem:[%s1 + $0x380] sm:$0xff]
  %v200 = vld [vmem:[%s1 + $0x388] sm:$0xff]
  %v201 = vld [vmem:[%s1 + $0x390] sm:$0xff]
  %v202 = vld [vmem:[%s1 + $0x398] sm:$0xff]
  %v203 = vld [vmem:[%s1 + $0x3a0] sm:$0xff]
  %v204 = vld [vmem:[%s1 + $0x3a8] sm:$0xff]
  %v205 = vld [vmem:[%s1 + $0x3b0] sm:$0xff]
  %v206 = vld [vmem:[%s1 + $0x3b8] sm:$0xff]
  %v207 = vld [vmem:[%s1 + $0x3c0] sm:$0xff]
  %v208 = vld [vmem:[%s1 + $0x3c8] sm:$0xff]
  %v209 = vld [vmem:[%s1 + $0x3d0] sm:$0xff]
  %v210 = vld [vmem:[%s1 + $0x3d8] sm:$0xff]
  %v211 = vld [vmem:[%s1 + $0x3e0] sm:$0xff]
  %v212 = vld [vmem:[%s1 + $0x3e8] sm:$0xff]
  %v213 = vld [vmem:[%s1 + $0x3f0] sm:$0xff]
  %v214 = vld [vmem:[%s1 + $0x3f8] sm:$0xff]
  %v216 = vcombine.high %v86, %v86
  %v218 = vunpack.c.l.s4 1966171168
  %v219 = vunpack.c.0.s8 %v218
  %v220 = vlaneseq
  %v221 = vshrl.u32 %v220, 7
  %v222 = vsub.s32 %v219, %v221
  %v223 = vrot.slane %v86, %v222
  %v225 = vunpack.c.l.s4 1966171168
  %v226 = vunpack.c.0.s8 %v225
  %v227 = vlaneseq
  %v228 = vshrl.u32 %v227, 7
  %v229 = vsub.s32 %v226, %v228
  %v230 = vrot.slane %v216, %v229
  %v231 = vcombine.high %v223, %v223
  %v232 = vcombine.high %v230, %v230
  %v234 = vunpack.c.l.s4 1966171168
  %v235 = vunpack.c.0.s8 %v234
  %v236 = vlaneseq
  %v237 = vshrl.u32 %v236, 7
  %v238 = vsub.s32 %v235, %v237
  %v239 = vrot.slane %v223, %v238
  %v241 = vunpack.c.l.s4 1966171168
  %v242 = vunpack.c.0.s8 %v241
  %v243 = vlaneseq
  %v244 = vshrl.u32 %v243, 7
  %v245 = vsub.s32 %v242, %v244
  %v246 = vrot.slane %v230, %v245
  %v248 = vunpack.c.l.s4 1966171168
  %v249 = vunpack.c.0.s8 %v248
  %v250 = vlaneseq
  %v251 = vshrl.u32 %v250, 7
  %v252 = vsub.s32 %v249, %v251
  %v253 = vrot.slane %v231, %v252
  %v255 = vunpack.c.l.s4 1966171168
  %v256 = vunpack.c.0.s8 %v255
  %v257 = vlaneseq
  %v258 = vshrl.u32 %v257, 7
  %v259 = vsub.s32 %v256, %v258
  %v260 = vrot.slane %v232, %v259
  %v261 = vcombine.high %v239, %v239
  %v262 = vcombine.high %v246, %v246
  %v263 = vcombine.high %v253, %v253
  %v264 = vcombine.high %v260, %v260
  %v401 = vunpack.c.l.b16 %v87
  %v402 = vunpack.c.h.b16 %v87
  %v403 = vunpack.c.l.b16 %v88
  %v404 = vunpack.c.h.b16 %v88
  %v405 = vunpack.c.l.b16 %v89
  %v406 = vunpack.c.h.b16 %v89
  %v407 = vunpack.c.l.b16 %v90
  %v408 = vunpack.c.h.b16 %v90
  %v409 = vunpack.c.l.b16 %v91
  %v410 = vunpack.c.h.b16 %v91
  %v411 = vunpack.c.l.b16 %v92
  %v412 = vunpack.c.h.b16 %v92
  %v413 = vunpack.c.l.b16 %v93
  %v414 = vunpack.c.h.b16 %v93
  %v415 = vunpack.c.l.b16 %v94
  %v416 = vunpack.c.h.b16 %v94
  %v417 = vunpack.c.l.b16 %v95
  %v418 = vunpack.c.h.b16 %v95
  %v419 = vunpack.c.l.b16 %v96
  %v420 = vunpack.c.h.b16 %v96
  %v421 = vunpack.c.l.b16 %v97
  %v422 = vunpack.c.h.b16 %v97
  %v423 = vunpack.c.l.b16 %v98
  %v424 = vunpack.c.h.b16 %v98
  %v425 = vunpack.c.l.b16 %v99
  %v426 = vunpack.c.h.b16 %v99
  %v427 = vunpack.c.l.b16 %v100
  %v428 = vunpack.c.h.b16 %v100
  %v429 = vunpack.c.l.b16 %v101
  %v430 = vunpack.c.h.b16 %v101
  %v431 = vunpack.c.l.b16 %v102
  %v432 = vunpack.c.h.b16 %v102
  %v433 = vunpack.c.l.b16 %v103
  %v434 = vunpack.c.h.b16 %v103
  %v435 = vunpack.c.l.b16 %v104
  %v436 = vunpack.c.h.b16 %v104
  %v437 = vunpack.c.l.b16 %v105
  %v438 = vunpack.c.h.b16 %v105
  %v439 = vunpack.c.l.b16 %v106
  %v440 = vunpack.c.h.b16 %v106
  %v441 = vunpack.c.l.b16 %v107
  %v442 = vunpack.c.h.b16 %v107
  %v443 = vunpack.c.l.b16 %v108
  %v444 = vunpack.c.h.b16 %v108
  %v445 = vunpack.c.l.b16 %v109
  %v446 = vunpack.c.h.b16 %v109
  %v447 = vunpack.c.l.b16 %v110
  %v448 = vunpack.c.h.b16 %v110
  %v449 = vunpack.c.l.b16 %v111
  %v450 = vunpack.c.h.b16 %v111
  %v451 = vunpack.c.l.b16 %v112
  %v452 = vunpack.c.h.b16 %v112
  %v453 = vunpack.c.l.b16 %v113
  %v454 = vunpack.c.h.b16 %v113
  %v455 = vunpack.c.l.b16 %v114
  %v456 = vunpack.c.h.b16 %v114
  %v457 = vunpack.c.l.b16 %v115
  %v458 = vunpack.c.h.b16 %v115
  %v459 = vunpack.c.l.b16 %v116
  %v460 = vunpack.c.h.b16 %v116
  %v461 = vunpack.c.l.b16 %v117
  %v462 = vunpack.c.h.b16 %v117
  %v463 = vunpack.c.l.b16 %v118
  %v464 = vunpack.c.h.b16 %v118
  %v465 = vunpack.c.l.b16 %v119
  %v466 = vunpack.c.h.b16 %v119
  %v467 = vunpack.c.l.b16 %v120
  %v468 = vunpack.c.h.b16 %v120
  %v469 = vunpack.c.l.b16 %v121
  %v470 = vunpack.c.h.b16 %v121
  %v471 = vunpack.c.l.b16 %v122
  %v472 = vunpack.c.h.b16 %v122
  %v473 = vunpack.c.l.b16 %v123
  %v474 = vunpack.c.h.b16 %v123
  %v475 = vunpack.c.l.b16 %v124
  %v476 = vunpack.c.h.b16 %v124
  %v477 = vunpack.c.l.b16 %v125
  %v478 = vunpack.c.h.b16 %v125
  %v479 = vunpack.c.l.b16 %v126
  %v480 = vunpack.c.h.b16 %v126
  %v481 = vunpack.c.l.b16 %v127
  %v482 = vunpack.c.h.b16 %v127
  %v483 = vunpack.c.l.b16 %v128
  %v484 = vunpack.c.h.b16 %v128
  %v485 = vunpack.c.l.b16 %v129
  %v486 = vunpack.c.h.b16 %v129
  %v487 = vunpack.c.l.b16 %v130
  %v488 = vunpack.c.h.b16 %v130
  %v489 = vunpack.c.l.b16 %v131
  %v490 = vunpack.c.h.b16 %v131
  %v491 = vunpack.c.l.b16 %v132
  %v492 = vunpack.c.h.b16 %v132
  %v493 = vunpack.c.l.b16 %v133
  %v494 = vunpack.c.h.b16 %v133
  %v495 = vunpack.c.l.b16 %v134
  %v496 = vunpack.c.h.b16 %v134
  %v497 = vunpack.c.l.b16 %v135
  %v498 = vunpack.c.h.b16 %v135
  %v499 = vunpack.c.l.b16 %v136
  %v500 = vunpack.c.h.b16 %v136
  %v501 = vunpack.c.l.b16 %v137
  %v502 = vunpack.c.h.b16 %v137
  %v503 = vunpack.c.l.b16 %v138
  %v504 = vunpack.c.h.b16 %v138
  %v505 = vunpack.c.l.b16 %v139
  %v506 = vunpack.c.h.b16 %v139
  %v507 = vunpack.c.l.b16 %v140
  %v508 = vunpack.c.h.b16 %v140
  %v509 = vunpack.c.l.b16 %v141
  %v510 = vunpack.c.h.b16 %v141
  %v511 = vunpack.c.l.b16 %v142
  %v512 = vunpack.c.h.b16 %v142
  %v513 = vunpack.c.l.b16 %v143
  %v514 = vunpack.c.h.b16 %v143
  %v515 = vunpack.c.l.b16 %v144
  %v516 = vunpack.c.h.b16 %v144
  %v517 = vunpack.c.l.b16 %v145
  %v518 = vunpack.c.h.b16 %v145
  %v519 = vunpack.c.l.b16 %v146
  %v520 = vunpack.c.h.b16 %v146
  %v521 = vunpack.c.l.b16 %v147
  %v522 = vunpack.c.h.b16 %v147
  %v523 = vunpack.c.l.b16 %v148
  %v524 = vunpack.c.h.b16 %v148
  %v525 = vunpack.c.l.b16 %v149
  %v526 = vunpack.c.h.b16 %v149
  %v527 = vunpack.c.l.b16 %v150
  %v528 = vunpack.c.h.b16 %v150
  %v529 = vunpack.c.l.b16 %v151
  %v530 = vunpack.c.h.b16 %v151
  %v531 = vunpack.c.l.b16 %v152
  %v532 = vunpack.c.h.b16 %v152
  %v533 = vunpack.c.l.b16 %v153
  %v534 = vunpack.c.h.b16 %v153
  %v535 = vunpack.c.l.b16 %v154
  %v536 = vunpack.c.h.b16 %v154
  %v537 = vunpack.c.l.b16 %v155
  %v538 = vunpack.c.h.b16 %v155
  %v539 = vunpack.c.l.b16 %v156
  %v540 = vunpack.c.h.b16 %v156
  %v541 = vunpack.c.l.b16 %v157
  %v542 = vunpack.c.h.b16 %v157
  %v543 = vunpack.c.l.b16 %v158
  %v544 = vunpack.c.h.b16 %v158
  %v545 = vunpack.c.l.b16 %v159
  %v546 = vunpack.c.h.b16 %v159
  %v547 = vunpack.c.l.b16 %v160
  %v548 = vunpack.c.h.b16 %v160
  %v549 = vunpack.c.l.b16 %v161
  %v550 = vunpack.c.h.b16 %v161
  %v551 = vunpack.c.l.b16 %v162
  %v552 = vunpack.c.h.b16 %v162
  %v553 = vunpack.c.l.b16 %v163
  %v554 = vunpack.c.h.b16 %v163
  %v555 = vunpack.c.l.b16 %v164
  %v556 = vunpack.c.h.b16 %v164
  %v557 = vunpack.c.l.b16 %v165
  %v558 = vunpack.c.h.b16 %v165
  %v559 = vunpack.c.l.b16 %v166
  %v560 = vunpack.c.h.b16 %v166
  %v561 = vunpack.c.l.b16 %v167
  %v562 = vunpack.c.h.b16 %v167
  %v563 = vunpack.c.l.b16 %v168
  %v564 = vunpack.c.h.b16 %v168
  %v565 = vunpack.c.l.b16 %v169
  %v566 = vunpack.c.h.b16 %v169
  %v567 = vunpack.c.l.b16 %v170
  %v568 = vunpack.c.h.b16 %v170
  %v569 = vunpack.c.l.b16 %v171
  %v570 = vunpack.c.h.b16 %v171
  %v571 = vunpack.c.l.b16 %v172
  %v572 = vunpack.c.h.b16 %v172
  %v573 = vunpack.c.l.b16 %v173
  %v574 = vunpack.c.h.b16 %v173
  %v575 = vunpack.c.l.b16 %v174
  %v576 = vunpack.c.h.b16 %v174
  %v577 = vunpack.c.l.b16 %v175
  %v578 = vunpack.c.h.b16 %v175
  %v579 = vunpack.c.l.b16 %v176
  %v580 = vunpack.c.h.b16 %v176
  %v581 = vunpack.c.l.b16 %v177
  %v582 = vunpack.c.h.b16 %v177
  %v583 = vunpack.c.l.b16 %v178
  %v584 = vunpack.c.h.b16 %v178
  %v585 = vunpack.c.l.b16 %v179
  %v586 = vunpack.c.h.b16 %v179
  %v587 = vunpack.c.l.b16 %v180
  %v588 = vunpack.c.h.b16 %v180
  %v589 = vunpack.c.l.b16 %v181
  %v590 = vunpack.c.h.b16 %v181
  %v591 = vunpack.c.l.b16 %v182
  %v592 = vunpack.c.h.b16 %v182
  %v593 = vunpack.c.l.b16 %v183
  %v594 = vunpack.c.h.b16 %v183
  %v595 = vunpack.c.l.b16 %v184
  %v596 = vunpack.c.h.b16 %v184
  %v597 = vunpack.c.l.b16 %v185
  %v598 = vunpack.c.h.b16 %v185
  %v599 = vunpack.c.l.b16 %v186
  %v600 = vunpack.c.h.b16 %v186
  %v601 = vunpack.c.l.b16 %v187
  %v602 = vunpack.c.h.b16 %v187
  %v603 = vunpack.c.l.b16 %v188
  %v604 = vunpack.c.h.b16 %v188
  %v605 = vunpack.c.l.b16 %v189
  %v606 = vunpack.c.h.b16 %v189
  %v607 = vunpack.c.l.b16 %v190
  %v608 = vunpack.c.h.b16 %v190
  %v609 = vunpack.c.l.b16 %v191
  %v610 = vunpack.c.h.b16 %v191
  %v611 = vunpack.c.l.b16 %v192
  %v612 = vunpack.c.h.b16 %v192
  %v613 = vunpack.c.l.b16 %v193
  %v614 = vunpack.c.h.b16 %v193
  %v615 = vunpack.c.l.b16 %v194
  %v616 = vunpack.c.h.b16 %v194
  %v617 = vunpack.c.l.b16 %v195
  %v618 = vunpack.c.h.b16 %v195
  %v619 = vunpack.c.l.b16 %v196
  %v620 = vunpack.c.h.b16 %v196
  %v621 = vunpack.c.l.b16 %v197
  %v622 = vunpack.c.h.b16 %v197
  %v623 = vunpack.c.l.b16 %v198
  %v624 = vunpack.c.h.b16 %v198
  %v625 = vunpack.c.l.b16 %v199
  %v626 = vunpack.c.h.b16 %v199
  %v627 = vunpack.c.l.b16 %v200
  %v628 = vunpack.c.h.b16 %v200
  %v629 = vunpack.c.l.b16 %v201
  %v630 = vunpack.c.h.b16 %v201
  %v631 = vunpack.c.l.b16 %v202
  %v632 = vunpack.c.h.b16 %v202
  %v633 = vunpack.c.l.b16 %v203
  %v634 = vunpack.c.h.b16 %v203
  %v635 = vunpack.c.l.b16 %v204
  %v636 = vunpack.c.h.b16 %v204
  %v637 = vunpack.c.l.b16 %v205
  %v638 = vunpack.c.h.b16 %v205
  %v639 = vunpack.c.l.b16 %v206
  %v640 = vunpack.c.h.b16 %v206
  %v641 = vunpack.c.l.b16 %v207
  %v642 = vunpack.c.h.b16 %v207
  %v643 = vunpack.c.l.b16 %v208
  %v644 = vunpack.c.h.b16 %v208
  %v645 = vunpack.c.l.b16 %v209
  %v646 = vunpack.c.h.b16 %v209
  %v647 = vunpack.c.l.b16 %v210
  %v648 = vunpack.c.h.b16 %v210
  %v649 = vunpack.c.l.b16 %v211
  %v650 = vunpack.c.h.b16 %v211
  %v651 = vunpack.c.l.b16 %v212
  %v652 = vunpack.c.h.b16 %v212
  %v653 = vunpack.c.l.b16 %v213
  %v654 = vunpack.c.h.b16 %v213
  %v655 = vunpack.c.l.b16 %v214
  %v656 = vunpack.c.h.b16 %v214
  %v657 = vpack.c.b16 %v403, %v401
  %v658 = vpack.c.b16 %v404, %v402
  %v659 = vpack.c.b16 %v407, %v405
  %v660 = vpack.c.b16 %v408, %v406
  %v661 = vpack.c.b16 %v411, %v409
  %v662 = vpack.c.b16 %v412, %v410
  %v663 = vpack.c.b16 %v415, %v413
  %v664 = vpack.c.b16 %v416, %v414
  %v665 = vpack.c.b16 %v419, %v417
  %v666 = vpack.c.b16 %v420, %v418
  %v667 = vpack.c.b16 %v423, %v421
  %v668 = vpack.c.b16 %v424, %v422
  %v669 = vpack.c.b16 %v427, %v425
  %v670 = vpack.c.b16 %v428, %v426
  %v671 = vpack.c.b16 %v431, %v429
  %v672 = vpack.c.b16 %v432, %v430
  %v673 = vpack.c.b16 %v435, %v433
  %v674 = vpack.c.b16 %v436, %v434
  %v675 = vpack.c.b16 %v439, %v437
  %v676 = vpack.c.b16 %v440, %v438
  %v677 = vpack.c.b16 %v443, %v441
  %v678 = vpack.c.b16 %v444, %v442
  %v679 = vpack.c.b16 %v447, %v445
  %v680 = vpack.c.b16 %v448, %v446
  %v681 = vpack.c.b16 %v451, %v449
  %v682 = vpack.c.b16 %v452, %v450
  %v683 = vpack.c.b16 %v455, %v453
  %v684 = vpack.c.b16 %v456, %v454
  %v685 = vpack.c.b16 %v459, %v457
  %v686 = vpack.c.b16 %v460, %v458
  %v687 = vpack.c.b16 %v463, %v461
  %v688 = vpack.c.b16 %v464, %v462
  %v689 = vpack.c.b16 %v467, %v465
  %v690 = vpack.c.b16 %v468, %v466
  %v691 = vpack.c.b16 %v471, %v469
  %v692 = vpack.c.b16 %v472, %v470
  %v693 = vpack.c.b16 %v475, %v473
  %v694 = vpack.c.b16 %v476, %v474
  %v695 = vpack.c.b16 %v479, %v477
  %v696 = vpack.c.b16 %v480, %v478
  %v697 = vpack.c.b16 %v483, %v481
  %v698 = vpack.c.b16 %v484, %v482
  %v699 = vpack.c.b16 %v487, %v485
  %v700 = vpack.c.b16 %v488, %v486
  %v701 = vpack.c.b16 %v491, %v489
  %v702 = vpack.c.b16 %v492, %v490
  %v703 = vpack.c.b16 %v495, %v493
  %v704 = vpack.c.b16 %v496, %v494
  %v705 = vpack.c.b16 %v499, %v497
  %v706 = vpack.c.b16 %v500, %v498
  %v707 = vpack.c.b16 %v503, %v501
  %v708 = vpack.c.b16 %v504, %v502
  %v709 = vpack.c.b16 %v507, %v505
  %v710 = vpack.c.b16 %v508, %v506
  %v711 = vpack.c.b16 %v511, %v509
  %v712 = vpack.c.b16 %v512, %v510
  %v713 = vpack.c.b16 %v515, %v513
  %v714 = vpack.c.b16 %v516, %v514
  %v715 = vpack.c.b16 %v519, %v517
  %v716 = vpack.c.b16 %v520, %v518
  %v717 = vpack.c.b16 %v523, %v521
  %v718 = vpack.c.b16 %v524, %v522
  %v719 = vpack.c.b16 %v527, %v525
  %v720 = vpack.c.b16 %v528, %v526
  %v721 = vpack.c.b16 %v531, %v529
  %v722 = vpack.c.b16 %v532, %v530
  %v723 = vpack.c.b16 %v535, %v533
  %v724 = vpack.c.b16 %v536, %v534
  %v725 = vpack.c.b16 %v539, %v537
  %v726 = vpack.c.b16 %v540, %v538
  %v727 = vpack.c.b16 %v543, %v541
  %v728 = vpack.c.b16 %v544, %v542
  %v729 = vpack.c.b16 %v547, %v545
  %v730 = vpack.c.b16 %v548, %v546
  %v731 = vpack.c.b16 %v551, %v549
  %v732 = vpack.c.b16 %v552, %v550
  %v733 = vpack.c.b16 %v555, %v553
  %v734 = vpack.c.b16 %v556, %v554
  %v735 = vpack.c.b16 %v559, %v557
  %v736 = vpack.c.b16 %v560, %v558
  %v737 = vpack.c.b16 %v563, %v561
  %v738 = vpack.c.b16 %v564, %v562
  %v739 = vpack.c.b16 %v567, %v565
  %v740 = vpack.c.b16 %v568, %v566
  %v741 = vpack.c.b16 %v571, %v569
  %v742 = vpack.c.b16 %v572, %v570
  %v743 = vpack.c.b16 %v575, %v573
  %v744 = vpack.c.b16 %v576, %v574
  %v745 = vpack.c.b16 %v579, %v577
  %v746 = vpack.c.b16 %v580, %v578
  %v747 = vpack.c.b16 %v583, %v581
  %v748 = vpack.c.b16 %v584, %v582
  %v749 = vpack.c.b16 %v587, %v585
  %v750 = vpack.c.b16 %v588, %v586
  %v751 = vpack.c.b16 %v591, %v589
  %v752 = vpack.c.b16 %v592, %v590
  %v753 = vpack.c.b16 %v595, %v593
  %v754 = vpack.c.b16 %v596, %v594
  %v755 = vpack.c.b16 %v599, %v597
  %v756 = vpack.c.b16 %v600, %v598
  %v757 = vpack.c.b16 %v603, %v601
  %v758 = vpack.c.b16 %v604, %v602
  %v759 = vpack.c.b16 %v607, %v605
  %v760 = vpack.c.b16 %v608, %v606
  %v761 = vpack.c.b16 %v611, %v609
  %v762 = vpack.c.b16 %v612, %v610
  %v763 = vpack.c.b16 %v615, %v613
  %v764 = vpack.c.b16 %v616, %v614
  %v765 = vpack.c.b16 %v619, %v617
  %v766 = vpack.c.b16 %v620, %v618
  %v767 = vpack.c.b16 %v623, %v621
  %v768 = vpack.c.b16 %v624, %v622
  %v769 = vpack.c.b16 %v627, %v625
  %v770 = vpack.c.b16 %v628, %v626
  %v771 = vpack.c.b16 %v631, %v629
  %v772 = vpack.c.b16 %v632, %v630
  %v773 = vpack.c.b16 %v635, %v633
  %v774 = vpack.c.b16 %v636, %v634
  %v775 = vpack.c.b16 %v639, %v637
  %v776 = vpack.c.b16 %v640, %v638
  %v777 = vpack.c.b16 %v643, %v641
  %v778 = vpack.c.b16 %v644, %v642
  %v779 = vpack.c.b16 %v647, %v645
  %v780 = vpack.c.b16 %v648, %v646
  %v781 = vpack.c.b16 %v651, %v649
  %v782 = vpack.c.b16 %v652, %v650
  %v783 = vpack.c.b16 %v655, %v653
  %v784 = vpack.c.b16 %v656, %v654
  %913 = vmatprep.subr.bf16.mxu0 %v672
  %914 = vmatpush1.bf16.msra.mxu0 %v671
  %915 = vmatprep.subr.bf16.mxu0 %v670
  %916 = vmatpush1.bf16.msra.mxu0 %v669
  %917 = vmatprep.subr.bf16.mxu0 %v668
  %918 = vmatpush1.bf16.msra.mxu0 %v667
  %919 = vmatprep.subr.bf16.mxu0 %v666
  %920 = vmatpush1.bf16.msra.mxu0 %v665
  %921 = vmatprep.subr.bf16.mxu0 %v664
  %922 = vmatpush1.bf16.msra.mxu0 %v663
  %923 = vmatprep.subr.bf16.mxu0 %v662
  %924 = vmatpush1.bf16.msra.mxu0 %v661
  %925 = vmatprep.subr.bf16.mxu0 %v660
  %926 = vmatpush1.bf16.msra.mxu0 %v659
  %927 = vmatprep.subr.bf16.mxu0 %v658
  %928 = vmatpush1.bf16.msra.mxu0 %v657
  %929 = vmatprep.subr.bf16.mxu0 %v688
  %930 = vmatpush2.bf16.msra.mxu0 %v687
  %931 = vmatprep.subr.bf16.mxu0 %v686
  %932 = vmatpush2.bf16.msra.mxu0 %v685
  %933 = vmatprep.subr.bf16.mxu0 %v684
  %934 = vmatpush2.bf16.msra.mxu0 %v683
  %935 = vmatprep.subr.bf16.mxu0 %v682
  %936 = vmatpush2.bf16.msra.mxu0 %v681
  %937 = vmatprep.subr.bf16.mxu0 %v680
  %938 = vmatpush2.bf16.msra.mxu0 %v679
  %939 = vmatprep.subr.bf16.mxu0 %v678
  %940 = vmatpush2.bf16.msra.mxu0 %v677
  %941 = vmatprep.subr.bf16.mxu0 %v676
  %942 = vmatpush2.bf16.msra.mxu0 %v675
  %943 = vmatprep.subr.bf16.mxu0 %v674
  %944 = vmatpush2.bf16.msra.mxu0 %v673
  %945 = vmatprep.mubr.bf16.mxu0 %v253
  %946 = vmatmul.mubr.bf16.gmra.mxu0 %v239
  %v947 = vpop.f32.mrf.mxu0
  %v948 = vadd.f32 0.0, %v947
  %v949 = vpop.f32.mrf.mxu0
  %v950 = vadd.f32 0.0, %v949
  %v951 = vpop.f32.mrf.mxu0
  %v952 = vpop.f32.mrf.mxu0
  %953 = vdwg.mxu0
  %954 = vmatprep.subr.bf16.mxu0 %v704
  %955 = vmatpush1.bf16.msra.mxu0 %v703
  %956 = vmatprep.subr.bf16.mxu0 %v702
  %957 = vmatpush1.bf16.msra.mxu0 %v701
  %958 = vmatprep.subr.bf16.mxu0 %v700
  %959 = vmatpush1.bf16.msra.mxu0 %v699
  %960 = vmatprep.subr.bf16.mxu0 %v698
  %961 = vmatpush1.bf16.msra.mxu0 %v697
  %962 = vmatprep.subr.bf16.mxu0 %v696
  %963 = vmatpush1.bf16.msra.mxu0 %v695
  %964 = vmatprep.subr.bf16.mxu0 %v694
  %965 = vmatpush1.bf16.msra.mxu0 %v693
  %966 = vmatprep.subr.bf16.mxu0 %v692
  %967 = vmatpush1.bf16.msra.mxu0 %v691
  %968 = vmatprep.subr.bf16.mxu0 %v690
  %969 = vmatpush1.bf16.msra.mxu0 %v689
  %970 = vmatprep.subr.bf16.mxu0 %v720
  %971 = vmatpush2.bf16.msra.mxu0 %v719
  %972 = vmatprep.subr.bf16.mxu0 %v718
  %973 = vmatpush2.bf16.msra.mxu0 %v717
  %974 = vmatprep.subr.bf16.mxu0 %v716
  %975 = vmatpush2.bf16.msra.mxu0 %v715
  %976 = vmatprep.subr.bf16.mxu0 %v714
  %977 = vmatpush2.bf16.msra.mxu0 %v713
  %978 = vmatprep.subr.bf16.mxu0 %v712
  %979 = vmatpush2.bf16.msra.mxu0 %v711
  %980 = vmatprep.subr.bf16.mxu0 %v710
  %981 = vmatpush2.bf16.msra.mxu0 %v709
  %982 = vmatprep.subr.bf16.mxu0 %v708
  %983 = vmatpush2.bf16.msra.mxu0 %v707
  %984 = vmatprep.subr.bf16.mxu0 %v706
  %985 = vmatpush2.bf16.msra.mxu0 %v705
  %986 = vmatprep.mubr.bf16.mxu0 %v263
  %987 = vmatmul.mubr.bf16.gmra.mxu0 %v261
  %v988 = vpop.f32.mrf.mxu0
  %v989 = vadd.f32 %v948, %v988
  %v990 = vpop.f32.mrf.mxu0
  %v991 = vadd.f32 %v950, %v990
  %v992 = vpop.f32.mrf.mxu0
  %v993 = vpop.f32.mrf.mxu0
  %994 = vdwg.mxu0
  %995 = vmatprep.subr.bf16.mxu0 %v736
  %996 = vmatpush1.bf16.msra.mxu0 %v735
  %997 = vmatprep.subr.bf16.mxu0 %v734
  %998 = vmatpush1.bf16.msra.mxu0 %v733
  %999 = vmatprep.subr.bf16.mxu0 %v732
  %1000 = vmatpush1.bf16.msra.mxu0 %v731
  %1001 = vmatprep.subr.bf16.mxu0 %v730
  %1002 = vmatpush1.bf16.msra.mxu0 %v729
  %1003 = vmatprep.subr.bf16.mxu0 %v728
  %1004 = vmatpush1.bf16.msra.mxu0 %v727
  %1005 = vmatprep.subr.bf16.mxu0 %v726
  %1006 = vmatpush1.bf16.msra.mxu0 %v725
  %1007 = vmatprep.subr.bf16.mxu0 %v724
  %1008 = vmatpush1.bf16.msra.mxu0 %v723
  %1009 = vmatprep.subr.bf16.mxu0 %v722
  %1010 = vmatpush1.bf16.msra.mxu0 %v721
  %1011 = vmatprep.subr.bf16.mxu0 %v752
  %1012 = vmatpush2.bf16.msra.mxu0 %v751
  %1013 = vmatprep.subr.bf16.mxu0 %v750
  %1014 = vmatpush2.bf16.msra.mxu0 %v749
  %1015 = vmatprep.subr.bf16.mxu0 %v748
  %1016 = vmatpush2.bf16.msra.mxu0 %v747
  %1017 = vmatprep.subr.bf16.mxu0 %v746
  %1018 = vmatpush2.bf16.msra.mxu0 %v745
  %1019 = vmatprep.subr.bf16.mxu0 %v744
  %1020 = vmatpush2.bf16.msra.mxu0 %v743
  %1021 = vmatprep.subr.bf16.mxu0 %v742
  %1022 = vmatpush2.bf16.msra.mxu0 %v741
  %1023 = vmatprep.subr.bf16.mxu0 %v740
  %1024 = vmatpush2.bf16.msra.mxu0 %v739
  %1025 = vmatprep.subr.bf16.mxu0 %v738
  %1026 = vmatpush2.bf16.msra.mxu0 %v737
  %1027 = vmatprep.mubr.bf16.mxu0 %v260
  %1028 = vmatmul.mubr.bf16.gmra.mxu0 %v246
  %v1029 = vpop.f32.mrf.mxu0
  %v1030 = vadd.f32 %v989, %v1029
  %v1031 = vpop.f32.mrf.mxu0
  %v1032 = vadd.f32 %v991, %v1031
  %v1033 = vpop.f32.mrf.mxu0
  %v1034 = vpop.f32.mrf.mxu0
  %1035 = vdwg.mxu0
  %1036 = vmatprep.subr.bf16.mxu0 %v768
  %1037 = vmatpush1.bf16.msra.mxu0 %v767
  %1038 = vmatprep.subr.bf16.mxu0 %v766
  %1039 = vmatpush1.bf16.msra.mxu0 %v765
  %1040 = vmatprep.subr.bf16.mxu0 %v764
  %1041 = vmatpush1.bf16.msra.mxu0 %v763
  %1042 = vmatprep.subr.bf16.mxu0 %v762
  %1043 = vmatpush1.bf16.msra.mxu0 %v761
  %1044 = vmatprep.subr.bf16.mxu0 %v760
  %1045 = vmatpush1.bf16.msra.mxu0 %v759
  %1046 = vmatprep.subr.bf16.mxu0 %v758
  %1047 = vmatpush1.bf16.msra.mxu0 %v757
  %1048 = vmatprep.subr.bf16.mxu0 %v756
  %1049 = vmatpush1.bf16.msra.mxu0 %v755
  %1050 = vmatprep.subr.bf16.mxu0 %v754
  %1051 = vmatpush1.bf16.msra.mxu0 %v753
  %1052 = vmatprep.subr.bf16.mxu0 %v784
  %1053 = vmatpush2.bf16.msra.mxu0 %v783
  %1054 = vmatprep.subr.bf16.mxu0 %v782
  %1055 = vmatpush2.bf16.msra.mxu0 %v781
  %1056 = vmatprep.subr.bf16.mxu0 %v780
  %1057 = vmatpush2.bf16.msra.mxu0 %v779
  %1058 = vmatprep.subr.bf16.mxu0 %v778
  %1059 = vmatpush2.bf16.msra.mxu0 %v777
  %1060 = vmatprep.subr.bf16.mxu0 %v776
  %1061 = vmatpush2.bf16.msra.mxu0 %v775
  %1062 = vmatprep.subr.bf16.mxu0 %v774
  %1063 = vmatpush2.bf16.msra.mxu0 %v773
  %1064 = vmatprep.subr.bf16.mxu0 %v772
  %1065 = vmatpush2.bf16.msra.mxu0 %v771
  %1066 = vmatprep.subr.bf16.mxu0 %v770
  %1067 = vmatpush2.bf16.msra.mxu0 %v769
  %1068 = vmatprep.mubr.bf16.mxu0 %v264
  %1069 = vmatmul.mubr.bf16.gmra.mxu0 %v262
  %v1070 = vpop.f32.mrf.mxu0
  %v1071 = vadd.f32 %v1030, %v1070
  %v1072 = vpop.f32.mrf.mxu0
  %v1073 = vadd.f32 %v1032, %v1072
  %v1074 = vpop.f32.mrf.mxu0
  %v1075 = vpop.f32.mrf.mxu0
  %1076 = vdwg.mxu0
  %1077 = vmatprep.subr.mxu0 %v53
  %1078 = vmatpush1.msra.mxu0 %v52
  %1079 = vmatprep.subr.mxu0 %v51
  %1080 = vmatpush1.msra.mxu0 %v50
  %1081 = vmatprep.subr.mxu0 %v49
  %1082 = vmatpush1.msra.mxu0 %v48
  %1083 = vmatprep.subr.mxu0 %v47
  %1084 = vmatpush1.msra.mxu0 %v46
  %1085 = vmatprep.subr.mxu0 %v45
  %1086 = vmatpush1.msra.mxu0 %v44
  %1087 = vmatprep.subr.mxu0 %v43
  %1088 = vmatpush1.msra.mxu0 %v42
  %1089 = vmatprep.subr.mxu0 %v41
  %1090 = vmatpush1.msra.mxu0 %v40
  %1091 = vmatprep.subr.mxu0 %v39
  %1092 = vmatpush1.msra.mxu0 %v38
  %1093 = vmatprep.subr.mxu0 %v37
  %1094 = vmatpush1.msra.mxu0 %v36
  %1095 = vmatprep.subr.mxu0 %v35
  %1096 = vmatpush1.msra.mxu0 %v34
  %1097 = vmatprep.subr.mxu0 %v33
  %1098 = vmatpush1.msra.mxu0 %v32
  %1099 = vmatprep.subr.mxu0 %v31
  %1100 = vmatpush1.msra.mxu0 %v30
  %1101 = vmatprep.subr.mxu0 %v29
  %1102 = vmatpush1.msra.mxu0 %v28
  %1103 = vmatprep.subr.mxu0 %v27
  %1104 = vmatpush1.msra.mxu0 %v26
  %1105 = vmatprep.subr.mxu0 %v25
  %1106 = vmatpush1.msra.mxu0 %v24
  %1107 = vmatprep.subr.mxu0 %v23
  %1108 = vmatpush1.msra.mxu0 %v22
  %1109 = vmatprep.subr.mxu0 %v85
  %1110 = vmatpush2.msra.mxu0 %v84
  %1111 = vmatprep.subr.mxu0 %v83
  %1112 = vmatpush2.msra.mxu0 %v82
  %1113 = vmatprep.subr.mxu0 %v81
  %1114 = vmatpush2.msra.mxu0 %v80
  %1115 = vmatprep.subr.mxu0 %v79
  %1116 = vmatpush2.msra.mxu0 %v78
  %1117 = vmatprep.subr.mxu0 %v77
  %1118 = vmatpush2.msra.mxu0 %v76
  %1119 = vmatprep.subr.mxu0 %v75
  %1120 = vmatpush2.msra.mxu0 %v74
  %1121 = vmatprep.subr.mxu0 %v73
  %1122 = vmatpush2.msra.mxu0 %v72
  %1123 = vmatprep.subr.mxu0 %v71
  %1124 = vmatpush2.msra.mxu0 %v70
  %1125 = vmatprep.subr.mxu0 %v69
  %1126 = vmatpush2.msra.mxu0 %v68
  %1127 = vmatprep.subr.mxu0 %v67
  %1128 = vmatpush2.msra.mxu0 %v66
  %1129 = vmatprep.subr.mxu0 %v65
  %1130 = vmatpush2.msra.mxu0 %v64
  %1131 = vmatprep.subr.mxu0 %v63
  %1132 = vmatpush2.msra.mxu0 %v62
  %1133 = vmatprep.subr.mxu0 %v61
  %1134 = vmatpush2.msra.mxu0 %v60
  %1135 = vmatprep.subr.mxu0 %v59
  %1136 = vmatpush2.msra.mxu0 %v58
  %1137 = vmatprep.subr.mxu0 %v57
  %1138 = vmatpush2.msra.mxu0 %v56
  %1139 = vmatprep.subr.mxu0 %v55
  %1140 = vmatpush2.msra.mxu0 %v54
  %1141 = vmatprep.mubr.f32.mxu0 %v1073
  %1142 = vmatmul.mubr.f32.gmra.mxu0 %v1071
  %v1143 = vpop.f32.mrf.mxu0
  %v1144 = vadd.f32 0.0, %v1143
  %v1145 = vpop.f32.mrf.mxu0
  %v1146 = vadd.f32 0.0, %v1145
  %1147 = vdwg.mxu0
  %v1148 = vmul.f32 %v1144, 0.125
  %v1149 = vmul.f32 %v1146, 0.125
  %v1150 = vsub.f32 %v1071, %v1148
  %v1151 = vsub.f32 %v1073, %v1149
  %v1152 = vmul.f32 %v1150, %v1150
  %v1153 = vmul.f32 %v1151, %v1151
  %1154 = vmatprep.subr.mxu0 %v53
  %1155 = vmatpush1.msra.mxu0 %v52
  %1156 = vmatprep.subr.mxu0 %v51
  %1157 = vmatpush1.msra.mxu0 %v50
  %1158 = vmatprep.subr.mxu0 %v49
  %1159 = vmatpush1.msra.mxu0 %v48
  %1160 = vmatprep.subr.mxu0 %v47
  %1161 = vmatpush1.msra.mxu0 %v46
  %1162 = vmatprep.subr.mxu0 %v45
  %1163 = vmatpush1.msra.mxu0 %v44
  %1164 = vmatprep.subr.mxu0 %v43
  %1165 = vmatpush1.msra.mxu0 %v42
  %1166 = vmatprep.subr.mxu0 %v41
  %1167 = vmatpush1.msra.mxu0 %v40
  %1168 = vmatprep.subr.mxu0 %v39
  %1169 = vmatpush1.msra.mxu0 %v38
  %1170 = vmatprep.subr.mxu0 %v37
  %1171 = vmatpush1.msra.mxu0 %v36
  %1172 = vmatprep.subr.mxu0 %v35
  %1173 = vmatpush1.msra.mxu0 %v34
  %1174 = vmatprep.subr.mxu0 %v33
  %1175 = vmatpush1.msra.mxu0 %v32
  %1176 = vmatprep.subr.mxu0 %v31
  %1177 = vmatpush1.msra.mxu0 %v30
  %1178 = vmatprep.subr.mxu0 %v29
  %1179 = vmatpush1.msra.mxu0 %v28
  %1180 = vmatprep.subr.mxu0 %v27
  %1181 = vmatpush1.msra.mxu0 %v26
  %1182 = vmatprep.subr.mxu0 %v25
  %1183 = vmatpush1.msra.mxu0 %v24
  %1184 = vmatprep.subr.mxu0 %v23
  %1185 = vmatpush1.msra.mxu0 %v22
  %1186 = vmatprep.subr.mxu0 %v85
  %1187 = vmatpush2.msra.mxu0 %v84
  %1188 = vmatprep.subr.mxu0 %v83
  %1189 = vmatpush2.msra.mxu0 %v82
  %1190 = vmatprep.subr.mxu0 %v81
  %1191 = vmatpush2.msra.mxu0 %v80
  %1192 = vmatprep.subr.mxu0 %v79
  %1193 = vmatpush2.msra.mxu0 %v78
  %1194 = vmatprep.subr.mxu0 %v77
  %1195 = vmatpush2.msra.mxu0 %v76
  %1196 = vmatprep.subr.mxu0 %v75
  %1197 = vmatpush2.msra.mxu0 %v74
  %1198 = vmatprep.subr.mxu0 %v73
  %1199 = vmatpush2.msra.mxu0 %v72
  %1200 = vmatprep.subr.mxu0 %v71
  %1201 = vmatpush2.msra.mxu0 %v70
  %1202 = vmatprep.subr.mxu0 %v69
  %1203 = vmatpush2.msra.mxu0 %v68
  %1204 = vmatprep.subr.mxu0 %v67
  %1205 = vmatpush2.msra.mxu0 %v66
  %1206 = vmatprep.subr.mxu0 %v65
  %1207 = vmatpush2.msra.mxu0 %v64
  %1208 = vmatprep.subr.mxu0 %v63
  %1209 = vmatpush2.msra.mxu0 %v62
  %1210 = vmatprep.subr.mxu0 %v61
  %1211 = vmatpush2.msra.mxu0 %v60
  %1212 = vmatprep.subr.mxu0 %v59
  %1213 = vmatpush2.msra.mxu0 %v58
  %1214 = vmatprep.subr.mxu0 %v57
  %1215 = vmatpush2.msra.mxu0 %v56
  %1216 = vmatprep.subr.mxu0 %v55
  %1217 = vmatpush2.msra.mxu0 %v54
  %1218 = vmatprep.mubr.f32.mxu0 %v1153
  %1219 = vmatmul.mubr.f32.gmra.mxu0 %v1152
  %v1220 = vpop.f32.mrf.mxu0
  %v1221 = vadd.f32 0.0, %v1220
  %v1222 = vpop.f32.mrf.mxu0
  %v1223 = vadd.f32 0.0, %v1222
  %1224 = vdwg.mxu0
  %v1225 = vmul.f32 %v1221, 0.125
  %v1226 = vmul.f32 %v1223, 0.125
  %v1227 = vadd.f32 %v1225, 1e-05
  %v1228 = vadd.f32 %v1226, 1e-05
  %v1229 = vrsqrt.pop %v1227
  %v1230 = vrsqrt.pop %v1228
  %v1231 = vmul.f32 %v1150, %v1229
  %v1232 = vmul.f32 %v1151, %v1230
  %v1233 = vmax.f32 %v1231, 0.0
  %v1234 = vmax.f32 %v1232, 0.0
  %v1235 = vpack.c.bf16 %v1233, %v1233
  %v1236 = vpack.c.bf16 %v1234, %v1234
  %v1237 = vld [vmem:[%s2] sm:$0xff]
  %v1238 = vld [vmem:[%s2 + $0x8] sm:$0xff]
  %v1239 = vld [vmem:[%s2 + $0x10] sm:$0xff]
  %v1240 = vld [vmem:[%s2 + $0x18] sm:$0xff]
  %v1241 = vld [vmem:[%s2 + $0x20] sm:$0xff]
  %v1242 = vld [vmem:[%s2 + $0x28] sm:$0xff]
  %v1243 = vld [vmem:[%s2 + $0x30] sm:$0xff]
  %v1244 = vld [vmem:[%s2 + $0x38] sm:$0xff]
  %v1245 = vld [vmem:[%s2 + $0x40] sm:$0xff]
  %v1246 = vld [vmem:[%s2 + $0x48] sm:$0xff]
  %v1247 = vld [vmem:[%s2 + $0x50] sm:$0xff]
  %v1248 = vld [vmem:[%s2 + $0x58] sm:$0xff]
  %v1249 = vld [vmem:[%s2 + $0x60] sm:$0xff]
  %v1250 = vld [vmem:[%s2 + $0x68] sm:$0xff]
  %v1251 = vld [vmem:[%s2 + $0x70] sm:$0xff]
  %v1252 = vld [vmem:[%s2 + $0x78] sm:$0xff]
  %v1253 = vld [vmem:[%s2 + $0x80] sm:$0xff]
  %v1254 = vld [vmem:[%s2 + $0x88] sm:$0xff]
  %v1255 = vld [vmem:[%s2 + $0x90] sm:$0xff]
  %v1256 = vld [vmem:[%s2 + $0x98] sm:$0xff]
  %v1257 = vld [vmem:[%s2 + $0xa0] sm:$0xff]
  %v1258 = vld [vmem:[%s2 + $0xa8] sm:$0xff]
  %v1259 = vld [vmem:[%s2 + $0xb0] sm:$0xff]
  %v1260 = vld [vmem:[%s2 + $0xb8] sm:$0xff]
  %v1261 = vld [vmem:[%s2 + $0xc0] sm:$0xff]
  %v1262 = vld [vmem:[%s2 + $0xc8] sm:$0xff]
  %v1263 = vld [vmem:[%s2 + $0xd0] sm:$0xff]
  %v1264 = vld [vmem:[%s2 + $0xd8] sm:$0xff]
  %v1265 = vld [vmem:[%s2 + $0xe0] sm:$0xff]
  %v1266 = vld [vmem:[%s2 + $0xe8] sm:$0xff]
  %v1267 = vld [vmem:[%s2 + $0xf0] sm:$0xff]
  %v1268 = vld [vmem:[%s2 + $0xf8] sm:$0xff]
  %v1301 = vunpack.c.l.b16 %v1237
  %v1302 = vunpack.c.h.b16 %v1237
  %v1303 = vunpack.c.l.b16 %v1238
  %v1304 = vunpack.c.h.b16 %v1238
  %v1305 = vunpack.c.l.b16 %v1239
  %v1306 = vunpack.c.h.b16 %v1239
  %v1307 = vunpack.c.l.b16 %v1240
  %v1308 = vunpack.c.h.b16 %v1240
  %v1309 = vunpack.c.l.b16 %v1241
  %v1310 = vunpack.c.h.b16 %v1241
  %v1311 = vunpack.c.l.b16 %v1242
  %v1312 = vunpack.c.h.b16 %v1242
  %v1313 = vunpack.c.l.b16 %v1243
  %v1314 = vunpack.c.h.b16 %v1243
  %v1315 = vunpack.c.l.b16 %v1244
  %v1316 = vunpack.c.h.b16 %v1244
  %v1317 = vunpack.c.l.b16 %v1245
  %v1318 = vunpack.c.h.b16 %v1245
  %v1319 = vunpack.c.l.b16 %v1246
  %v1320 = vunpack.c.h.b16 %v1246
  %v1321 = vunpack.c.l.b16 %v1247
  %v1322 = vunpack.c.h.b16 %v1247
  %v1323 = vunpack.c.l.b16 %v1248
  %v1324 = vunpack.c.h.b16 %v1248
  %v1325 = vunpack.c.l.b16 %v1249
  %v1326 = vunpack.c.h.b16 %v1249
  %v1327 = vunpack.c.l.b16 %v1250
  %v1328 = vunpack.c.h.b16 %v1250
  %v1329 = vunpack.c.l.b16 %v1251
  %v1330 = vunpack.c.h.b16 %v1251
  %v1331 = vunpack.c.l.b16 %v1252
  %v1332 = vunpack.c.h.b16 %v1252
  %v1333 = vunpack.c.l.b16 %v1253
  %v1334 = vunpack.c.h.b16 %v1253
  %v1335 = vunpack.c.l.b16 %v1254
  %v1336 = vunpack.c.h.b16 %v1254
  %v1337 = vunpack.c.l.b16 %v1255
  %v1338 = vunpack.c.h.b16 %v1255
  %v1339 = vunpack.c.l.b16 %v1256
  %v1340 = vunpack.c.h.b16 %v1256
  %v1341 = vunpack.c.l.b16 %v1257
  %v1342 = vunpack.c.h.b16 %v1257
  %v1343 = vunpack.c.l.b16 %v1258
  %v1344 = vunpack.c.h.b16 %v1258
  %v1345 = vunpack.c.l.b16 %v1259
  %v1346 = vunpack.c.h.b16 %v1259
  %v1347 = vunpack.c.l.b16 %v1260
  %v1348 = vunpack.c.h.b16 %v1260
  %v1349 = vunpack.c.l.b16 %v1261
  %v1350 = vunpack.c.h.b16 %v1261
  %v1351 = vunpack.c.l.b16 %v1262
  %v1352 = vunpack.c.h.b16 %v1262
  %v1353 = vunpack.c.l.b16 %v1263
  %v1354 = vunpack.c.h.b16 %v1263
  %v1355 = vunpack.c.l.b16 %v1264
  %v1356 = vunpack.c.h.b16 %v1264
  %v1357 = vunpack.c.l.b16 %v1265
  %v1358 = vunpack.c.h.b16 %v1265
  %v1359 = vunpack.c.l.b16 %v1266
  %v1360 = vunpack.c.h.b16 %v1266
  %v1361 = vunpack.c.l.b16 %v1267
  %v1362 = vunpack.c.h.b16 %v1267
  %v1363 = vunpack.c.l.b16 %v1268
  %v1364 = vunpack.c.h.b16 %v1268
  %v1365 = vpack.c.b16 %v1303, %v1301
  %v1366 = vpack.c.b16 %v1304, %v1302
  %v1367 = vpack.c.b16 %v1307, %v1305
  %v1368 = vpack.c.b16 %v1308, %v1306
  %v1369 = vpack.c.b16 %v1311, %v1309
  %v1370 = vpack.c.b16 %v1312, %v1310
  %v1371 = vpack.c.b16 %v1315, %v1313
  %v1372 = vpack.c.b16 %v1316, %v1314
  %v1373 = vpack.c.b16 %v1319, %v1317
  %v1374 = vpack.c.b16 %v1320, %v1318
  %v1375 = vpack.c.b16 %v1323, %v1321
  %v1376 = vpack.c.b16 %v1324, %v1322
  %v1377 = vpack.c.b16 %v1327, %v1325
  %v1378 = vpack.c.b16 %v1328, %v1326
  %v1379 = vpack.c.b16 %v1331, %v1329
  %v1380 = vpack.c.b16 %v1332, %v1330
  %v1381 = vpack.c.b16 %v1335, %v1333
  %v1382 = vpack.c.b16 %v1336, %v1334
  %v1383 = vpack.c.b16 %v1339, %v1337
  %v1384 = vpack.c.b16 %v1340, %v1338
  %v1385 = vpack.c.b16 %v1343, %v1341
  %v1386 = vpack.c.b16 %v1344, %v1342
  %v1387 = vpack.c.b16 %v1347, %v1345
  %v1388 = vpack.c.b16 %v1348, %v1346
  %v1389 = vpack.c.b16 %v1351, %v1349
  %v1390 = vpack.c.b16 %v1352, %v1350
  %v1391 = vpack.c.b16 %v1355, %v1353
  %v1392 = vpack.c.b16 %v1356, %v1354
  %v1393 = vpack.c.b16 %v1359, %v1357
  %v1394 = vpack.c.b16 %v1360, %v1358
  %v1395 = vpack.c.b16 %v1363, %v1361
  %v1396 = vpack.c.b16 %v1364, %v1362
  %1429 = vmatprep.subr.bf16.mxu0 %v1380
  %1430 = vmatpush1.bf16.msra.mxu0 %v1379
  %1431 = vmatprep.subr.bf16.mxu0 %v1378
  %1432 = vmatpush1.bf16.msra.mxu0 %v1377
  %1433 = vmatprep.subr.bf16.mxu0 %v1376
  %1434 = vmatpush1.bf16.msra.mxu0 %v1375
  %1435 = vmatprep.subr.bf16.mxu0 %v1374
  %1436 = vmatpush1.bf16.msra.mxu0 %v1373
  %1437 = vmatprep.subr.bf16.mxu0 %v1372
  %1438 = vmatpush1.bf16.msra.mxu0 %v1371
  %1439 = vmatprep.subr.bf16.mxu0 %v1370
  %1440 = vmatpush1.bf16.msra.mxu0 %v1369
  %1441 = vmatprep.subr.bf16.mxu0 %v1368
  %1442 = vmatpush1.bf16.msra.mxu0 %v1367
  %1443 = vmatprep.subr.bf16.mxu0 %v1366
  %1444 = vmatpush1.bf16.msra.mxu0 %v1365
  %1445 = vmatprep.subr.bf16.mxu0 %v1396
  %1446 = vmatpush2.bf16.msra.mxu0 %v1395
  %1447 = vmatprep.subr.bf16.mxu0 %v1394
  %1448 = vmatpush2.bf16.msra.mxu0 %v1393
  %1449 = vmatprep.subr.bf16.mxu0 %v1392
  %1450 = vmatpush2.bf16.msra.mxu0 %v1391
  %1451 = vmatprep.subr.bf16.mxu0 %v1390
  %1452 = vmatpush2.bf16.msra.mxu0 %v1389
  %1453 = vmatprep.subr.bf16.mxu0 %v1388
  %1454 = vmatpush2.bf16.msra.mxu0 %v1387
  %1455 = vmatprep.subr.bf16.mxu0 %v1386
  %1456 = vmatpush2.bf16.msra.mxu0 %v1385
  %1457 = vmatprep.subr.bf16.mxu0 %v1384
  %1458 = vmatpush2.bf16.msra.mxu0 %v1383
  %1459 = vmatprep.subr.bf16.mxu0 %v1382
  %1460 = vmatpush2.bf16.msra.mxu0 %v1381
  %1461 = vmatprep.mubr.bf16.mxu0 %v1236
  %1462 = vmatmul.mubr.bf16.gmra.mxu0 %v1235
  %v1463 = vpop.f32.mrf.mxu0
  %v1464 = vadd.f32 0.0, %v1463
  %v1465 = vpop.f32.mrf.mxu0
  %v1466 = vadd.f32 0.0, %v1465
  %v1467 = vpop.f32.mrf.mxu0
  %v1468 = vpop.f32.mrf.mxu0
  %1469 = vdwg.mxu0
  %1470 = vmatprep.subr.mxu0 %v53
  %1471 = vmatpush1.msra.mxu0 %v52
  %1472 = vmatprep.subr.mxu0 %v51
  %1473 = vmatpush1.msra.mxu0 %v50
  %1474 = vmatprep.subr.mxu0 %v49
  %1475 = vmatpush1.msra.mxu0 %v48
  %1476 = vmatprep.subr.mxu0 %v47
  %1477 = vmatpush1.msra.mxu0 %v46
  %1478 = vmatprep.subr.mxu0 %v45
  %1479 = vmatpush1.msra.mxu0 %v44
  %1480 = vmatprep.subr.mxu0 %v43
  %1481 = vmatpush1.msra.mxu0 %v42
  %1482 = vmatprep.subr.mxu0 %v41
  %1483 = vmatpush1.msra.mxu0 %v40
  %1484 = vmatprep.subr.mxu0 %v39
  %1485 = vmatpush1.msra.mxu0 %v38
  %1486 = vmatprep.subr.mxu0 %v37
  %1487 = vmatpush1.msra.mxu0 %v36
  %1488 = vmatprep.subr.mxu0 %v35
  %1489 = vmatpush1.msra.mxu0 %v34
  %1490 = vmatprep.subr.mxu0 %v33
  %1491 = vmatpush1.msra.mxu0 %v32
  %1492 = vmatprep.subr.mxu0 %v31
  %1493 = vmatpush1.msra.mxu0 %v30
  %1494 = vmatprep.subr.mxu0 %v29
  %1495 = vmatpush1.msra.mxu0 %v28
  %1496 = vmatprep.subr.mxu0 %v27
  %1497 = vmatpush1.msra.mxu0 %v26
  %1498 = vmatprep.subr.mxu0 %v25
  %1499 = vmatpush1.msra.mxu0 %v24
  %1500 = vmatprep.subr.mxu0 %v23
  %1501 = vmatpush1.msra.mxu0 %v22
  %1502 = vmatprep.subr.mxu0 %v85
  %1503 = vmatpush2.msra.mxu0 %v84
  %1504 = vmatprep.subr.mxu0 %v83
  %1505 = vmatpush2.msra.mxu0 %v82
  %1506 = vmatprep.subr.mxu0 %v81
  %1507 = vmatpush2.msra.mxu0 %v80
  %1508 = vmatprep.subr.mxu0 %v79
  %1509 = vmatpush2.msra.mxu0 %v78
  %1510 = vmatprep.subr.mxu0 %v77
  %1511 = vmatpush2.msra.mxu0 %v76
  %1512 = vmatprep.subr.mxu0 %v75
  %1513 = vmatpush2.msra.mxu0 %v74
  %1514 = vmatprep.subr.mxu0 %v73
  %1515 = vmatpush2.msra.mxu0 %v72
  %1516 = vmatprep.subr.mxu0 %v71
  %1517 = vmatpush2.msra.mxu0 %v70
  %1518 = vmatprep.subr.mxu0 %v69
  %1519 = vmatpush2.msra.mxu0 %v68
  %1520 = vmatprep.subr.mxu0 %v67
  %1521 = vmatpush2.msra.mxu0 %v66
  %1522 = vmatprep.subr.mxu0 %v65
  %1523 = vmatpush2.msra.mxu0 %v64
  %1524 = vmatprep.subr.mxu0 %v63
  %1525 = vmatpush2.msra.mxu0 %v62
  %1526 = vmatprep.subr.mxu0 %v61
  %1527 = vmatpush2.msra.mxu0 %v60
  %1528 = vmatprep.subr.mxu0 %v59
  %1529 = vmatpush2.msra.mxu0 %v58
  %1530 = vmatprep.subr.mxu0 %v57
  %1531 = vmatpush2.msra.mxu0 %v56
  %1532 = vmatprep.subr.mxu0 %v55
  %1533 = vmatpush2.msra.mxu0 %v54
  %1534 = vmatprep.mubr.f32.mxu0 %v1466
  %1535 = vmatmul.mubr.f32.gmra.mxu0 %v1464
  %v1536 = vpop.f32.mrf.mxu0
  %v1537 = vadd.f32 0.0, %v1536
  %v1538 = vpop.f32.mrf.mxu0
  %v1539 = vadd.f32 0.0, %v1538
  %1540 = vdwg.mxu0
  %v1541 = vmul.f32 %v1537, 0.125
  %v1542 = vmul.f32 %v1539, 0.125
  %v1543 = vsub.f32 %v1464, %v1541
  %v1544 = vsub.f32 %v1466, %v1542
  %v1545 = vmul.f32 %v1543, %v1543
  %v1546 = vmul.f32 %v1544, %v1544
  %1547 = vmatprep.subr.mxu0 %v53
  %1548 = vmatpush1.msra.mxu0 %v52
  %1549 = vmatprep.subr.mxu0 %v51
  %1550 = vmatpush1.msra.mxu0 %v50
  %1551 = vmatprep.subr.mxu0 %v49
  %1552 = vmatpush1.msra.mxu0 %v48
  %1553 = vmatprep.subr.mxu0 %v47
  %1554 = vmatpush1.msra.mxu0 %v46
  %1555 = vmatprep.subr.mxu0 %v45
  %1556 = vmatpush1.msra.mxu0 %v44
  %1557 = vmatprep.subr.mxu0 %v43
  %1558 = vmatpush1.msra.mxu0 %v42
  %1559 = vmatprep.subr.mxu0 %v41
  %1560 = vmatpush1.msra.mxu0 %v40
  %1561 = vmatprep.subr.mxu0 %v39
  %1562 = vmatpush1.msra.mxu0 %v38
  %1563 = vmatprep.subr.mxu0 %v37
  %1564 = vmatpush1.msra.mxu0 %v36
  %1565 = vmatprep.subr.mxu0 %v35
  %1566 = vmatpush1.msra.mxu0 %v34
  %1567 = vmatprep.subr.mxu0 %v33
  %1568 = vmatpush1.msra.mxu0 %v32
  %1569 = vmatprep.subr.mxu0 %v31
  %1570 = vmatpush1.msra.mxu0 %v30
  %1571 = vmatprep.subr.mxu0 %v29
  %1572 = vmatpush1.msra.mxu0 %v28
  %1573 = vmatprep.subr.mxu0 %v27
  %1574 = vmatpush1.msra.mxu0 %v26
  %1575 = vmatprep.subr.mxu0 %v25
  %1576 = vmatpush1.msra.mxu0 %v24
  %1577 = vmatprep.subr.mxu0 %v23
  %1578 = vmatpush1.msra.mxu0 %v22
  %1579 = vmatprep.subr.mxu0 %v85
  %1580 = vmatpush2.msra.mxu0 %v84
  %1581 = vmatprep.subr.mxu0 %v83
  %1582 = vmatpush2.msra.mxu0 %v82
  %1583 = vmatprep.subr.mxu0 %v81
  %1584 = vmatpush2.msra.mxu0 %v80
  %1585 = vmatprep.subr.mxu0 %v79
  %1586 = vmatpush2.msra.mxu0 %v78
  %1587 = vmatprep.subr.mxu0 %v77
  %1588 = vmatpush2.msra.mxu0 %v76
  %1589 = vmatprep.subr.mxu0 %v75
  %1590 = vmatpush2.msra.mxu0 %v74
  %1591 = vmatprep.subr.mxu0 %v73
  %1592 = vmatpush2.msra.mxu0 %v72
  %1593 = vmatprep.subr.mxu0 %v71
  %1594 = vmatpush2.msra.mxu0 %v70
  %1595 = vmatprep.subr.mxu0 %v69
  %1596 = vmatpush2.msra.mxu0 %v68
  %1597 = vmatprep.subr.mxu0 %v67
  %1598 = vmatpush2.msra.mxu0 %v66
  %1599 = vmatprep.subr.mxu0 %v65
  %1600 = vmatpush2.msra.mxu0 %v64
  %1601 = vmatprep.subr.mxu0 %v63
  %1602 = vmatpush2.msra.mxu0 %v62
  %1603 = vmatprep.subr.mxu0 %v61
  %1604 = vmatpush2.msra.mxu0 %v60
  %1605 = vmatprep.subr.mxu0 %v59
  %1606 = vmatpush2.msra.mxu0 %v58
  %1607 = vmatprep.subr.mxu0 %v57
  %1608 = vmatpush2.msra.mxu0 %v56
  %1609 = vmatprep.subr.mxu0 %v55
  %1610 = vmatpush2.msra.mxu0 %v54
  %1611 = vmatprep.mubr.f32.mxu0 %v1546
  %1612 = vmatmul.mubr.f32.gmra.mxu0 %v1545
  %v1613 = vpop.f32.mrf.mxu0
  %v1614 = vadd.f32 0.0, %v1613
  %v1615 = vpop.f32.mrf.mxu0
  %v1616 = vadd.f32 0.0, %v1615
  %1617 = vdwg.mxu0
  %v1618 = vmul.f32 %v1614, 0.125
  %v1619 = vmul.f32 %v1616, 0.125
  %v1620 = vadd.f32 %v1618, 1e-05
  %v1621 = vadd.f32 %v1619, 1e-05
  %v1622 = vrsqrt.pop %v1620
  %v1623 = vrsqrt.pop %v1621
  %v1624 = vmul.f32 %v1543, %v1622
  %v1625 = vmul.f32 %v1544, %v1623
  %v1626 = vmax.f32 %v1624, 0.0
  %v1627 = vmax.f32 %v1625, 0.0
  %v1628 = vpack.c.bf16 %v1626, %v1626
  %v1629 = vpack.c.bf16 %v1627, %v1627
  %s1630 = scalar_lea.vmem %s2, 256
  %v1631 = vld [vmem:[%s1630] sm:$0xff]
  %v1632 = vld [vmem:[%s1630 + $0x8] sm:$0xff]
  %v1633 = vld [vmem:[%s1630 + $0x10] sm:$0xff]
  %v1634 = vld [vmem:[%s1630 + $0x18] sm:$0xff]
  %v1635 = vld [vmem:[%s1630 + $0x20] sm:$0xff]
  %v1636 = vld [vmem:[%s1630 + $0x28] sm:$0xff]
  %v1637 = vld [vmem:[%s1630 + $0x30] sm:$0xff]
  %v1638 = vld [vmem:[%s1630 + $0x38] sm:$0xff]
  %v1639 = vld [vmem:[%s1630 + $0x40] sm:$0xff]
  %v1640 = vld [vmem:[%s1630 + $0x48] sm:$0xff]
  %v1641 = vld [vmem:[%s1630 + $0x50] sm:$0xff]
  %v1642 = vld [vmem:[%s1630 + $0x58] sm:$0xff]
  %v1643 = vld [vmem:[%s1630 + $0x60] sm:$0xff]
  %v1644 = vld [vmem:[%s1630 + $0x68] sm:$0xff]
  %v1645 = vld [vmem:[%s1630 + $0x70] sm:$0xff]
  %v1646 = vld [vmem:[%s1630 + $0x78] sm:$0xff]
  %v1647 = vld [vmem:[%s1630 + $0x80] sm:$0xff]
  %v1648 = vld [vmem:[%s1630 + $0x88] sm:$0xff]
  %v1649 = vld [vmem:[%s1630 + $0x90] sm:$0xff]
  %v1650 = vld [vmem:[%s1630 + $0x98] sm:$0xff]
  %v1651 = vld [vmem:[%s1630 + $0xa0] sm:$0xff]
  %v1652 = vld [vmem:[%s1630 + $0xa8] sm:$0xff]
  %v1653 = vld [vmem:[%s1630 + $0xb0] sm:$0xff]
  %v1654 = vld [vmem:[%s1630 + $0xb8] sm:$0xff]
  %v1655 = vld [vmem:[%s1630 + $0xc0] sm:$0xff]
  %v1656 = vld [vmem:[%s1630 + $0xc8] sm:$0xff]
  %v1657 = vld [vmem:[%s1630 + $0xd0] sm:$0xff]
  %v1658 = vld [vmem:[%s1630 + $0xd8] sm:$0xff]
  %v1659 = vld [vmem:[%s1630 + $0xe0] sm:$0xff]
  %v1660 = vld [vmem:[%s1630 + $0xe8] sm:$0xff]
  %v1661 = vld [vmem:[%s1630 + $0xf0] sm:$0xff]
  %v1662 = vld [vmem:[%s1630 + $0xf8] sm:$0xff]
  %v1695 = vunpack.c.l.b16 %v1631
  %v1696 = vunpack.c.h.b16 %v1631
  %v1697 = vunpack.c.l.b16 %v1632
  %v1698 = vunpack.c.h.b16 %v1632
  %v1699 = vunpack.c.l.b16 %v1633
  %v1700 = vunpack.c.h.b16 %v1633
  %v1701 = vunpack.c.l.b16 %v1634
  %v1702 = vunpack.c.h.b16 %v1634
  %v1703 = vunpack.c.l.b16 %v1635
  %v1704 = vunpack.c.h.b16 %v1635
  %v1705 = vunpack.c.l.b16 %v1636
  %v1706 = vunpack.c.h.b16 %v1636
  %v1707 = vunpack.c.l.b16 %v1637
  %v1708 = vunpack.c.h.b16 %v1637
  %v1709 = vunpack.c.l.b16 %v1638
  %v1710 = vunpack.c.h.b16 %v1638
  %v1711 = vunpack.c.l.b16 %v1639
  %v1712 = vunpack.c.h.b16 %v1639
  %v1713 = vunpack.c.l.b16 %v1640
  %v1714 = vunpack.c.h.b16 %v1640
  %v1715 = vunpack.c.l.b16 %v1641
  %v1716 = vunpack.c.h.b16 %v1641
  %v1717 = vunpack.c.l.b16 %v1642
  %v1718 = vunpack.c.h.b16 %v1642
  %v1719 = vunpack.c.l.b16 %v1643
  %v1720 = vunpack.c.h.b16 %v1643
  %v1721 = vunpack.c.l.b16 %v1644
  %v1722 = vunpack.c.h.b16 %v1644
  %v1723 = vunpack.c.l.b16 %v1645
  %v1724 = vunpack.c.h.b16 %v1645
  %v1725 = vunpack.c.l.b16 %v1646
  %v1726 = vunpack.c.h.b16 %v1646
  %v1727 = vunpack.c.l.b16 %v1647
  %v1728 = vunpack.c.h.b16 %v1647
  %v1729 = vunpack.c.l.b16 %v1648
  %v1730 = vunpack.c.h.b16 %v1648
  %v1731 = vunpack.c.l.b16 %v1649
  %v1732 = vunpack.c.h.b16 %v1649
  %v1733 = vunpack.c.l.b16 %v1650
  %v1734 = vunpack.c.h.b16 %v1650
  %v1735 = vunpack.c.l.b16 %v1651
  %v1736 = vunpack.c.h.b16 %v1651
  %v1737 = vunpack.c.l.b16 %v1652
  %v1738 = vunpack.c.h.b16 %v1652
  %v1739 = vunpack.c.l.b16 %v1653
  %v1740 = vunpack.c.h.b16 %v1653
  %v1741 = vunpack.c.l.b16 %v1654
  %v1742 = vunpack.c.h.b16 %v1654
  %v1743 = vunpack.c.l.b16 %v1655
  %v1744 = vunpack.c.h.b16 %v1655
  %v1745 = vunpack.c.l.b16 %v1656
  %v1746 = vunpack.c.h.b16 %v1656
  %v1747 = vunpack.c.l.b16 %v1657
  %v1748 = vunpack.c.h.b16 %v1657
  %v1749 = vunpack.c.l.b16 %v1658
  %v1750 = vunpack.c.h.b16 %v1658
  %v1751 = vunpack.c.l.b16 %v1659
  %v1752 = vunpack.c.h.b16 %v1659
  %v1753 = vunpack.c.l.b16 %v1660
  %v1754 = vunpack.c.h.b16 %v1660
  %v1755 = vunpack.c.l.b16 %v1661
  %v1756 = vunpack.c.h.b16 %v1661
  %v1757 = vunpack.c.l.b16 %v1662
  %v1758 = vunpack.c.h.b16 %v1662
  %v1759 = vpack.c.b16 %v1697, %v1695
  %v1760 = vpack.c.b16 %v1698, %v1696
  %v1761 = vpack.c.b16 %v1701, %v1699
  %v1762 = vpack.c.b16 %v1702, %v1700
  %v1763 = vpack.c.b16 %v1705, %v1703
  %v1764 = vpack.c.b16 %v1706, %v1704
  %v1765 = vpack.c.b16 %v1709, %v1707
  %v1766 = vpack.c.b16 %v1710, %v1708
  %v1767 = vpack.c.b16 %v1713, %v1711
  %v1768 = vpack.c.b16 %v1714, %v1712
  %v1769 = vpack.c.b16 %v1717, %v1715
  %v1770 = vpack.c.b16 %v1718, %v1716
  %v1771 = vpack.c.b16 %v1721, %v1719
  %v1772 = vpack.c.b16 %v1722, %v1720
  %v1773 = vpack.c.b16 %v1725, %v1723
  %v1774 = vpack.c.b16 %v1726, %v1724
  %v1775 = vpack.c.b16 %v1729, %v1727
  %v1776 = vpack.c.b16 %v1730, %v1728
  %v1777 = vpack.c.b16 %v1733, %v1731
  %v1778 = vpack.c.b16 %v1734, %v1732
  %v1779 = vpack.c.b16 %v1737, %v1735
  %v1780 = vpack.c.b16 %v1738, %v1736
  %v1781 = vpack.c.b16 %v1741, %v1739
  %v1782 = vpack.c.b16 %v1742, %v1740
  %v1783 = vpack.c.b16 %v1745, %v1743
  %v1784 = vpack.c.b16 %v1746, %v1744
  %v1785 = vpack.c.b16 %v1749, %v1747
  %v1786 = vpack.c.b16 %v1750, %v1748
  %v1787 = vpack.c.b16 %v1753, %v1751
  %v1788 = vpack.c.b16 %v1754, %v1752
  %v1789 = vpack.c.b16 %v1757, %v1755
  %v1790 = vpack.c.b16 %v1758, %v1756
  %1823 = vmatprep.subr.bf16.mxu0 %v1774
  %1824 = vmatpush1.bf16.msra.mxu0 %v1773
  %1825 = vmatprep.subr.bf16.mxu0 %v1772
  %1826 = vmatpush1.bf16.msra.mxu0 %v1771
  %1827 = vmatprep.subr.bf16.mxu0 %v1770
  %1828 = vmatpush1.bf16.msra.mxu0 %v1769
  %1829 = vmatprep.subr.bf16.mxu0 %v1768
  %1830 = vmatpush1.bf16.msra.mxu0 %v1767
  %1831 = vmatprep.subr.bf16.mxu0 %v1766
  %1832 = vmatpush1.bf16.msra.mxu0 %v1765
  %1833 = vmatprep.subr.bf16.mxu0 %v1764
  %1834 = vmatpush1.bf16.msra.mxu0 %v1763
  %1835 = vmatprep.subr.bf16.mxu0 %v1762
  %1836 = vmatpush1.bf16.msra.mxu0 %v1761
  %1837 = vmatprep.subr.bf16.mxu0 %v1760
  %1838 = vmatpush1.bf16.msra.mxu0 %v1759
  %1839 = vmatprep.subr.bf16.mxu0 %v1790
  %1840 = vmatpush2.bf16.msra.mxu0 %v1789
  %1841 = vmatprep.subr.bf16.mxu0 %v1788
  %1842 = vmatpush2.bf16.msra.mxu0 %v1787
  %1843 = vmatprep.subr.bf16.mxu0 %v1786
  %1844 = vmatpush2.bf16.msra.mxu0 %v1785
  %1845 = vmatprep.subr.bf16.mxu0 %v1784
  %1846 = vmatpush2.bf16.msra.mxu0 %v1783
  %1847 = vmatprep.subr.bf16.mxu0 %v1782
  %1848 = vmatpush2.bf16.msra.mxu0 %v1781
  %1849 = vmatprep.subr.bf16.mxu0 %v1780
  %1850 = vmatpush2.bf16.msra.mxu0 %v1779
  %1851 = vmatprep.subr.bf16.mxu0 %v1778
  %1852 = vmatpush2.bf16.msra.mxu0 %v1777
  %1853 = vmatprep.subr.bf16.mxu0 %v1776
  %1854 = vmatpush2.bf16.msra.mxu0 %v1775
  %1855 = vmatprep.mubr.bf16.mxu0 %v1629
  %1856 = vmatmul.mubr.bf16.gmra.mxu0 %v1628
  %v1857 = vpop.f32.mrf.mxu0
  %v1858 = vadd.f32 0.0, %v1857
  %v1859 = vpop.f32.mrf.mxu0
  %v1860 = vadd.f32 0.0, %v1859
  %v1861 = vpop.f32.mrf.mxu0
  %v1862 = vpop.f32.mrf.mxu0
  %1863 = vdwg.mxu0
  %1864 = vmatprep.subr.mxu0 %v53
  %1865 = vmatpush1.msra.mxu0 %v52
  %1866 = vmatprep.subr.mxu0 %v51
  %1867 = vmatpush1.msra.mxu0 %v50
  %1868 = vmatprep.subr.mxu0 %v49
  %1869 = vmatpush1.msra.mxu0 %v48
  %1870 = vmatprep.subr.mxu0 %v47
  %1871 = vmatpush1.msra.mxu0 %v46
  %1872 = vmatprep.subr.mxu0 %v45
  %1873 = vmatpush1.msra.mxu0 %v44
  %1874 = vmatprep.subr.mxu0 %v43
  %1875 = vmatpush1.msra.mxu0 %v42
  %1876 = vmatprep.subr.mxu0 %v41
  %1877 = vmatpush1.msra.mxu0 %v40
  %1878 = vmatprep.subr.mxu0 %v39
  %1879 = vmatpush1.msra.mxu0 %v38
  %1880 = vmatprep.subr.mxu0 %v37
  %1881 = vmatpush1.msra.mxu0 %v36
  %1882 = vmatprep.subr.mxu0 %v35
  %1883 = vmatpush1.msra.mxu0 %v34
  %1884 = vmatprep.subr.mxu0 %v33
  %1885 = vmatpush1.msra.mxu0 %v32
  %1886 = vmatprep.subr.mxu0 %v31
  %1887 = vmatpush1.msra.mxu0 %v30
  %1888 = vmatprep.subr.mxu0 %v29
  %1889 = vmatpush1.msra.mxu0 %v28
  %1890 = vmatprep.subr.mxu0 %v27
  %1891 = vmatpush1.msra.mxu0 %v26
  %1892 = vmatprep.subr.mxu0 %v25
  %1893 = vmatpush1.msra.mxu0 %v24
  %1894 = vmatprep.subr.mxu0 %v23
  %1895 = vmatpush1.msra.mxu0 %v22
  %1896 = vmatprep.subr.mxu0 %v85
  %1897 = vmatpush2.msra.mxu0 %v84
  %1898 = vmatprep.subr.mxu0 %v83
  %1899 = vmatpush2.msra.mxu0 %v82
  %1900 = vmatprep.subr.mxu0 %v81
  %1901 = vmatpush2.msra.mxu0 %v80
  %1902 = vmatprep.subr.mxu0 %v79
  %1903 = vmatpush2.msra.mxu0 %v78
  %1904 = vmatprep.subr.mxu0 %v77
  %1905 = vmatpush2.msra.mxu0 %v76
  %1906 = vmatprep.subr.mxu0 %v75
  %1907 = vmatpush2.msra.mxu0 %v74
  %1908 = vmatprep.subr.mxu0 %v73
  %1909 = vmatpush2.msra.mxu0 %v72
  %1910 = vmatprep.subr.mxu0 %v71
  %1911 = vmatpush2.msra.mxu0 %v70
  %1912 = vmatprep.subr.mxu0 %v69
  %1913 = vmatpush2.msra.mxu0 %v68
  %1914 = vmatprep.subr.mxu0 %v67
  %1915 = vmatpush2.msra.mxu0 %v66
  %1916 = vmatprep.subr.mxu0 %v65
  %1917 = vmatpush2.msra.mxu0 %v64
  %1918 = vmatprep.subr.mxu0 %v63
  %1919 = vmatpush2.msra.mxu0 %v62
  %1920 = vmatprep.subr.mxu0 %v61
  %1921 = vmatpush2.msra.mxu0 %v60
  %1922 = vmatprep.subr.mxu0 %v59
  %1923 = vmatpush2.msra.mxu0 %v58
  %1924 = vmatprep.subr.mxu0 %v57
  %1925 = vmatpush2.msra.mxu0 %v56
  %1926 = vmatprep.subr.mxu0 %v55
  %1927 = vmatpush2.msra.mxu0 %v54
  %1928 = vmatprep.mubr.f32.mxu0 %v1860
  %1929 = vmatmul.mubr.f32.gmra.mxu0 %v1858
  %v1930 = vpop.f32.mrf.mxu0
  %v1931 = vadd.f32 0.0, %v1930
  %v1932 = vpop.f32.mrf.mxu0
  %v1933 = vadd.f32 0.0, %v1932
  %1934 = vdwg.mxu0
  %v1935 = vmul.f32 %v1931, 0.125
  %v1936 = vmul.f32 %v1933, 0.125
  %v1937 = vsub.f32 %v1858, %v1935
  %v1938 = vsub.f32 %v1860, %v1936
  %v1939 = vmul.f32 %v1937, %v1937
  %v1940 = vmul.f32 %v1938, %v1938
  %1941 = vmatprep.subr.mxu0 %v53
  %1942 = vmatpush1.msra.mxu0 %v52
  %1943 = vmatprep.subr.mxu0 %v51
  %1944 = vmatpush1.msra.mxu0 %v50
  %1945 = vmatprep.subr.mxu0 %v49
  %1946 = vmatpush1.msra.mxu0 %v48
  %1947 = vmatprep.subr.mxu0 %v47
  %1948 = vmatpush1.msra.mxu0 %v46
  %1949 = vmatprep.subr.mxu0 %v45
  %1950 = vmatpush1.msra.mxu0 %v44
  %1951 = vmatprep.subr.mxu0 %v43
  %1952 = vmatpush1.msra.mxu0 %v42
  %1953 = vmatprep.subr.mxu0 %v41
  %1954 = vmatpush1.msra.mxu0 %v40
  %1955 = vmatprep.subr.mxu0 %v39
  %1956 = vmatpush1.msra.mxu0 %v38
  %1957 = vmatprep.subr.mxu0 %v37
  %1958 = vmatpush1.msra.mxu0 %v36
  %1959 = vmatprep.subr.mxu0 %v35
  %1960 = vmatpush1.msra.mxu0 %v34
  %1961 = vmatprep.subr.mxu0 %v33
  %1962 = vmatpush1.msra.mxu0 %v32
  %1963 = vmatprep.subr.mxu0 %v31
  %1964 = vmatpush1.msra.mxu0 %v30
  %1965 = vmatprep.subr.mxu0 %v29
  %1966 = vmatpush1.msra.mxu0 %v28
  %1967 = vmatprep.subr.mxu0 %v27
  %1968 = vmatpush1.msra.mxu0 %v26
  %1969 = vmatprep.subr.mxu0 %v25
  %1970 = vmatpush1.msra.mxu0 %v24
  %1971 = vmatprep.subr.mxu0 %v23
  %1972 = vmatpush1.msra.mxu0 %v22
  %1973 = vmatprep.subr.mxu0 %v85
  %1974 = vmatpush2.msra.mxu0 %v84
  %1975 = vmatprep.subr.mxu0 %v83
  %1976 = vmatpush2.msra.mxu0 %v82
  %1977 = vmatprep.subr.mxu0 %v81
  %1978 = vmatpush2.msra.mxu0 %v80
  %1979 = vmatprep.subr.mxu0 %v79
  %1980 = vmatpush2.msra.mxu0 %v78
  %1981 = vmatprep.subr.mxu0 %v77
  %1982 = vmatpush2.msra.mxu0 %v76
  %1983 = vmatprep.subr.mxu0 %v75
  %1984 = vmatpush2.msra.mxu0 %v74
  %1985 = vmatprep.subr.mxu0 %v73
  %1986 = vmatpush2.msra.mxu0 %v72
  %1987 = vmatprep.subr.mxu0 %v71
  %1988 = vmatpush2.msra.mxu0 %v70
  %1989 = vmatprep.subr.mxu0 %v69
  %1990 = vmatpush2.msra.mxu0 %v68
  %1991 = vmatprep.subr.mxu0 %v67
  %1992 = vmatpush2.msra.mxu0 %v66
  %1993 = vmatprep.subr.mxu0 %v65
  %1994 = vmatpush2.msra.mxu0 %v64
  %1995 = vmatprep.subr.mxu0 %v63
  %1996 = vmatpush2.msra.mxu0 %v62
  %1997 = vmatprep.subr.mxu0 %v61
  %1998 = vmatpush2.msra.mxu0 %v60
  %1999 = vmatprep.subr.mxu0 %v59
  %2000 = vmatpush2.msra.mxu0 %v58
  %2001 = vmatprep.subr.mxu0 %v57
  %2002 = vmatpush2.msra.mxu0 %v56
  %2003 = vmatprep.subr.mxu0 %v55
  %2004 = vmatpush2.msra.mxu0 %v54
  %2005 = vmatprep.mubr.f32.mxu0 %v1940
  %2006 = vmatmul.mubr.f32.gmra.mxu0 %v1939
  %v2007 = vpop.f32.mrf.mxu0
  %v2008 = vadd.f32 0.0, %v2007
  %v2009 = vpop.f32.mrf.mxu0
  %v2010 = vadd.f32 0.0, %v2009
  %2011 = vdwg.mxu0
  %v2012 = vmul.f32 %v2008, 0.125
  %v2013 = vmul.f32 %v2010, 0.125
  %v2014 = vadd.f32 %v2012, 1e-05
  %v2015 = vadd.f32 %v2013, 1e-05
  %v2016 = vrsqrt.pop %v2014
  %v2017 = vrsqrt.pop %v2015
  %v2018 = vmul.f32 %v1937, %v2016
  %v2019 = vmul.f32 %v1938, %v2017
  %v2020 = vadd.f32 %v1233, %v2018
  %v2021 = vadd.f32 %v1234, %v2019
  %v2022 = vpack.c.bf16 %v2020, %v2020
  %v2023 = vpack.c.bf16 %v2021, %v2021
  %s2024 = scalar_lea.vmem %s2, 512
  %v2025 = vld [vmem:[%s2024] sm:$0xff]
  %v2026 = vld [vmem:[%s2024 + $0x8] sm:$0xff]
  %v2027 = vld [vmem:[%s2024 + $0x10] sm:$0xff]
  %v2028 = vld [vmem:[%s2024 + $0x18] sm:$0xff]
  %v2029 = vld [vmem:[%s2024 + $0x20] sm:$0xff]
  %v2030 = vld [vmem:[%s2024 + $0x28] sm:$0xff]
  %v2031 = vld [vmem:[%s2024 + $0x30] sm:$0xff]
  %v2032 = vld [vmem:[%s2024 + $0x38] sm:$0xff]
  %v2033 = vld [vmem:[%s2024 + $0x40] sm:$0xff]
  %v2034 = vld [vmem:[%s2024 + $0x48] sm:$0xff]
  %v2035 = vld [vmem:[%s2024 + $0x50] sm:$0xff]
  %v2036 = vld [vmem:[%s2024 + $0x58] sm:$0xff]
  %v2037 = vld [vmem:[%s2024 + $0x60] sm:$0xff]
  %v2038 = vld [vmem:[%s2024 + $0x68] sm:$0xff]
  %v2039 = vld [vmem:[%s2024 + $0x70] sm:$0xff]
  %v2040 = vld [vmem:[%s2024 + $0x78] sm:$0xff]
  %v2041 = vld [vmem:[%s2024 + $0x80] sm:$0xff]
  %v2042 = vld [vmem:[%s2024 + $0x88] sm:$0xff]
  %v2043 = vld [vmem:[%s2024 + $0x90] sm:$0xff]
  %v2044 = vld [vmem:[%s2024 + $0x98] sm:$0xff]
  %v2045 = vld [vmem:[%s2024 + $0xa0] sm:$0xff]
  %v2046 = vld [vmem:[%s2024 + $0xa8] sm:$0xff]
  %v2047 = vld [vmem:[%s2024 + $0xb0] sm:$0xff]
  %v2048 = vld [vmem:[%s2024 + $0xb8] sm:$0xff]
  %v2049 = vld [vmem:[%s2024 + $0xc0] sm:$0xff]
  %v2050 = vld [vmem:[%s2024 + $0xc8] sm:$0xff]
  %v2051 = vld [vmem:[%s2024 + $0xd0] sm:$0xff]
  %v2052 = vld [vmem:[%s2024 + $0xd8] sm:$0xff]
  %v2053 = vld [vmem:[%s2024 + $0xe0] sm:$0xff]
  %v2054 = vld [vmem:[%s2024 + $0xe8] sm:$0xff]
  %v2055 = vld [vmem:[%s2024 + $0xf0] sm:$0xff]
  %v2056 = vld [vmem:[%s2024 + $0xf8] sm:$0xff]
  %v2089 = vunpack.c.l.b16 %v2025
  %v2090 = vunpack.c.h.b16 %v2025
  %v2091 = vunpack.c.l.b16 %v2026
  %v2092 = vunpack.c.h.b16 %v2026
  %v2093 = vunpack.c.l.b16 %v2027
  %v2094 = vunpack.c.h.b16 %v2027
  %v2095 = vunpack.c.l.b16 %v2028
  %v2096 = vunpack.c.h.b16 %v2028
  %v2097 = vunpack.c.l.b16 %v2029
  %v2098 = vunpack.c.h.b16 %v2029
  %v2099 = vunpack.c.l.b16 %v2030
  %v2100 = vunpack.c.h.b16 %v2030
  %v2101 = vunpack.c.l.b16 %v2031
  %v2102 = vunpack.c.h.b16 %v2031
  %v2103 = vunpack.c.l.b16 %v2032
  %v2104 = vunpack.c.h.b16 %v2032
  %v2105 = vunpack.c.l.b16 %v2033
  %v2106 = vunpack.c.h.b16 %v2033
  %v2107 = vunpack.c.l.b16 %v2034
  %v2108 = vunpack.c.h.b16 %v2034
  %v2109 = vunpack.c.l.b16 %v2035
  %v2110 = vunpack.c.h.b16 %v2035
  %v2111 = vunpack.c.l.b16 %v2036
  %v2112 = vunpack.c.h.b16 %v2036
  %v2113 = vunpack.c.l.b16 %v2037
  %v2114 = vunpack.c.h.b16 %v2037
  %v2115 = vunpack.c.l.b16 %v2038
  %v2116 = vunpack.c.h.b16 %v2038
  %v2117 = vunpack.c.l.b16 %v2039
  %v2118 = vunpack.c.h.b16 %v2039
  %v2119 = vunpack.c.l.b16 %v2040
  %v2120 = vunpack.c.h.b16 %v2040
  %v2121 = vunpack.c.l.b16 %v2041
  %v2122 = vunpack.c.h.b16 %v2041
  %v2123 = vunpack.c.l.b16 %v2042
  %v2124 = vunpack.c.h.b16 %v2042
  %v2125 = vunpack.c.l.b16 %v2043
  %v2126 = vunpack.c.h.b16 %v2043
  %v2127 = vunpack.c.l.b16 %v2044
  %v2128 = vunpack.c.h.b16 %v2044
  %v2129 = vunpack.c.l.b16 %v2045
  %v2130 = vunpack.c.h.b16 %v2045
  %v2131 = vunpack.c.l.b16 %v2046
  %v2132 = vunpack.c.h.b16 %v2046
  %v2133 = vunpack.c.l.b16 %v2047
  %v2134 = vunpack.c.h.b16 %v2047
  %v2135 = vunpack.c.l.b16 %v2048
  %v2136 = vunpack.c.h.b16 %v2048
  %v2137 = vunpack.c.l.b16 %v2049
  %v2138 = vunpack.c.h.b16 %v2049
  %v2139 = vunpack.c.l.b16 %v2050
  %v2140 = vunpack.c.h.b16 %v2050
  %v2141 = vunpack.c.l.b16 %v2051
  %v2142 = vunpack.c.h.b16 %v2051
  %v2143 = vunpack.c.l.b16 %v2052
  %v2144 = vunpack.c.h.b16 %v2052
  %v2145 = vunpack.c.l.b16 %v2053
  %v2146 = vunpack.c.h.b16 %v2053
  %v2147 = vunpack.c.l.b16 %v2054
  %v2148 = vunpack.c.h.b16 %v2054
  %v2149 = vunpack.c.l.b16 %v2055
  %v2150 = vunpack.c.h.b16 %v2055
  %v2151 = vunpack.c.l.b16 %v2056
  %v2152 = vunpack.c.h.b16 %v2056
  %v2153 = vpack.c.b16 %v2091, %v2089
  %v2154 = vpack.c.b16 %v2092, %v2090
  %v2155 = vpack.c.b16 %v2095, %v2093
  %v2156 = vpack.c.b16 %v2096, %v2094
  %v2157 = vpack.c.b16 %v2099, %v2097
  %v2158 = vpack.c.b16 %v2100, %v2098
  %v2159 = vpack.c.b16 %v2103, %v2101
  %v2160 = vpack.c.b16 %v2104, %v2102
  %v2161 = vpack.c.b16 %v2107, %v2105
  %v2162 = vpack.c.b16 %v2108, %v2106
  %v2163 = vpack.c.b16 %v2111, %v2109
  %v2164 = vpack.c.b16 %v2112, %v2110
  %v2165 = vpack.c.b16 %v2115, %v2113
  %v2166 = vpack.c.b16 %v2116, %v2114
  %v2167 = vpack.c.b16 %v2119, %v2117
  %v2168 = vpack.c.b16 %v2120, %v2118
  %v2169 = vpack.c.b16 %v2123, %v2121
  %v2170 = vpack.c.b16 %v2124, %v2122
  %v2171 = vpack.c.b16 %v2127, %v2125
  %v2172 = vpack.c.b16 %v2128, %v2126
  %v2173 = vpack.c.b16 %v2131, %v2129
  %v2174 = vpack.c.b16 %v2132, %v2130
  %v2175 = vpack.c.b16 %v2135, %v2133
  %v2176 = vpack.c.b16 %v2136, %v2134
  %v2177 = vpack.c.b16 %v2139, %v2137
  %v2178 = vpack.c.b16 %v2140, %v2138
  %v2179 = vpack.c.b16 %v2143, %v2141
  %v2180 = vpack.c.b16 %v2144, %v2142
  %v2181 = vpack.c.b16 %v2147, %v2145
  %v2182 = vpack.c.b16 %v2148, %v2146
  %v2183 = vpack.c.b16 %v2151, %v2149
  %v2184 = vpack.c.b16 %v2152, %v2150
  %2217 = vmatprep.subr.bf16.mxu0 %v2168
  %2218 = vmatpush1.bf16.msra.mxu0 %v2167
  %2219 = vmatprep.subr.bf16.mxu0 %v2166
  %2220 = vmatpush1.bf16.msra.mxu0 %v2165
  %2221 = vmatprep.subr.bf16.mxu0 %v2164
  %2222 = vmatpush1.bf16.msra.mxu0 %v2163
  %2223 = vmatprep.subr.bf16.mxu0 %v2162
  %2224 = vmatpush1.bf16.msra.mxu0 %v2161
  %2225 = vmatprep.subr.bf16.mxu0 %v2160
  %2226 = vmatpush1.bf16.msra.mxu0 %v2159
  %2227 = vmatprep.subr.bf16.mxu0 %v2158
  %2228 = vmatpush1.bf16.msra.mxu0 %v2157
  %2229 = vmatprep.subr.bf16.mxu0 %v2156
  %2230 = vmatpush1.bf16.msra.mxu0 %v2155
  %2231 = vmatprep.subr.bf16.mxu0 %v2154
  %2232 = vmatpush1.bf16.msra.mxu0 %v2153
  %2233 = vmatprep.subr.bf16.mxu0 %v2184
  %2234 = vmatpush2.bf16.msra.mxu0 %v2183
  %2235 = vmatprep.subr.bf16.mxu0 %v2182
  %2236 = vmatpush2.bf16.msra.mxu0 %v2181
  %2237 = vmatprep.subr.bf16.mxu0 %v2180
  %2238 = vmatpush2.bf16.msra.mxu0 %v2179
  %2239 = vmatprep.subr.bf16.mxu0 %v2178
  %2240 = vmatpush2.bf16.msra.mxu0 %v2177
  %2241 = vmatprep.subr.bf16.mxu0 %v2176
  %2242 = vmatpush2.bf16.msra.mxu0 %v2175
  %2243 = vmatprep.subr.bf16.mxu0 %v2174
  %2244 = vmatpush2.bf16.msra.mxu0 %v2173
  %2245 = vmatprep.subr.bf16.mxu0 %v2172
  %2246 = vmatpush2.bf16.msra.mxu0 %v2171
  %2247 = vmatprep.subr.bf16.mxu0 %v2170
  %2248 = vmatpush2.bf16.msra.mxu0 %v2169
  %2249 = vmatprep.mubr.bf16.mxu0 %v2023
  %2250 = vmatmul.mubr.bf16.gmra.mxu0 %v2022
  %v2251 = vpop.f32.mrf.mxu0
  %v2252 = vadd.f32 0.0, %v2251
  %v2253 = vpop.f32.mrf.mxu0
  %v2254 = vadd.f32 0.0, %v2253
  %v2255 = vpop.f32.mrf.mxu0
  %v2256 = vpop.f32.mrf.mxu0
  %2257 = vdwg.mxu0
  %2258 = vmatprep.subr.mxu0 %v53
  %2259 = vmatpush1.msra.mxu0 %v52
  %2260 = vmatprep.subr.mxu0 %v51
  %2261 = vmatpush1.msra.mxu0 %v50
  %2262 = vmatprep.subr.mxu0 %v49
  %2263 = vmatpush1.msra.mxu0 %v48
  %2264 = vmatprep.subr.mxu0 %v47
  %2265 = vmatpush1.msra.mxu0 %v46
  %2266 = vmatprep.subr.mxu0 %v45
  %2267 = vmatpush1.msra.mxu0 %v44
  %2268 = vmatprep.subr.mxu0 %v43
  %2269 = vmatpush1.msra.mxu0 %v42
  %2270 = vmatprep.subr.mxu0 %v41
  %2271 = vmatpush1.msra.mxu0 %v40
  %2272 = vmatprep.subr.mxu0 %v39
  %2273 = vmatpush1.msra.mxu0 %v38
  %2274 = vmatprep.subr.mxu0 %v37
  %2275 = vmatpush1.msra.mxu0 %v36
  %2276 = vmatprep.subr.mxu0 %v35
  %2277 = vmatpush1.msra.mxu0 %v34
  %2278 = vmatprep.subr.mxu0 %v33
  %2279 = vmatpush1.msra.mxu0 %v32
  %2280 = vmatprep.subr.mxu0 %v31
  %2281 = vmatpush1.msra.mxu0 %v30
  %2282 = vmatprep.subr.mxu0 %v29
  %2283 = vmatpush1.msra.mxu0 %v28
  %2284 = vmatprep.subr.mxu0 %v27
  %2285 = vmatpush1.msra.mxu0 %v26
  %2286 = vmatprep.subr.mxu0 %v25
  %2287 = vmatpush1.msra.mxu0 %v24
  %2288 = vmatprep.subr.mxu0 %v23
  %2289 = vmatpush1.msra.mxu0 %v22
  %2290 = vmatprep.subr.mxu0 %v85
  %2291 = vmatpush2.msra.mxu0 %v84
  %2292 = vmatprep.subr.mxu0 %v83
  %2293 = vmatpush2.msra.mxu0 %v82
  %2294 = vmatprep.subr.mxu0 %v81
  %2295 = vmatpush2.msra.mxu0 %v80
  %2296 = vmatprep.subr.mxu0 %v79
  %2297 = vmatpush2.msra.mxu0 %v78
  %2298 = vmatprep.subr.mxu0 %v77
  %2299 = vmatpush2.msra.mxu0 %v76
  %2300 = vmatprep.subr.mxu0 %v75
  %2301 = vmatpush2.msra.mxu0 %v74
  %2302 = vmatprep.subr.mxu0 %v73
  %2303 = vmatpush2.msra.mxu0 %v72
  %2304 = vmatprep.subr.mxu0 %v71
  %2305 = vmatpush2.msra.mxu0 %v70
  %2306 = vmatprep.subr.mxu0 %v69
  %2307 = vmatpush2.msra.mxu0 %v68
  %2308 = vmatprep.subr.mxu0 %v67
  %2309 = vmatpush2.msra.mxu0 %v66
  %2310 = vmatprep.subr.mxu0 %v65
  %2311 = vmatpush2.msra.mxu0 %v64
  %2312 = vmatprep.subr.mxu0 %v63
  %2313 = vmatpush2.msra.mxu0 %v62
  %2314 = vmatprep.subr.mxu0 %v61
  %2315 = vmatpush2.msra.mxu0 %v60
  %2316 = vmatprep.subr.mxu0 %v59
  %2317 = vmatpush2.msra.mxu0 %v58
  %2318 = vmatprep.subr.mxu0 %v57
  %2319 = vmatpush2.msra.mxu0 %v56
  %2320 = vmatprep.subr.mxu0 %v55
  %2321 = vmatpush2.msra.mxu0 %v54
  %2322 = vmatprep.mubr.f32.mxu0 %v2254
  %2323 = vmatmul.mubr.f32.gmra.mxu0 %v2252
  %v2324 = vpop.f32.mrf.mxu0
  %v2325 = vadd.f32 0.0, %v2324
  %v2326 = vpop.f32.mrf.mxu0
  %v2327 = vadd.f32 0.0, %v2326
  %2328 = vdwg.mxu0
  %v2329 = vmul.f32 %v2325, 0.125
  %v2330 = vmul.f32 %v2327, 0.125
  %v2331 = vsub.f32 %v2252, %v2329
  %v2332 = vsub.f32 %v2254, %v2330
  %v2333 = vmul.f32 %v2331, %v2331
  %v2334 = vmul.f32 %v2332, %v2332
  %2335 = vmatprep.subr.mxu0 %v53
  %2336 = vmatpush1.msra.mxu0 %v52
  %2337 = vmatprep.subr.mxu0 %v51
  %2338 = vmatpush1.msra.mxu0 %v50
  %2339 = vmatprep.subr.mxu0 %v49
  %2340 = vmatpush1.msra.mxu0 %v48
  %2341 = vmatprep.subr.mxu0 %v47
  %2342 = vmatpush1.msra.mxu0 %v46
  %2343 = vmatprep.subr.mxu0 %v45
  %2344 = vmatpush1.msra.mxu0 %v44
  %2345 = vmatprep.subr.mxu0 %v43
  %2346 = vmatpush1.msra.mxu0 %v42
  %2347 = vmatprep.subr.mxu0 %v41
  %2348 = vmatpush1.msra.mxu0 %v40
  %2349 = vmatprep.subr.mxu0 %v39
  %2350 = vmatpush1.msra.mxu0 %v38
  %2351 = vmatprep.subr.mxu0 %v37
  %2352 = vmatpush1.msra.mxu0 %v36
  %2353 = vmatprep.subr.mxu0 %v35
  %2354 = vmatpush1.msra.mxu0 %v34
  %2355 = vmatprep.subr.mxu0 %v33
  %2356 = vmatpush1.msra.mxu0 %v32
  %2357 = vmatprep.subr.mxu0 %v31
  %2358 = vmatpush1.msra.mxu0 %v30
  %2359 = vmatprep.subr.mxu0 %v29
  %2360 = vmatpush1.msra.mxu0 %v28
  %2361 = vmatprep.subr.mxu0 %v27
  %2362 = vmatpush1.msra.mxu0 %v26
  %2363 = vmatprep.subr.mxu0 %v25
  %2364 = vmatpush1.msra.mxu0 %v24
  %2365 = vmatprep.subr.mxu0 %v23
  %2366 = vmatpush1.msra.mxu0 %v22
  %2367 = vmatprep.subr.mxu0 %v85
  %2368 = vmatpush2.msra.mxu0 %v84
  %2369 = vmatprep.subr.mxu0 %v83
  %2370 = vmatpush2.msra.mxu0 %v82
  %2371 = vmatprep.subr.mxu0 %v81
  %2372 = vmatpush2.msra.mxu0 %v80
  %2373 = vmatprep.subr.mxu0 %v79
  %2374 = vmatpush2.msra.mxu0 %v78
  %2375 = vmatprep.subr.mxu0 %v77
  %2376 = vmatpush2.msra.mxu0 %v76
  %2377 = vmatprep.subr.mxu0 %v75
  %2378 = vmatpush2.msra.mxu0 %v74
  %2379 = vmatprep.subr.mxu0 %v73
  %2380 = vmatpush2.msra.mxu0 %v72
  %2381 = vmatprep.subr.mxu0 %v71
  %2382 = vmatpush2.msra.mxu0 %v70
  %2383 = vmatprep.subr.mxu0 %v69
  %2384 = vmatpush2.msra.mxu0 %v68
  %2385 = vmatprep.subr.mxu0 %v67
  %2386 = vmatpush2.msra.mxu0 %v66
  %2387 = vmatprep.subr.mxu0 %v65
  %2388 = vmatpush2.msra.mxu0 %v64
  %2389 = vmatprep.subr.mxu0 %v63
  %2390 = vmatpush2.msra.mxu0 %v62
  %2391 = vmatprep.subr.mxu0 %v61
  %2392 = vmatpush2.msra.mxu0 %v60
  %2393 = vmatprep.subr.mxu0 %v59
  %2394 = vmatpush2.msra.mxu0 %v58
  %2395 = vmatprep.subr.mxu0 %v57
  %2396 = vmatpush2.msra.mxu0 %v56
  %2397 = vmatprep.subr.mxu0 %v55
  %2398 = vmatpush2.msra.mxu0 %v54
  %2399 = vmatprep.mubr.f32.mxu0 %v2334
  %2400 = vmatmul.mubr.f32.gmra.mxu0 %v2333
  %v2401 = vpop.f32.mrf.mxu0
  %v2402 = vadd.f32 0.0, %v2401
  %v2403 = vpop.f32.mrf.mxu0
  %v2404 = vadd.f32 0.0, %v2403
  %2405 = vdwg.mxu0
  %v2406 = vmul.f32 %v2402, 0.125
  %v2407 = vmul.f32 %v2404, 0.125
  %v2408 = vadd.f32 %v2406, 1e-05
  %v2409 = vadd.f32 %v2407, 1e-05
  %v2410 = vrsqrt.pop %v2408
  %v2411 = vrsqrt.pop %v2409
  %v2412 = vmul.f32 %v2331, %v2410
  %v2413 = vmul.f32 %v2332, %v2411
  %v2414 = vmax.f32 %v2412, 0.0
  %v2415 = vmax.f32 %v2413, 0.0
  %v2416 = vpack.c.bf16 %v2414, %v2414
  %v2417 = vpack.c.bf16 %v2415, %v2415
  %s2418 = scalar_lea.vmem %s2, 768
  %v2419 = vld [vmem:[%s2418] sm:$0xff]
  %v2420 = vld [vmem:[%s2418 + $0x8] sm:$0xff]
  %v2421 = vld [vmem:[%s2418 + $0x10] sm:$0xff]
  %v2422 = vld [vmem:[%s2418 + $0x18] sm:$0xff]
  %v2423 = vld [vmem:[%s2418 + $0x20] sm:$0xff]
  %v2424 = vld [vmem:[%s2418 + $0x28] sm:$0xff]
  %v2425 = vld [vmem:[%s2418 + $0x30] sm:$0xff]
  %v2426 = vld [vmem:[%s2418 + $0x38] sm:$0xff]
  %v2427 = vld [vmem:[%s2418 + $0x40] sm:$0xff]
  %v2428 = vld [vmem:[%s2418 + $0x48] sm:$0xff]
  %v2429 = vld [vmem:[%s2418 + $0x50] sm:$0xff]
  %v2430 = vld [vmem:[%s2418 + $0x58] sm:$0xff]
  %v2431 = vld [vmem:[%s2418 + $0x60] sm:$0xff]
  %v2432 = vld [vmem:[%s2418 + $0x68] sm:$0xff]
  %v2433 = vld [vmem:[%s2418 + $0x70] sm:$0xff]
  %v2434 = vld [vmem:[%s2418 + $0x78] sm:$0xff]
  %v2435 = vld [vmem:[%s2418 + $0x80] sm:$0xff]
  %v2436 = vld [vmem:[%s2418 + $0x88] sm:$0xff]
  %v2437 = vld [vmem:[%s2418 + $0x90] sm:$0xff]
  %v2438 = vld [vmem:[%s2418 + $0x98] sm:$0xff]
  %v2439 = vld [vmem:[%s2418 + $0xa0] sm:$0xff]
  %v2440 = vld [vmem:[%s2418 + $0xa8] sm:$0xff]
  %v2441 = vld [vmem:[%s2418 + $0xb0] sm:$0xff]
  %v2442 = vld [vmem:[%s2418 + $0xb8] sm:$0xff]
  %v2443 = vld [vmem:[%s2418 + $0xc0] sm:$0xff]
  %v2444 = vld [vmem:[%s2418 + $0xc8] sm:$0xff]
  %v2445 = vld [vmem:[%s2418 + $0xd0] sm:$0xff]
  %v2446 = vld [vmem:[%s2418 + $0xd8] sm:$0xff]
  %v2447 = vld [vmem:[%s2418 + $0xe0] sm:$0xff]
  %v2448 = vld [vmem:[%s2418 + $0xe8] sm:$0xff]
  %v2449 = vld [vmem:[%s2418 + $0xf0] sm:$0xff]
  %v2450 = vld [vmem:[%s2418 + $0xf8] sm:$0xff]
  %v2483 = vunpack.c.l.b16 %v2419
  %v2484 = vunpack.c.h.b16 %v2419
  %v2485 = vunpack.c.l.b16 %v2420
  %v2486 = vunpack.c.h.b16 %v2420
  %v2487 = vunpack.c.l.b16 %v2421
  %v2488 = vunpack.c.h.b16 %v2421
  %v2489 = vunpack.c.l.b16 %v2422
  %v2490 = vunpack.c.h.b16 %v2422
  %v2491 = vunpack.c.l.b16 %v2423
  %v2492 = vunpack.c.h.b16 %v2423
  %v2493 = vunpack.c.l.b16 %v2424
  %v2494 = vunpack.c.h.b16 %v2424
  %v2495 = vunpack.c.l.b16 %v2425
  %v2496 = vunpack.c.h.b16 %v2425
  %v2497 = vunpack.c.l.b16 %v2426
  %v2498 = vunpack.c.h.b16 %v2426
  %v2499 = vunpack.c.l.b16 %v2427
  %v2500 = vunpack.c.h.b16 %v2427
  %v2501 = vunpack.c.l.b16 %v2428
  %v2502 = vunpack.c.h.b16 %v2428
  %v2503 = vunpack.c.l.b16 %v2429
  %v2504 = vunpack.c.h.b16 %v2429
  %v2505 = vunpack.c.l.b16 %v2430
  %v2506 = vunpack.c.h.b16 %v2430
  %v2507 = vunpack.c.l.b16 %v2431
  %v2508 = vunpack.c.h.b16 %v2431
  %v2509 = vunpack.c.l.b16 %v2432
  %v2510 = vunpack.c.h.b16 %v2432
  %v2511 = vunpack.c.l.b16 %v2433
  %v2512 = vunpack.c.h.b16 %v2433
  %v2513 = vunpack.c.l.b16 %v2434
  %v2514 = vunpack.c.h.b16 %v2434
  %v2515 = vunpack.c.l.b16 %v2435
  %v2516 = vunpack.c.h.b16 %v2435
  %v2517 = vunpack.c.l.b16 %v2436
  %v2518 = vunpack.c.h.b16 %v2436
  %v2519 = vunpack.c.l.b16 %v2437
  %v2520 = vunpack.c.h.b16 %v2437
  %v2521 = vunpack.c.l.b16 %v2438
  %v2522 = vunpack.c.h.b16 %v2438
  %v2523 = vunpack.c.l.b16 %v2439
  %v2524 = vunpack.c.h.b16 %v2439
  %v2525 = vunpack.c.l.b16 %v2440
  %v2526 = vunpack.c.h.b16 %v2440
  %v2527 = vunpack.c.l.b16 %v2441
  %v2528 = vunpack.c.h.b16 %v2441
  %v2529 = vunpack.c.l.b16 %v2442
  %v2530 = vunpack.c.h.b16 %v2442
  %v2531 = vunpack.c.l.b16 %v2443
  %v2532 = vunpack.c.h.b16 %v2443
  %v2533 = vunpack.c.l.b16 %v2444
  %v2534 = vunpack.c.h.b16 %v2444
  %v2535 = vunpack.c.l.b16 %v2445
  %v2536 = vunpack.c.h.b16 %v2445
  %v2537 = vunpack.c.l.b16 %v2446
  %v2538 = vunpack.c.h.b16 %v2446
  %v2539 = vunpack.c.l.b16 %v2447
  %v2540 = vunpack.c.h.b16 %v2447
  %v2541 = vunpack.c.l.b16 %v2448
  %v2542 = vunpack.c.h.b16 %v2448
  %v2543 = vunpack.c.l.b16 %v2449
  %v2544 = vunpack.c.h.b16 %v2449
  %v2545 = vunpack.c.l.b16 %v2450
  %v2546 = vunpack.c.h.b16 %v2450
  %v2547 = vpack.c.b16 %v2485, %v2483
  %v2548 = vpack.c.b16 %v2486, %v2484
  %v2549 = vpack.c.b16 %v2489, %v2487
  %v2550 = vpack.c.b16 %v2490, %v2488
  %v2551 = vpack.c.b16 %v2493, %v2491
  %v2552 = vpack.c.b16 %v2494, %v2492
  %v2553 = vpack.c.b16 %v2497, %v2495
  %v2554 = vpack.c.b16 %v2498, %v2496
  %v2555 = vpack.c.b16 %v2501, %v2499
  %v2556 = vpack.c.b16 %v2502, %v2500
  %v2557 = vpack.c.b16 %v2505, %v2503
  %v2558 = vpack.c.b16 %v2506, %v2504
  %v2559 = vpack.c.b16 %v2509, %v2507
  %v2560 = vpack.c.b16 %v2510, %v2508
  %v2561 = vpack.c.b16 %v2513, %v2511
  %v2562 = vpack.c.b16 %v2514, %v2512
  %v2563 = vpack.c.b16 %v2517, %v2515
  %v2564 = vpack.c.b16 %v2518, %v2516
  %v2565 = vpack.c.b16 %v2521, %v2519
  %v2566 = vpack.c.b16 %v2522, %v2520
  %v2567 = vpack.c.b16 %v2525, %v2523
  %v2568 = vpack.c.b16 %v2526, %v2524
  %v2569 = vpack.c.b16 %v2529, %v2527
  %v2570 = vpack.c.b16 %v2530, %v2528
  %v2571 = vpack.c.b16 %v2533, %v2531
  %v2572 = vpack.c.b16 %v2534, %v2532
  %v2573 = vpack.c.b16 %v2537, %v2535
  %v2574 = vpack.c.b16 %v2538, %v2536
  %v2575 = vpack.c.b16 %v2541, %v2539
  %v2576 = vpack.c.b16 %v2542, %v2540
  %v2577 = vpack.c.b16 %v2545, %v2543
  %v2578 = vpack.c.b16 %v2546, %v2544
  %2611 = vmatprep.subr.bf16.mxu0 %v2562
  %2612 = vmatpush1.bf16.msra.mxu0 %v2561
  %2613 = vmatprep.subr.bf16.mxu0 %v2560
  %2614 = vmatpush1.bf16.msra.mxu0 %v2559
  %2615 = vmatprep.subr.bf16.mxu0 %v2558
  %2616 = vmatpush1.bf16.msra.mxu0 %v2557
  %2617 = vmatprep.subr.bf16.mxu0 %v2556
  %2618 = vmatpush1.bf16.msra.mxu0 %v2555
  %2619 = vmatprep.subr.bf16.mxu0 %v2554
  %2620 = vmatpush1.bf16.msra.mxu0 %v2553
  %2621 = vmatprep.subr.bf16.mxu0 %v2552
  %2622 = vmatpush1.bf16.msra.mxu0 %v2551
  %2623 = vmatprep.subr.bf16.mxu0 %v2550
  %2624 = vmatpush1.bf16.msra.mxu0 %v2549
  %2625 = vmatprep.subr.bf16.mxu0 %v2548
  %2626 = vmatpush1.bf16.msra.mxu0 %v2547
  %2627 = vmatprep.subr.bf16.mxu0 %v2578
  %2628 = vmatpush2.bf16.msra.mxu0 %v2577
  %2629 = vmatprep.subr.bf16.mxu0 %v2576
  %2630 = vmatpush2.bf16.msra.mxu0 %v2575
  %2631 = vmatprep.subr.bf16.mxu0 %v2574
  %2632 = vmatpush2.bf16.msra.mxu0 %v2573
  %2633 = vmatprep.subr.bf16.mxu0 %v2572
  %2634 = vmatpush2.bf16.msra.mxu0 %v2571
  %2635 = vmatprep.subr.bf16.mxu0 %v2570
  %2636 = vmatpush2.bf16.msra.mxu0 %v2569
  %2637 = vmatprep.subr.bf16.mxu0 %v2568
  %2638 = vmatpush2.bf16.msra.mxu0 %v2567
  %2639 = vmatprep.subr.bf16.mxu0 %v2566
  %2640 = vmatpush2.bf16.msra.mxu0 %v2565
  %2641 = vmatprep.subr.bf16.mxu0 %v2564
  %2642 = vmatpush2.bf16.msra.mxu0 %v2563
  %2643 = vmatprep.mubr.bf16.mxu0 %v2417
  %2644 = vmatmul.mubr.bf16.gmra.mxu0 %v2416
  %v2645 = vpop.f32.mrf.mxu0
  %v2646 = vadd.f32 0.0, %v2645
  %v2647 = vpop.f32.mrf.mxu0
  %v2648 = vadd.f32 0.0, %v2647
  %v2649 = vpop.f32.mrf.mxu0
  %v2650 = vpop.f32.mrf.mxu0
  %2651 = vdwg.mxu0
  %2652 = vmatprep.subr.mxu0 %v53
  %2653 = vmatpush1.msra.mxu0 %v52
  %2654 = vmatprep.subr.mxu0 %v51
  %2655 = vmatpush1.msra.mxu0 %v50
  %2656 = vmatprep.subr.mxu0 %v49
  %2657 = vmatpush1.msra.mxu0 %v48
  %2658 = vmatprep.subr.mxu0 %v47
  %2659 = vmatpush1.msra.mxu0 %v46
  %2660 = vmatprep.subr.mxu0 %v45
  %2661 = vmatpush1.msra.mxu0 %v44
  %2662 = vmatprep.subr.mxu0 %v43
  %2663 = vmatpush1.msra.mxu0 %v42
  %2664 = vmatprep.subr.mxu0 %v41
  %2665 = vmatpush1.msra.mxu0 %v40
  %2666 = vmatprep.subr.mxu0 %v39
  %2667 = vmatpush1.msra.mxu0 %v38
  %2668 = vmatprep.subr.mxu0 %v37
  %2669 = vmatpush1.msra.mxu0 %v36
  %2670 = vmatprep.subr.mxu0 %v35
  %2671 = vmatpush1.msra.mxu0 %v34
  %2672 = vmatprep.subr.mxu0 %v33
  %2673 = vmatpush1.msra.mxu0 %v32
  %2674 = vmatprep.subr.mxu0 %v31
  %2675 = vmatpush1.msra.mxu0 %v30
  %2676 = vmatprep.subr.mxu0 %v29
  %2677 = vmatpush1.msra.mxu0 %v28
  %2678 = vmatprep.subr.mxu0 %v27
  %2679 = vmatpush1.msra.mxu0 %v26
  %2680 = vmatprep.subr.mxu0 %v25
  %2681 = vmatpush1.msra.mxu0 %v24
  %2682 = vmatprep.subr.mxu0 %v23
  %2683 = vmatpush1.msra.mxu0 %v22
  %2684 = vmatprep.subr.mxu0 %v85
  %2685 = vmatpush2.msra.mxu0 %v84
  %2686 = vmatprep.subr.mxu0 %v83
  %2687 = vmatpush2.msra.mxu0 %v82
  %2688 = vmatprep.subr.mxu0 %v81
  %2689 = vmatpush2.msra.mxu0 %v80
  %2690 = vmatprep.subr.mxu0 %v79
  %2691 = vmatpush2.msra.mxu0 %v78
  %2692 = vmatprep.subr.mxu0 %v77
  %2693 = vmatpush2.msra.mxu0 %v76
  %2694 = vmatprep.subr.mxu0 %v75
  %2695 = vmatpush2.msra.mxu0 %v74
  %2696 = vmatprep.subr.mxu0 %v73
  %2697 = vmatpush2.msra.mxu0 %v72
  %2698 = vmatprep.subr.mxu0 %v71
  %2699 = vmatpush2.msra.mxu0 %v70
  %2700 = vmatprep.subr.mxu0 %v69
  %2701 = vmatpush2.msra.mxu0 %v68
  %2702 = vmatprep.subr.mxu0 %v67
  %2703 = vmatpush2.msra.mxu0 %v66
  %2704 = vmatprep.subr.mxu0 %v65
  %2705 = vmatpush2.msra.mxu0 %v64
  %2706 = vmatprep.subr.mxu0 %v63
  %2707 = vmatpush2.msra.mxu0 %v62
  %2708 = vmatprep.subr.mxu0 %v61
  %2709 = vmatpush2.msra.mxu0 %v60
  %2710 = vmatprep.subr.mxu0 %v59
  %2711 = vmatpush2.msra.mxu0 %v58
  %2712 = vmatprep.subr.mxu0 %v57
  %2713 = vmatpush2.msra.mxu0 %v56
  %2714 = vmatprep.subr.mxu0 %v55
  %2715 = vmatpush2.msra.mxu0 %v54
  %2716 = vmatprep.mubr.f32.mxu0 %v2648
  %2717 = vmatmul.mubr.f32.gmra.mxu0 %v2646
  %v2718 = vpop.f32.mrf.mxu0
  %v2719 = vadd.f32 0.0, %v2718
  %v2720 = vpop.f32.mrf.mxu0
  %v2721 = vadd.f32 0.0, %v2720
  %2722 = vdwg.mxu0
  %v2723 = vmul.f32 %v2719, 0.125
  %v2724 = vmul.f32 %v2721, 0.125
  %v2725 = vsub.f32 %v2646, %v2723
  %v2726 = vsub.f32 %v2648, %v2724
  %v2727 = vmul.f32 %v2725, %v2725
  %v2728 = vmul.f32 %v2726, %v2726
  %2729 = vmatprep.subr.mxu0 %v53
  %2730 = vmatpush1.msra.mxu0 %v52
  %2731 = vmatprep.subr.mxu0 %v51
  %2732 = vmatpush1.msra.mxu0 %v50
  %2733 = vmatprep.subr.mxu0 %v49
  %2734 = vmatpush1.msra.mxu0 %v48
  %2735 = vmatprep.subr.mxu0 %v47
  %2736 = vmatpush1.msra.mxu0 %v46
  %2737 = vmatprep.subr.mxu0 %v45
  %2738 = vmatpush1.msra.mxu0 %v44
  %2739 = vmatprep.subr.mxu0 %v43
  %2740 = vmatpush1.msra.mxu0 %v42
  %2741 = vmatprep.subr.mxu0 %v41
  %2742 = vmatpush1.msra.mxu0 %v40
  %2743 = vmatprep.subr.mxu0 %v39
  %2744 = vmatpush1.msra.mxu0 %v38
  %2745 = vmatprep.subr.mxu0 %v37
  %2746 = vmatpush1.msra.mxu0 %v36
  %2747 = vmatprep.subr.mxu0 %v35
  %2748 = vmatpush1.msra.mxu0 %v34
  %2749 = vmatprep.subr.mxu0 %v33
  %2750 = vmatpush1.msra.mxu0 %v32
  %2751 = vmatprep.subr.mxu0 %v31
  %2752 = vmatpush1.msra.mxu0 %v30
  %2753 = vmatprep.subr.mxu0 %v29
  %2754 = vmatpush1.msra.mxu0 %v28
  %2755 = vmatprep.subr.mxu0 %v27
  %2756 = vmatpush1.msra.mxu0 %v26
  %2757 = vmatprep.subr.mxu0 %v25
  %2758 = vmatpush1.msra.mxu0 %v24
  %2759 = vmatprep.subr.mxu0 %v23
  %2760 = vmatpush1.msra.mxu0 %v22
  %2761 = vmatprep.subr.mxu0 %v85
  %2762 = vmatpush2.msra.mxu0 %v84
  %2763 = vmatprep.subr.mxu0 %v83
  %2764 = vmatpush2.msra.mxu0 %v82
  %2765 = vmatprep.subr.mxu0 %v81
  %2766 = vmatpush2.msra.mxu0 %v80
  %2767 = vmatprep.subr.mxu0 %v79
  %2768 = vmatpush2.msra.mxu0 %v78
  %2769 = vmatprep.subr.mxu0 %v77
  %2770 = vmatpush2.msra.mxu0 %v76
  %2771 = vmatprep.subr.mxu0 %v75
  %2772 = vmatpush2.msra.mxu0 %v74
  %2773 = vmatprep.subr.mxu0 %v73
  %2774 = vmatpush2.msra.mxu0 %v72
  %2775 = vmatprep.subr.mxu0 %v71
  %2776 = vmatpush2.msra.mxu0 %v70
  %2777 = vmatprep.subr.mxu0 %v69
  %2778 = vmatpush2.msra.mxu0 %v68
  %2779 = vmatprep.subr.mxu0 %v67
  %2780 = vmatpush2.msra.mxu0 %v66
  %2781 = vmatprep.subr.mxu0 %v65
  %2782 = vmatpush2.msra.mxu0 %v64
  %2783 = vmatprep.subr.mxu0 %v63
  %2784 = vmatpush2.msra.mxu0 %v62
  %2785 = vmatprep.subr.mxu0 %v61
  %2786 = vmatpush2.msra.mxu0 %v60
  %2787 = vmatprep.subr.mxu0 %v59
  %2788 = vmatpush2.msra.mxu0 %v58
  %2789 = vmatprep.subr.mxu0 %v57
  %2790 = vmatpush2.msra.mxu0 %v56
  %2791 = vmatprep.subr.mxu0 %v55
  %2792 = vmatpush2.msra.mxu0 %v54
  %2793 = vmatprep.mubr.f32.mxu0 %v2728
  %2794 = vmatmul.mubr.f32.gmra.mxu0 %v2727
  %v2795 = vpop.f32.mrf.mxu0
  %v2796 = vadd.f32 0.0, %v2795
  %v2797 = vpop.f32.mrf.mxu0
  %v2798 = vadd.f32 0.0, %v2797
  %2799 = vdwg.mxu0
  %v2800 = vmul.f32 %v2796, 0.125
  %v2801 = vmul.f32 %v2798, 0.125
  %v2802 = vadd.f32 %v2800, 1e-05
  %v2803 = vadd.f32 %v2801, 1e-05
  %v2804 = vrsqrt.pop %v2802
  %v2805 = vrsqrt.pop %v2803
  %v2806 = vmul.f32 %v2725, %v2804
  %v2807 = vmul.f32 %v2726, %v2805
  %v2808 = vadd.f32 %v2020, %v2806
  %v2809 = vadd.f32 %v2021, %v2807
  %v2810 = vpack.c.bf16 %v2808, %v2808
  %v2811 = vpack.c.bf16 %v2809, %v2809
  %s2812 = scalar_lea.vmem %s2, 1024
  %v2813 = vld [vmem:[%s2812] sm:$0xff]
  %v2814 = vld [vmem:[%s2812 + $0x8] sm:$0xff]
  %v2815 = vld [vmem:[%s2812 + $0x10] sm:$0xff]
  %v2816 = vld [vmem:[%s2812 + $0x18] sm:$0xff]
  %v2817 = vld [vmem:[%s2812 + $0x20] sm:$0xff]
  %v2818 = vld [vmem:[%s2812 + $0x28] sm:$0xff]
  %v2819 = vld [vmem:[%s2812 + $0x30] sm:$0xff]
  %v2820 = vld [vmem:[%s2812 + $0x38] sm:$0xff]
  %v2821 = vld [vmem:[%s2812 + $0x40] sm:$0xff]
  %v2822 = vld [vmem:[%s2812 + $0x48] sm:$0xff]
  %v2823 = vld [vmem:[%s2812 + $0x50] sm:$0xff]
  %v2824 = vld [vmem:[%s2812 + $0x58] sm:$0xff]
  %v2825 = vld [vmem:[%s2812 + $0x60] sm:$0xff]
  %v2826 = vld [vmem:[%s2812 + $0x68] sm:$0xff]
  %v2827 = vld [vmem:[%s2812 + $0x70] sm:$0xff]
  %v2828 = vld [vmem:[%s2812 + $0x78] sm:$0xff]
  %v2829 = vld [vmem:[%s2812 + $0x80] sm:$0xff]
  %v2830 = vld [vmem:[%s2812 + $0x88] sm:$0xff]
  %v2831 = vld [vmem:[%s2812 + $0x90] sm:$0xff]
  %v2832 = vld [vmem:[%s2812 + $0x98] sm:$0xff]
  %v2833 = vld [vmem:[%s2812 + $0xa0] sm:$0xff]
  %v2834 = vld [vmem:[%s2812 + $0xa8] sm:$0xff]
  %v2835 = vld [vmem:[%s2812 + $0xb0] sm:$0xff]
  %v2836 = vld [vmem:[%s2812 + $0xb8] sm:$0xff]
  %v2837 = vld [vmem:[%s2812 + $0xc0] sm:$0xff]
  %v2838 = vld [vmem:[%s2812 + $0xc8] sm:$0xff]
  %v2839 = vld [vmem:[%s2812 + $0xd0] sm:$0xff]
  %v2840 = vld [vmem:[%s2812 + $0xd8] sm:$0xff]
  %v2841 = vld [vmem:[%s2812 + $0xe0] sm:$0xff]
  %v2842 = vld [vmem:[%s2812 + $0xe8] sm:$0xff]
  %v2843 = vld [vmem:[%s2812 + $0xf0] sm:$0xff]
  %v2844 = vld [vmem:[%s2812 + $0xf8] sm:$0xff]
  %v2877 = vunpack.c.l.b16 %v2813
  %v2878 = vunpack.c.h.b16 %v2813
  %v2879 = vunpack.c.l.b16 %v2814
  %v2880 = vunpack.c.h.b16 %v2814
  %v2881 = vunpack.c.l.b16 %v2815
  %v2882 = vunpack.c.h.b16 %v2815
  %v2883 = vunpack.c.l.b16 %v2816
  %v2884 = vunpack.c.h.b16 %v2816
  %v2885 = vunpack.c.l.b16 %v2817
  %v2886 = vunpack.c.h.b16 %v2817
  %v2887 = vunpack.c.l.b16 %v2818
  %v2888 = vunpack.c.h.b16 %v2818
  %v2889 = vunpack.c.l.b16 %v2819
  %v2890 = vunpack.c.h.b16 %v2819
  %v2891 = vunpack.c.l.b16 %v2820
  %v2892 = vunpack.c.h.b16 %v2820
  %v2893 = vunpack.c.l.b16 %v2821
  %v2894 = vunpack.c.h.b16 %v2821
  %v2895 = vunpack.c.l.b16 %v2822
  %v2896 = vunpack.c.h.b16 %v2822
  %v2897 = vunpack.c.l.b16 %v2823
  %v2898 = vunpack.c.h.b16 %v2823
  %v2899 = vunpack.c.l.b16 %v2824
  %v2900 = vunpack.c.h.b16 %v2824
  %v2901 = vunpack.c.l.b16 %v2825
  %v2902 = vunpack.c.h.b16 %v2825
  %v2903 = vunpack.c.l.b16 %v2826
  %v2904 = vunpack.c.h.b16 %v2826
  %v2905 = vunpack.c.l.b16 %v2827
  %v2906 = vunpack.c.h.b16 %v2827
  %v2907 = vunpack.c.l.b16 %v2828
  %v2908 = vunpack.c.h.b16 %v2828
  %v2909 = vunpack.c.l.b16 %v2829
  %v2910 = vunpack.c.h.b16 %v2829
  %v2911 = vunpack.c.l.b16 %v2830
  %v2912 = vunpack.c.h.b16 %v2830
  %v2913 = vunpack.c.l.b16 %v2831
  %v2914 = vunpack.c.h.b16 %v2831
  %v2915 = vunpack.c.l.b16 %v2832
  %v2916 = vunpack.c.h.b16 %v2832
  %v2917 = vunpack.c.l.b16 %v2833
  %v2918 = vunpack.c.h.b16 %v2833
  %v2919 = vunpack.c.l.b16 %v2834
  %v2920 = vunpack.c.h.b16 %v2834
  %v2921 = vunpack.c.l.b16 %v2835
  %v2922 = vunpack.c.h.b16 %v2835
  %v2923 = vunpack.c.l.b16 %v2836
  %v2924 = vunpack.c.h.b16 %v2836
  %v2925 = vunpack.c.l.b16 %v2837
  %v2926 = vunpack.c.h.b16 %v2837
  %v2927 = vunpack.c.l.b16 %v2838
  %v2928 = vunpack.c.h.b16 %v2838
  %v2929 = vunpack.c.l.b16 %v2839
  %v2930 = vunpack.c.h.b16 %v2839
  %v2931 = vunpack.c.l.b16 %v2840
  %v2932 = vunpack.c.h.b16 %v2840
  %v2933 = vunpack.c.l.b16 %v2841
  %v2934 = vunpack.c.h.b16 %v2841
  %v2935 = vunpack.c.l.b16 %v2842
  %v2936 = vunpack.c.h.b16 %v2842
  %v2937 = vunpack.c.l.b16 %v2843
  %v2938 = vunpack.c.h.b16 %v2843
  %v2939 = vunpack.c.l.b16 %v2844
  %v2940 = vunpack.c.h.b16 %v2844
  %v2941 = vpack.c.b16 %v2879, %v2877
  %v2942 = vpack.c.b16 %v2880, %v2878
  %v2943 = vpack.c.b16 %v2883, %v2881
  %v2944 = vpack.c.b16 %v2884, %v2882
  %v2945 = vpack.c.b16 %v2887, %v2885
  %v2946 = vpack.c.b16 %v2888, %v2886
  %v2947 = vpack.c.b16 %v2891, %v2889
  %v2948 = vpack.c.b16 %v2892, %v2890
  %v2949 = vpack.c.b16 %v2895, %v2893
  %v2950 = vpack.c.b16 %v2896, %v2894
  %v2951 = vpack.c.b16 %v2899, %v2897
  %v2952 = vpack.c.b16 %v2900, %v2898
  %v2953 = vpack.c.b16 %v2903, %v2901
  %v2954 = vpack.c.b16 %v2904, %v2902
  %v2955 = vpack.c.b16 %v2907, %v2905
  %v2956 = vpack.c.b16 %v2908, %v2906
  %v2957 = vpack.c.b16 %v2911, %v2909
  %v2958 = vpack.c.b16 %v2912, %v2910
  %v2959 = vpack.c.b16 %v2915, %v2913
  %v2960 = vpack.c.b16 %v2916, %v2914
  %v2961 = vpack.c.b16 %v2919, %v2917
  %v2962 = vpack.c.b16 %v2920, %v2918
  %v2963 = vpack.c.b16 %v2923, %v2921
  %v2964 = vpack.c.b16 %v2924, %v2922
  %v2965 = vpack.c.b16 %v2927, %v2925
  %v2966 = vpack.c.b16 %v2928, %v2926
  %v2967 = vpack.c.b16 %v2931, %v2929
  %v2968 = vpack.c.b16 %v2932, %v2930
  %v2969 = vpack.c.b16 %v2935, %v2933
  %v2970 = vpack.c.b16 %v2936, %v2934
  %v2971 = vpack.c.b16 %v2939, %v2937
  %v2972 = vpack.c.b16 %v2940, %v2938
  %3005 = vmatprep.subr.bf16.mxu0 %v2956
  %3006 = vmatpush1.bf16.msra.mxu0 %v2955
  %3007 = vmatprep.subr.bf16.mxu0 %v2954
  %3008 = vmatpush1.bf16.msra.mxu0 %v2953
  %3009 = vmatprep.subr.bf16.mxu0 %v2952
  %3010 = vmatpush1.bf16.msra.mxu0 %v2951
  %3011 = vmatprep.subr.bf16.mxu0 %v2950
  %3012 = vmatpush1.bf16.msra.mxu0 %v2949
  %3013 = vmatprep.subr.bf16.mxu0 %v2948
  %3014 = vmatpush1.bf16.msra.mxu0 %v2947
  %3015 = vmatprep.subr.bf16.mxu0 %v2946
  %3016 = vmatpush1.bf16.msra.mxu0 %v2945
  %3017 = vmatprep.subr.bf16.mxu0 %v2944
  %3018 = vmatpush1.bf16.msra.mxu0 %v2943
  %3019 = vmatprep.subr.bf16.mxu0 %v2942
  %3020 = vmatpush1.bf16.msra.mxu0 %v2941
  %3021 = vmatprep.subr.bf16.mxu0 %v2972
  %3022 = vmatpush2.bf16.msra.mxu0 %v2971
  %3023 = vmatprep.subr.bf16.mxu0 %v2970
  %3024 = vmatpush2.bf16.msra.mxu0 %v2969
  %3025 = vmatprep.subr.bf16.mxu0 %v2968
  %3026 = vmatpush2.bf16.msra.mxu0 %v2967
  %3027 = vmatprep.subr.bf16.mxu0 %v2966
  %3028 = vmatpush2.bf16.msra.mxu0 %v2965
  %3029 = vmatprep.subr.bf16.mxu0 %v2964
  %3030 = vmatpush2.bf16.msra.mxu0 %v2963
  %3031 = vmatprep.subr.bf16.mxu0 %v2962
  %3032 = vmatpush2.bf16.msra.mxu0 %v2961
  %3033 = vmatprep.subr.bf16.mxu0 %v2960
  %3034 = vmatpush2.bf16.msra.mxu0 %v2959
  %3035 = vmatprep.subr.bf16.mxu0 %v2958
  %3036 = vmatpush2.bf16.msra.mxu0 %v2957
  %3037 = vmatprep.mubr.bf16.mxu0 %v2811
  %3038 = vmatmul.mubr.bf16.gmra.mxu0 %v2810
  %v3039 = vpop.f32.mrf.mxu0
  %v3040 = vadd.f32 0.0, %v3039
  %v3041 = vpop.f32.mrf.mxu0
  %v3042 = vadd.f32 0.0, %v3041
  %v3043 = vpop.f32.mrf.mxu0
  %v3044 = vpop.f32.mrf.mxu0
  %3045 = vdwg.mxu0
  %3046 = vmatprep.subr.mxu0 %v53
  %3047 = vmatpush1.msra.mxu0 %v52
  %3048 = vmatprep.subr.mxu0 %v51
  %3049 = vmatpush1.msra.mxu0 %v50
  %3050 = vmatprep.subr.mxu0 %v49
  %3051 = vmatpush1.msra.mxu0 %v48
  %3052 = vmatprep.subr.mxu0 %v47
  %3053 = vmatpush1.msra.mxu0 %v46
  %3054 = vmatprep.subr.mxu0 %v45
  %3055 = vmatpush1.msra.mxu0 %v44
  %3056 = vmatprep.subr.mxu0 %v43
  %3057 = vmatpush1.msra.mxu0 %v42
  %3058 = vmatprep.subr.mxu0 %v41
  %3059 = vmatpush1.msra.mxu0 %v40
  %3060 = vmatprep.subr.mxu0 %v39
  %3061 = vmatpush1.msra.mxu0 %v38
  %3062 = vmatprep.subr.mxu0 %v37
  %3063 = vmatpush1.msra.mxu0 %v36
  %3064 = vmatprep.subr.mxu0 %v35
  %3065 = vmatpush1.msra.mxu0 %v34
  %3066 = vmatprep.subr.mxu0 %v33
  %3067 = vmatpush1.msra.mxu0 %v32
  %3068 = vmatprep.subr.mxu0 %v31
  %3069 = vmatpush1.msra.mxu0 %v30
  %3070 = vmatprep.subr.mxu0 %v29
  %3071 = vmatpush1.msra.mxu0 %v28
  %3072 = vmatprep.subr.mxu0 %v27
  %3073 = vmatpush1.msra.mxu0 %v26
  %3074 = vmatprep.subr.mxu0 %v25
  %3075 = vmatpush1.msra.mxu0 %v24
  %3076 = vmatprep.subr.mxu0 %v23
  %3077 = vmatpush1.msra.mxu0 %v22
  %3078 = vmatprep.subr.mxu0 %v85
  %3079 = vmatpush2.msra.mxu0 %v84
  %3080 = vmatprep.subr.mxu0 %v83
  %3081 = vmatpush2.msra.mxu0 %v82
  %3082 = vmatprep.subr.mxu0 %v81
  %3083 = vmatpush2.msra.mxu0 %v80
  %3084 = vmatprep.subr.mxu0 %v79
  %3085 = vmatpush2.msra.mxu0 %v78
  %3086 = vmatprep.subr.mxu0 %v77
  %3087 = vmatpush2.msra.mxu0 %v76
  %3088 = vmatprep.subr.mxu0 %v75
  %3089 = vmatpush2.msra.mxu0 %v74
  %3090 = vmatprep.subr.mxu0 %v73
  %3091 = vmatpush2.msra.mxu0 %v72
  %3092 = vmatprep.subr.mxu0 %v71
  %3093 = vmatpush2.msra.mxu0 %v70
  %3094 = vmatprep.subr.mxu0 %v69
  %3095 = vmatpush2.msra.mxu0 %v68
  %3096 = vmatprep.subr.mxu0 %v67
  %3097 = vmatpush2.msra.mxu0 %v66
  %3098 = vmatprep.subr.mxu0 %v65
  %3099 = vmatpush2.msra.mxu0 %v64
  %3100 = vmatprep.subr.mxu0 %v63
  %3101 = vmatpush2.msra.mxu0 %v62
  %3102 = vmatprep.subr.mxu0 %v61
  %3103 = vmatpush2.msra.mxu0 %v60
  %3104 = vmatprep.subr.mxu0 %v59
  %3105 = vmatpush2.msra.mxu0 %v58
  %3106 = vmatprep.subr.mxu0 %v57
  %3107 = vmatpush2.msra.mxu0 %v56
  %3108 = vmatprep.subr.mxu0 %v55
  %3109 = vmatpush2.msra.mxu0 %v54
  %3110 = vmatprep.mubr.f32.mxu0 %v3042
  %3111 = vmatmul.mubr.f32.gmra.mxu0 %v3040
  %v3112 = vpop.f32.mrf.mxu0
  %v3113 = vadd.f32 0.0, %v3112
  %v3114 = vpop.f32.mrf.mxu0
  %v3115 = vadd.f32 0.0, %v3114
  %3116 = vdwg.mxu0
  %v3117 = vmul.f32 %v3113, 0.125
  %v3118 = vmul.f32 %v3115, 0.125
  %v3119 = vsub.f32 %v3040, %v3117
  %v3120 = vsub.f32 %v3042, %v3118
  %v3121 = vmul.f32 %v3119, %v3119
  %v3122 = vmul.f32 %v3120, %v3120
  %3123 = vmatprep.subr.mxu0 %v53
  %3124 = vmatpush1.msra.mxu0 %v52
  %3125 = vmatprep.subr.mxu0 %v51
  %3126 = vmatpush1.msra.mxu0 %v50
  %3127 = vmatprep.subr.mxu0 %v49
  %3128 = vmatpush1.msra.mxu0 %v48
  %3129 = vmatprep.subr.mxu0 %v47
  %3130 = vmatpush1.msra.mxu0 %v46
  %3131 = vmatprep.subr.mxu0 %v45
  %3132 = vmatpush1.msra.mxu0 %v44
  %3133 = vmatprep.subr.mxu0 %v43
  %3134 = vmatpush1.msra.mxu0 %v42
  %3135 = vmatprep.subr.mxu0 %v41
  %3136 = vmatpush1.msra.mxu0 %v40
  %3137 = vmatprep.subr.mxu0 %v39
  %3138 = vmatpush1.msra.mxu0 %v38
  %3139 = vmatprep.subr.mxu0 %v37
  %3140 = vmatpush1.msra.mxu0 %v36
  %3141 = vmatprep.subr.mxu0 %v35
  %3142 = vmatpush1.msra.mxu0 %v34
  %3143 = vmatprep.subr.mxu0 %v33
  %3144 = vmatpush1.msra.mxu0 %v32
  %3145 = vmatprep.subr.mxu0 %v31
  %3146 = vmatpush1.msra.mxu0 %v30
  %3147 = vmatprep.subr.mxu0 %v29
  %3148 = vmatpush1.msra.mxu0 %v28
  %3149 = vmatprep.subr.mxu0 %v27
  %3150 = vmatpush1.msra.mxu0 %v26
  %3151 = vmatprep.subr.mxu0 %v25
  %3152 = vmatpush1.msra.mxu0 %v24
  %3153 = vmatprep.subr.mxu0 %v23
  %3154 = vmatpush1.msra.mxu0 %v22
  %3155 = vmatprep.subr.mxu0 %v85
  %3156 = vmatpush2.msra.mxu0 %v84
  %3157 = vmatprep.subr.mxu0 %v83
  %3158 = vmatpush2.msra.mxu0 %v82
  %3159 = vmatprep.subr.mxu0 %v81
  %3160 = vmatpush2.msra.mxu0 %v80
  %3161 = vmatprep.subr.mxu0 %v79
  %3162 = vmatpush2.msra.mxu0 %v78
  %3163 = vmatprep.subr.mxu0 %v77
  %3164 = vmatpush2.msra.mxu0 %v76
  %3165 = vmatprep.subr.mxu0 %v75
  %3166 = vmatpush2.msra.mxu0 %v74
  %3167 = vmatprep.subr.mxu0 %v73
  %3168 = vmatpush2.msra.mxu0 %v72
  %3169 = vmatprep.subr.mxu0 %v71
  %3170 = vmatpush2.msra.mxu0 %v70
  %3171 = vmatprep.subr.mxu0 %v69
  %3172 = vmatpush2.msra.mxu0 %v68
  %3173 = vmatprep.subr.mxu0 %v67
  %3174 = vmatpush2.msra.mxu0 %v66
  %3175 = vmatprep.subr.mxu0 %v65
  %3176 = vmatpush2.msra.mxu0 %v64
  %3177 = vmatprep.subr.mxu0 %v63
  %3178 = vmatpush2.msra.mxu0 %v62
  %3179 = vmatprep.subr.mxu0 %v61
  %3180 = vmatpush2.msra.mxu0 %v60
  %3181 = vmatprep.subr.mxu0 %v59
  %3182 = vmatpush2.msra.mxu0 %v58
  %3183 = vmatprep.subr.mxu0 %v57
  %3184 = vmatpush2.msra.mxu0 %v56
  %3185 = vmatprep.subr.mxu0 %v55
  %3186 = vmatpush2.msra.mxu0 %v54
  %3187 = vmatprep.mubr.f32.mxu0 %v3122
  %3188 = vmatmul.mubr.f32.gmra.mxu0 %v3121
  %v3189 = vpop.f32.mrf.mxu0
  %v3190 = vadd.f32 0.0, %v3189
  %v3191 = vpop.f32.mrf.mxu0
  %v3192 = vadd.f32 0.0, %v3191
  %3193 = vdwg.mxu0
  %v3194 = vmul.f32 %v3190, 0.125
  %v3195 = vmul.f32 %v3192, 0.125
  %v3196 = vadd.f32 %v3194, 1e-05
  %v3197 = vadd.f32 %v3195, 1e-05
  %v3198 = vrsqrt.pop %v3196
  %v3199 = vrsqrt.pop %v3197
  %v3200 = vmul.f32 %v3119, %v3198
  %v3201 = vmul.f32 %v3120, %v3199
  %v3202 = vmax.f32 %v3200, 0.0
  %v3203 = vmax.f32 %v3201, 0.0
  %v3204 = vpack.c.bf16 %v3202, %v3202
  %v3205 = vpack.c.bf16 %v3203, %v3203
  %s3206 = scalar_lea.vmem %s2, 1280
  %v3207 = vld [vmem:[%s3206] sm:$0xff]
  %v3208 = vld [vmem:[%s3206 + $0x8] sm:$0xff]
  %v3209 = vld [vmem:[%s3206 + $0x10] sm:$0xff]
  %v3210 = vld [vmem:[%s3206 + $0x18] sm:$0xff]
  %v3211 = vld [vmem:[%s3206 + $0x20] sm:$0xff]
  %v3212 = vld [vmem:[%s3206 + $0x28] sm:$0xff]
  %v3213 = vld [vmem:[%s3206 + $0x30] sm:$0xff]
  %v3214 = vld [vmem:[%s3206 + $0x38] sm:$0xff]
  %v3215 = vld [vmem:[%s3206 + $0x40] sm:$0xff]
  %v3216 = vld [vmem:[%s3206 + $0x48] sm:$0xff]
  %v3217 = vld [vmem:[%s3206 + $0x50] sm:$0xff]
  %v3218 = vld [vmem:[%s3206 + $0x58] sm:$0xff]
  %v3219 = vld [vmem:[%s3206 + $0x60] sm:$0xff]
  %v3220 = vld [vmem:[%s3206 + $0x68] sm:$0xff]
  %v3221 = vld [vmem:[%s3206 + $0x70] sm:$0xff]
  %v3222 = vld [vmem:[%s3206 + $0x78] sm:$0xff]
  %v3223 = vld [vmem:[%s3206 + $0x80] sm:$0xff]
  %v3224 = vld [vmem:[%s3206 + $0x88] sm:$0xff]
  %v3225 = vld [vmem:[%s3206 + $0x90] sm:$0xff]
  %v3226 = vld [vmem:[%s3206 + $0x98] sm:$0xff]
  %v3227 = vld [vmem:[%s3206 + $0xa0] sm:$0xff]
  %v3228 = vld [vmem:[%s3206 + $0xa8] sm:$0xff]
  %v3229 = vld [vmem:[%s3206 + $0xb0] sm:$0xff]
  %v3230 = vld [vmem:[%s3206 + $0xb8] sm:$0xff]
  %v3231 = vld [vmem:[%s3206 + $0xc0] sm:$0xff]
  %v3232 = vld [vmem:[%s3206 + $0xc8] sm:$0xff]
  %v3233 = vld [vmem:[%s3206 + $0xd0] sm:$0xff]
  %v3234 = vld [vmem:[%s3206 + $0xd8] sm:$0xff]
  %v3235 = vld [vmem:[%s3206 + $0xe0] sm:$0xff]
  %v3236 = vld [vmem:[%s3206 + $0xe8] sm:$0xff]
  %v3237 = vld [vmem:[%s3206 + $0xf0] sm:$0xff]
  %v3238 = vld [vmem:[%s3206 + $0xf8] sm:$0xff]
  %v3271 = vunpack.c.l.b16 %v3207
  %v3272 = vunpack.c.h.b16 %v3207
  %v3273 = vunpack.c.l.b16 %v3208
  %v3274 = vunpack.c.h.b16 %v3208
  %v3275 = vunpack.c.l.b16 %v3209
  %v3276 = vunpack.c.h.b16 %v3209
  %v3277 = vunpack.c.l.b16 %v3210
  %v3278 = vunpack.c.h.b16 %v3210
  %v3279 = vunpack.c.l.b16 %v3211
  %v3280 = vunpack.c.h.b16 %v3211
  %v3281 = vunpack.c.l.b16 %v3212
  %v3282 = vunpack.c.h.b16 %v3212
  %v3283 = vunpack.c.l.b16 %v3213
  %v3284 = vunpack.c.h.b16 %v3213
  %v3285 = vunpack.c.l.b16 %v3214
  %v3286 = vunpack.c.h.b16 %v3214
  %v3287 = vunpack.c.l.b16 %v3215
  %v3288 = vunpack.c.h.b16 %v3215
  %v3289 = vunpack.c.l.b16 %v3216
  %v3290 = vunpack.c.h.b16 %v3216
  %v3291 = vunpack.c.l.b16 %v3217
  %v3292 = vunpack.c.h.b16 %v3217
  %v3293 = vunpack.c.l.b16 %v3218
  %v3294 = vunpack.c.h.b16 %v3218
  %v3295 = vunpack.c.l.b16 %v3219
  %v3296 = vunpack.c.h.b16 %v3219
  %v3297 = vunpack.c.l.b16 %v3220
  %v3298 = vunpack.c.h.b16 %v3220
  %v3299 = vunpack.c.l.b16 %v3221
  %v3300 = vunpack.c.h.b16 %v3221
  %v3301 = vunpack.c.l.b16 %v3222
  %v3302 = vunpack.c.h.b16 %v3222
  %v3303 = vunpack.c.l.b16 %v3223
  %v3304 = vunpack.c.h.b16 %v3223
  %v3305 = vunpack.c.l.b16 %v3224
  %v3306 = vunpack.c.h.b16 %v3224
  %v3307 = vunpack.c.l.b16 %v3225
  %v3308 = vunpack.c.h.b16 %v3225
  %v3309 = vunpack.c.l.b16 %v3226
  %v3310 = vunpack.c.h.b16 %v3226
  %v3311 = vunpack.c.l.b16 %v3227
  %v3312 = vunpack.c.h.b16 %v3227
  %v3313 = vunpack.c.l.b16 %v3228
  %v3314 = vunpack.c.h.b16 %v3228
  %v3315 = vunpack.c.l.b16 %v3229
  %v3316 = vunpack.c.h.b16 %v3229
  %v3317 = vunpack.c.l.b16 %v3230
  %v3318 = vunpack.c.h.b16 %v3230
  %v3319 = vunpack.c.l.b16 %v3231
  %v3320 = vunpack.c.h.b16 %v3231
  %v3321 = vunpack.c.l.b16 %v3232
  %v3322 = vunpack.c.h.b16 %v3232
  %v3323 = vunpack.c.l.b16 %v3233
  %v3324 = vunpack.c.h.b16 %v3233
  %v3325 = vunpack.c.l.b16 %v3234
  %v3326 = vunpack.c.h.b16 %v3234
  %v3327 = vunpack.c.l.b16 %v3235
  %v3328 = vunpack.c.h.b16 %v3235
  %v3329 = vunpack.c.l.b16 %v3236
  %v3330 = vunpack.c.h.b16 %v3236
  %v3331 = vunpack.c.l.b16 %v3237
  %v3332 = vunpack.c.h.b16 %v3237
  %v3333 = vunpack.c.l.b16 %v3238
  %v3334 = vunpack.c.h.b16 %v3238
  %v3335 = vpack.c.b16 %v3273, %v3271
  %v3336 = vpack.c.b16 %v3274, %v3272
  %v3337 = vpack.c.b16 %v3277, %v3275
  %v3338 = vpack.c.b16 %v3278, %v3276
  %v3339 = vpack.c.b16 %v3281, %v3279
  %v3340 = vpack.c.b16 %v3282, %v3280
  %v3341 = vpack.c.b16 %v3285, %v3283
  %v3342 = vpack.c.b16 %v3286, %v3284
  %v3343 = vpack.c.b16 %v3289, %v3287
  %v3344 = vpack.c.b16 %v3290, %v3288
  %v3345 = vpack.c.b16 %v3293, %v3291
  %v3346 = vpack.c.b16 %v3294, %v3292
  %v3347 = vpack.c.b16 %v3297, %v3295
  %v3348 = vpack.c.b16 %v3298, %v3296
  %v3349 = vpack.c.b16 %v3301, %v3299
  %v3350 = vpack.c.b16 %v3302, %v3300
  %v3351 = vpack.c.b16 %v3305, %v3303
  %v3352 = vpack.c.b16 %v3306, %v3304
  %v3353 = vpack.c.b16 %v3309, %v3307
  %v3354 = vpack.c.b16 %v3310, %v3308
  %v3355 = vpack.c.b16 %v3313, %v3311
  %v3356 = vpack.c.b16 %v3314, %v3312
  %v3357 = vpack.c.b16 %v3317, %v3315
  %v3358 = vpack.c.b16 %v3318, %v3316
  %v3359 = vpack.c.b16 %v3321, %v3319
  %v3360 = vpack.c.b16 %v3322, %v3320
  %v3361 = vpack.c.b16 %v3325, %v3323
  %v3362 = vpack.c.b16 %v3326, %v3324
  %v3363 = vpack.c.b16 %v3329, %v3327
  %v3364 = vpack.c.b16 %v3330, %v3328
  %v3365 = vpack.c.b16 %v3333, %v3331
  %v3366 = vpack.c.b16 %v3334, %v3332
  %3399 = vmatprep.subr.bf16.mxu0 %v3350
  %3400 = vmatpush1.bf16.msra.mxu0 %v3349
  %3401 = vmatprep.subr.bf16.mxu0 %v3348
  %3402 = vmatpush1.bf16.msra.mxu0 %v3347
  %3403 = vmatprep.subr.bf16.mxu0 %v3346
  %3404 = vmatpush1.bf16.msra.mxu0 %v3345
  %3405 = vmatprep.subr.bf16.mxu0 %v3344
  %3406 = vmatpush1.bf16.msra.mxu0 %v3343
  %3407 = vmatprep.subr.bf16.mxu0 %v3342
  %3408 = vmatpush1.bf16.msra.mxu0 %v3341
  %3409 = vmatprep.subr.bf16.mxu0 %v3340
  %3410 = vmatpush1.bf16.msra.mxu0 %v3339
  %3411 = vmatprep.subr.bf16.mxu0 %v3338
  %3412 = vmatpush1.bf16.msra.mxu0 %v3337
  %3413 = vmatprep.subr.bf16.mxu0 %v3336
  %3414 = vmatpush1.bf16.msra.mxu0 %v3335
  %3415 = vmatprep.subr.bf16.mxu0 %v3366
  %3416 = vmatpush2.bf16.msra.mxu0 %v3365
  %3417 = vmatprep.subr.bf16.mxu0 %v3364
  %3418 = vmatpush2.bf16.msra.mxu0 %v3363
  %3419 = vmatprep.subr.bf16.mxu0 %v3362
  %3420 = vmatpush2.bf16.msra.mxu0 %v3361
  %3421 = vmatprep.subr.bf16.mxu0 %v3360
  %3422 = vmatpush2.bf16.msra.mxu0 %v3359
  %3423 = vmatprep.subr.bf16.mxu0 %v3358
  %3424 = vmatpush2.bf16.msra.mxu0 %v3357
  %3425 = vmatprep.subr.bf16.mxu0 %v3356
  %3426 = vmatpush2.bf16.msra.mxu0 %v3355
  %3427 = vmatprep.subr.bf16.mxu0 %v3354
  %3428 = vmatpush2.bf16.msra.mxu0 %v3353
  %3429 = vmatprep.subr.bf16.mxu0 %v3352
  %3430 = vmatpush2.bf16.msra.mxu0 %v3351
  %3431 = vmatprep.mubr.bf16.mxu0 %v3205
  %3432 = vmatmul.mubr.bf16.gmra.mxu0 %v3204
  %v3433 = vpop.f32.mrf.mxu0
  %v3434 = vadd.f32 0.0, %v3433
  %v3435 = vpop.f32.mrf.mxu0
  %v3436 = vadd.f32 0.0, %v3435
  %v3437 = vpop.f32.mrf.mxu0
  %v3438 = vpop.f32.mrf.mxu0
  %3439 = vdwg.mxu0
  %3440 = vmatprep.subr.mxu0 %v53
  %3441 = vmatpush1.msra.mxu0 %v52
  %3442 = vmatprep.subr.mxu0 %v51
  %3443 = vmatpush1.msra.mxu0 %v50
  %3444 = vmatprep.subr.mxu0 %v49
  %3445 = vmatpush1.msra.mxu0 %v48
  %3446 = vmatprep.subr.mxu0 %v47
  %3447 = vmatpush1.msra.mxu0 %v46
  %3448 = vmatprep.subr.mxu0 %v45
  %3449 = vmatpush1.msra.mxu0 %v44
  %3450 = vmatprep.subr.mxu0 %v43
  %3451 = vmatpush1.msra.mxu0 %v42
  %3452 = vmatprep.subr.mxu0 %v41
  %3453 = vmatpush1.msra.mxu0 %v40
  %3454 = vmatprep.subr.mxu0 %v39
  %3455 = vmatpush1.msra.mxu0 %v38
  %3456 = vmatprep.subr.mxu0 %v37
  %3457 = vmatpush1.msra.mxu0 %v36
  %3458 = vmatprep.subr.mxu0 %v35
  %3459 = vmatpush1.msra.mxu0 %v34
  %3460 = vmatprep.subr.mxu0 %v33
  %3461 = vmatpush1.msra.mxu0 %v32
  %3462 = vmatprep.subr.mxu0 %v31
  %3463 = vmatpush1.msra.mxu0 %v30
  %3464 = vmatprep.subr.mxu0 %v29
  %3465 = vmatpush1.msra.mxu0 %v28
  %3466 = vmatprep.subr.mxu0 %v27
  %3467 = vmatpush1.msra.mxu0 %v26
  %3468 = vmatprep.subr.mxu0 %v25
  %3469 = vmatpush1.msra.mxu0 %v24
  %3470 = vmatprep.subr.mxu0 %v23
  %3471 = vmatpush1.msra.mxu0 %v22
  %3472 = vmatprep.subr.mxu0 %v85
  %3473 = vmatpush2.msra.mxu0 %v84
  %3474 = vmatprep.subr.mxu0 %v83
  %3475 = vmatpush2.msra.mxu0 %v82
  %3476 = vmatprep.subr.mxu0 %v81
  %3477 = vmatpush2.msra.mxu0 %v80
  %3478 = vmatprep.subr.mxu0 %v79
  %3479 = vmatpush2.msra.mxu0 %v78
  %3480 = vmatprep.subr.mxu0 %v77
  %3481 = vmatpush2.msra.mxu0 %v76
  %3482 = vmatprep.subr.mxu0 %v75
  %3483 = vmatpush2.msra.mxu0 %v74
  %3484 = vmatprep.subr.mxu0 %v73
  %3485 = vmatpush2.msra.mxu0 %v72
  %3486 = vmatprep.subr.mxu0 %v71
  %3487 = vmatpush2.msra.mxu0 %v70
  %3488 = vmatprep.subr.mxu0 %v69
  %3489 = vmatpush2.msra.mxu0 %v68
  %3490 = vmatprep.subr.mxu0 %v67
  %3491 = vmatpush2.msra.mxu0 %v66
  %3492 = vmatprep.subr.mxu0 %v65
  %3493 = vmatpush2.msra.mxu0 %v64
  %3494 = vmatprep.subr.mxu0 %v63
  %3495 = vmatpush2.msra.mxu0 %v62
  %3496 = vmatprep.subr.mxu0 %v61
  %3497 = vmatpush2.msra.mxu0 %v60
  %3498 = vmatprep.subr.mxu0 %v59
  %3499 = vmatpush2.msra.mxu0 %v58
  %3500 = vmatprep.subr.mxu0 %v57
  %3501 = vmatpush2.msra.mxu0 %v56
  %3502 = vmatprep.subr.mxu0 %v55
  %3503 = vmatpush2.msra.mxu0 %v54
  %3504 = vmatprep.mubr.f32.mxu0 %v3436
  %3505 = vmatmul.mubr.f32.gmra.mxu0 %v3434
  %v3506 = vpop.f32.mrf.mxu0
  %v3507 = vadd.f32 0.0, %v3506
  %v3508 = vpop.f32.mrf.mxu0
  %v3509 = vadd.f32 0.0, %v3508
  %3510 = vdwg.mxu0
  %v3511 = vmul.f32 %v3507, 0.125
  %v3512 = vmul.f32 %v3509, 0.125
  %v3513 = vsub.f32 %v3434, %v3511
  %v3514 = vsub.f32 %v3436, %v3512
  %v3515 = vmul.f32 %v3513, %v3513
  %v3516 = vmul.f32 %v3514, %v3514
  %3517 = vmatprep.subr.mxu0 %v53
  %3518 = vmatpush1.msra.mxu0 %v52
  %3519 = vmatprep.subr.mxu0 %v51
  %3520 = vmatpush1.msra.mxu0 %v50
  %3521 = vmatprep.subr.mxu0 %v49
  %3522 = vmatpush1.msra.mxu0 %v48
  %3523 = vmatprep.subr.mxu0 %v47
  %3524 = vmatpush1.msra.mxu0 %v46
  %3525 = vmatprep.subr.mxu0 %v45
  %3526 = vmatpush1.msra.mxu0 %v44
  %3527 = vmatprep.subr.mxu0 %v43
  %3528 = vmatpush1.msra.mxu0 %v42
  %3529 = vmatprep.subr.mxu0 %v41
  %3530 = vmatpush1.msra.mxu0 %v40
  %3531 = vmatprep.subr.mxu0 %v39
  %3532 = vmatpush1.msra.mxu0 %v38
  %3533 = vmatprep.subr.mxu0 %v37
  %3534 = vmatpush1.msra.mxu0 %v36
  %3535 = vmatprep.subr.mxu0 %v35
  %3536 = vmatpush1.msra.mxu0 %v34
  %3537 = vmatprep.subr.mxu0 %v33
  %3538 = vmatpush1.msra.mxu0 %v32
  %3539 = vmatprep.subr.mxu0 %v31
  %3540 = vmatpush1.msra.mxu0 %v30
  %3541 = vmatprep.subr.mxu0 %v29
  %3542 = vmatpush1.msra.mxu0 %v28
  %3543 = vmatprep.subr.mxu0 %v27
  %3544 = vmatpush1.msra.mxu0 %v26
  %3545 = vmatprep.subr.mxu0 %v25
  %3546 = vmatpush1.msra.mxu0 %v24
  %3547 = vmatprep.subr.mxu0 %v23
  %3548 = vmatpush1.msra.mxu0 %v22
  %3549 = vmatprep.subr.mxu0 %v85
  %3550 = vmatpush2.msra.mxu0 %v84
  %3551 = vmatprep.subr.mxu0 %v83
  %3552 = vmatpush2.msra.mxu0 %v82
  %3553 = vmatprep.subr.mxu0 %v81
  %3554 = vmatpush2.msra.mxu0 %v80
  %3555 = vmatprep.subr.mxu0 %v79
  %3556 = vmatpush2.msra.mxu0 %v78
  %3557 = vmatprep.subr.mxu0 %v77
  %3558 = vmatpush2.msra.mxu0 %v76
  %3559 = vmatprep.subr.mxu0 %v75
  %3560 = vmatpush2.msra.mxu0 %v74
  %3561 = vmatprep.subr.mxu0 %v73
  %3562 = vmatpush2.msra.mxu0 %v72
  %3563 = vmatprep.subr.mxu0 %v71
  %3564 = vmatpush2.msra.mxu0 %v70
  %3565 = vmatprep.subr.mxu0 %v69
  %3566 = vmatpush2.msra.mxu0 %v68
  %3567 = vmatprep.subr.mxu0 %v67
  %3568 = vmatpush2.msra.mxu0 %v66
  %3569 = vmatprep.subr.mxu0 %v65
  %3570 = vmatpush2.msra.mxu0 %v64
  %3571 = vmatprep.subr.mxu0 %v63
  %3572 = vmatpush2.msra.mxu0 %v62
  %3573 = vmatprep.subr.mxu0 %v61
  %3574 = vmatpush2.msra.mxu0 %v60
  %3575 = vmatprep.subr.mxu0 %v59
  %3576 = vmatpush2.msra.mxu0 %v58
  %3577 = vmatprep.subr.mxu0 %v57
  %3578 = vmatpush2.msra.mxu0 %v56
  %3579 = vmatprep.subr.mxu0 %v55
  %3580 = vmatpush2.msra.mxu0 %v54
  %3581 = vmatprep.mubr.f32.mxu0 %v3516
  %3582 = vmatmul.mubr.f32.gmra.mxu0 %v3515
  %v3583 = vpop.f32.mrf.mxu0
  %v3584 = vadd.f32 0.0, %v3583
  %v3585 = vpop.f32.mrf.mxu0
  %v3586 = vadd.f32 0.0, %v3585
  %3587 = vdwg.mxu0
  %v3588 = vmul.f32 %v3584, 0.125
  %v3589 = vmul.f32 %v3586, 0.125
  %v3590 = vadd.f32 %v3588, 1e-05
  %v3591 = vadd.f32 %v3589, 1e-05
  %v3592 = vrsqrt.pop %v3590
  %v3593 = vrsqrt.pop %v3591
  %v3594 = vmul.f32 %v3513, %v3592
  %v3595 = vmul.f32 %v3514, %v3593
  %v3596 = vadd.f32 %v2808, %v3594
  %v3597 = vadd.f32 %v2809, %v3595
  %v3598 = vpack.c.bf16 %v3596, %v3596
  %v3599 = vpack.c.bf16 %v3597, %v3597
  %s3600 = scalar_lea.vmem %s2, 1536
  %v3601 = vld [vmem:[%s3600] sm:$0xff]
  %v3602 = vld [vmem:[%s3600 + $0x8] sm:$0xff]
  %v3603 = vld [vmem:[%s3600 + $0x10] sm:$0xff]
  %v3604 = vld [vmem:[%s3600 + $0x18] sm:$0xff]
  %v3605 = vld [vmem:[%s3600 + $0x20] sm:$0xff]
  %v3606 = vld [vmem:[%s3600 + $0x28] sm:$0xff]
  %v3607 = vld [vmem:[%s3600 + $0x30] sm:$0xff]
  %v3608 = vld [vmem:[%s3600 + $0x38] sm:$0xff]
  %v3609 = vld [vmem:[%s3600 + $0x40] sm:$0xff]
  %v3610 = vld [vmem:[%s3600 + $0x48] sm:$0xff]
  %v3611 = vld [vmem:[%s3600 + $0x50] sm:$0xff]
  %v3612 = vld [vmem:[%s3600 + $0x58] sm:$0xff]
  %v3613 = vld [vmem:[%s3600 + $0x60] sm:$0xff]
  %v3614 = vld [vmem:[%s3600 + $0x68] sm:$0xff]
  %v3615 = vld [vmem:[%s3600 + $0x70] sm:$0xff]
  %v3616 = vld [vmem:[%s3600 + $0x78] sm:$0xff]
  %v3617 = vld [vmem:[%s3600 + $0x80] sm:$0xff]
  %v3618 = vld [vmem:[%s3600 + $0x88] sm:$0xff]
  %v3619 = vld [vmem:[%s3600 + $0x90] sm:$0xff]
  %v3620 = vld [vmem:[%s3600 + $0x98] sm:$0xff]
  %v3621 = vld [vmem:[%s3600 + $0xa0] sm:$0xff]
  %v3622 = vld [vmem:[%s3600 + $0xa8] sm:$0xff]
  %v3623 = vld [vmem:[%s3600 + $0xb0] sm:$0xff]
  %v3624 = vld [vmem:[%s3600 + $0xb8] sm:$0xff]
  %v3625 = vld [vmem:[%s3600 + $0xc0] sm:$0xff]
  %v3626 = vld [vmem:[%s3600 + $0xc8] sm:$0xff]
  %v3627 = vld [vmem:[%s3600 + $0xd0] sm:$0xff]
  %v3628 = vld [vmem:[%s3600 + $0xd8] sm:$0xff]
  %v3629 = vld [vmem:[%s3600 + $0xe0] sm:$0xff]
  %v3630 = vld [vmem:[%s3600 + $0xe8] sm:$0xff]
  %v3631 = vld [vmem:[%s3600 + $0xf0] sm:$0xff]
  %v3632 = vld [vmem:[%s3600 + $0xf8] sm:$0xff]
  %v3665 = vunpack.c.l.b16 %v3601
  %v3666 = vunpack.c.h.b16 %v3601
  %v3667 = vunpack.c.l.b16 %v3602
  %v3668 = vunpack.c.h.b16 %v3602
  %v3669 = vunpack.c.l.b16 %v3603
  %v3670 = vunpack.c.h.b16 %v3603
  %v3671 = vunpack.c.l.b16 %v3604
  %v3672 = vunpack.c.h.b16 %v3604
  %v3673 = vunpack.c.l.b16 %v3605
  %v3674 = vunpack.c.h.b16 %v3605
  %v3675 = vunpack.c.l.b16 %v3606
  %v3676 = vunpack.c.h.b16 %v3606
  %v3677 = vunpack.c.l.b16 %v3607
  %v3678 = vunpack.c.h.b16 %v3607
  %v3679 = vunpack.c.l.b16 %v3608
  %v3680 = vunpack.c.h.b16 %v3608
  %v3681 = vunpack.c.l.b16 %v3609
  %v3682 = vunpack.c.h.b16 %v3609
  %v3683 = vunpack.c.l.b16 %v3610
  %v3684 = vunpack.c.h.b16 %v3610
  %v3685 = vunpack.c.l.b16 %v3611
  %v3686 = vunpack.c.h.b16 %v3611
  %v3687 = vunpack.c.l.b16 %v3612
  %v3688 = vunpack.c.h.b16 %v3612
  %v3689 = vunpack.c.l.b16 %v3613
  %v3690 = vunpack.c.h.b16 %v3613
  %v3691 = vunpack.c.l.b16 %v3614
  %v3692 = vunpack.c.h.b16 %v3614
  %v3693 = vunpack.c.l.b16 %v3615
  %v3694 = vunpack.c.h.b16 %v3615
  %v3695 = vunpack.c.l.b16 %v3616
  %v3696 = vunpack.c.h.b16 %v3616
  %v3697 = vunpack.c.l.b16 %v3617
  %v3698 = vunpack.c.h.b16 %v3617
  %v3699 = vunpack.c.l.b16 %v3618
  %v3700 = vunpack.c.h.b16 %v3618
  %v3701 = vunpack.c.l.b16 %v3619
  %v3702 = vunpack.c.h.b16 %v3619
  %v3703 = vunpack.c.l.b16 %v3620
  %v3704 = vunpack.c.h.b16 %v3620
  %v3705 = vunpack.c.l.b16 %v3621
  %v3706 = vunpack.c.h.b16 %v3621
  %v3707 = vunpack.c.l.b16 %v3622
  %v3708 = vunpack.c.h.b16 %v3622
  %v3709 = vunpack.c.l.b16 %v3623
  %v3710 = vunpack.c.h.b16 %v3623
  %v3711 = vunpack.c.l.b16 %v3624
  %v3712 = vunpack.c.h.b16 %v3624
  %v3713 = vunpack.c.l.b16 %v3625
  %v3714 = vunpack.c.h.b16 %v3625
  %v3715 = vunpack.c.l.b16 %v3626
  %v3716 = vunpack.c.h.b16 %v3626
  %v3717 = vunpack.c.l.b16 %v3627
  %v3718 = vunpack.c.h.b16 %v3627
  %v3719 = vunpack.c.l.b16 %v3628
  %v3720 = vunpack.c.h.b16 %v3628
  %v3721 = vunpack.c.l.b16 %v3629
  %v3722 = vunpack.c.h.b16 %v3629
  %v3723 = vunpack.c.l.b16 %v3630
  %v3724 = vunpack.c.h.b16 %v3630
  %v3725 = vunpack.c.l.b16 %v3631
  %v3726 = vunpack.c.h.b16 %v3631
  %v3727 = vunpack.c.l.b16 %v3632
  %v3728 = vunpack.c.h.b16 %v3632
  %v3729 = vpack.c.b16 %v3667, %v3665
  %v3730 = vpack.c.b16 %v3668, %v3666
  %v3731 = vpack.c.b16 %v3671, %v3669
  %v3732 = vpack.c.b16 %v3672, %v3670
  %v3733 = vpack.c.b16 %v3675, %v3673
  %v3734 = vpack.c.b16 %v3676, %v3674
  %v3735 = vpack.c.b16 %v3679, %v3677
  %v3736 = vpack.c.b16 %v3680, %v3678
  %v3737 = vpack.c.b16 %v3683, %v3681
  %v3738 = vpack.c.b16 %v3684, %v3682
  %v3739 = vpack.c.b16 %v3687, %v3685
  %v3740 = vpack.c.b16 %v3688, %v3686
  %v3741 = vpack.c.b16 %v3691, %v3689
  %v3742 = vpack.c.b16 %v3692, %v3690
  %v3743 = vpack.c.b16 %v3695, %v3693
  %v3744 = vpack.c.b16 %v3696, %v3694
  %v3745 = vpack.c.b16 %v3699, %v3697
  %v3746 = vpack.c.b16 %v3700, %v3698
  %v3747 = vpack.c.b16 %v3703, %v3701
  %v3748 = vpack.c.b16 %v3704, %v3702
  %v3749 = vpack.c.b16 %v3707, %v3705
  %v3750 = vpack.c.b16 %v3708, %v3706
  %v3751 = vpack.c.b16 %v3711, %v3709
  %v3752 = vpack.c.b16 %v3712, %v3710
  %v3753 = vpack.c.b16 %v3715, %v3713
  %v3754 = vpack.c.b16 %v3716, %v3714
  %v3755 = vpack.c.b16 %v3719, %v3717
  %v3756 = vpack.c.b16 %v3720, %v3718
  %v3757 = vpack.c.b16 %v3723, %v3721
  %v3758 = vpack.c.b16 %v3724, %v3722
  %v3759 = vpack.c.b16 %v3727, %v3725
  %v3760 = vpack.c.b16 %v3728, %v3726
  %3793 = vmatprep.subr.bf16.mxu0 %v3744
  %3794 = vmatpush1.bf16.msra.mxu0 %v3743
  %3795 = vmatprep.subr.bf16.mxu0 %v3742
  %3796 = vmatpush1.bf16.msra.mxu0 %v3741
  %3797 = vmatprep.subr.bf16.mxu0 %v3740
  %3798 = vmatpush1.bf16.msra.mxu0 %v3739
  %3799 = vmatprep.subr.bf16.mxu0 %v3738
  %3800 = vmatpush1.bf16.msra.mxu0 %v3737
  %3801 = vmatprep.subr.bf16.mxu0 %v3736
  %3802 = vmatpush1.bf16.msra.mxu0 %v3735
  %3803 = vmatprep.subr.bf16.mxu0 %v3734
  %3804 = vmatpush1.bf16.msra.mxu0 %v3733
  %3805 = vmatprep.subr.bf16.mxu0 %v3732
  %3806 = vmatpush1.bf16.msra.mxu0 %v3731
  %3807 = vmatprep.subr.bf16.mxu0 %v3730
  %3808 = vmatpush1.bf16.msra.mxu0 %v3729
  %3809 = vmatprep.subr.bf16.mxu0 %v3760
  %3810 = vmatpush2.bf16.msra.mxu0 %v3759
  %3811 = vmatprep.subr.bf16.mxu0 %v3758
  %3812 = vmatpush2.bf16.msra.mxu0 %v3757
  %3813 = vmatprep.subr.bf16.mxu0 %v3756
  %3814 = vmatpush2.bf16.msra.mxu0 %v3755
  %3815 = vmatprep.subr.bf16.mxu0 %v3754
  %3816 = vmatpush2.bf16.msra.mxu0 %v3753
  %3817 = vmatprep.subr.bf16.mxu0 %v3752
  %3818 = vmatpush2.bf16.msra.mxu0 %v3751
  %3819 = vmatprep.subr.bf16.mxu0 %v3750
  %3820 = vmatpush2.bf16.msra.mxu0 %v3749
  %3821 = vmatprep.subr.bf16.mxu0 %v3748
  %3822 = vmatpush2.bf16.msra.mxu0 %v3747
  %3823 = vmatprep.subr.bf16.mxu0 %v3746
  %3824 = vmatpush2.bf16.msra.mxu0 %v3745
  %3825 = vmatprep.mubr.bf16.mxu0 %v3599
  %3826 = vmatmul.mubr.bf16.gmra.mxu0 %v3598
  %v3827 = vpop.f32.mrf.mxu0
  %v3828 = vadd.f32 0.0, %v3827
  %v3829 = vpop.f32.mrf.mxu0
  %v3830 = vadd.f32 0.0, %v3829
  %v3831 = vpop.f32.mrf.mxu0
  %v3832 = vpop.f32.mrf.mxu0
  %3833 = vdwg.mxu0
  %3834 = vmatprep.subr.mxu0 %v53
  %3835 = vmatpush1.msra.mxu0 %v52
  %3836 = vmatprep.subr.mxu0 %v51
  %3837 = vmatpush1.msra.mxu0 %v50
  %3838 = vmatprep.subr.mxu0 %v49
  %3839 = vmatpush1.msra.mxu0 %v48
  %3840 = vmatprep.subr.mxu0 %v47
  %3841 = vmatpush1.msra.mxu0 %v46
  %3842 = vmatprep.subr.mxu0 %v45
  %3843 = vmatpush1.msra.mxu0 %v44
  %3844 = vmatprep.subr.mxu0 %v43
  %3845 = vmatpush1.msra.mxu0 %v42
  %3846 = vmatprep.subr.mxu0 %v41
  %3847 = vmatpush1.msra.mxu0 %v40
  %3848 = vmatprep.subr.mxu0 %v39
  %3849 = vmatpush1.msra.mxu0 %v38
  %3850 = vmatprep.subr.mxu0 %v37
  %3851 = vmatpush1.msra.mxu0 %v36
  %3852 = vmatprep.subr.mxu0 %v35
  %3853 = vmatpush1.msra.mxu0 %v34
  %3854 = vmatprep.subr.mxu0 %v33
  %3855 = vmatpush1.msra.mxu0 %v32
  %3856 = vmatprep.subr.mxu0 %v31
  %3857 = vmatpush1.msra.mxu0 %v30
  %3858 = vmatprep.subr.mxu0 %v29
  %3859 = vmatpush1.msra.mxu0 %v28
  %3860 = vmatprep.subr.mxu0 %v27
  %3861 = vmatpush1.msra.mxu0 %v26
  %3862 = vmatprep.subr.mxu0 %v25
  %3863 = vmatpush1.msra.mxu0 %v24
  %3864 = vmatprep.subr.mxu0 %v23
  %3865 = vmatpush1.msra.mxu0 %v22
  %3866 = vmatprep.subr.mxu0 %v85
  %3867 = vmatpush2.msra.mxu0 %v84
  %3868 = vmatprep.subr.mxu0 %v83
  %3869 = vmatpush2.msra.mxu0 %v82
  %3870 = vmatprep.subr.mxu0 %v81
  %3871 = vmatpush2.msra.mxu0 %v80
  %3872 = vmatprep.subr.mxu0 %v79
  %3873 = vmatpush2.msra.mxu0 %v78
  %3874 = vmatprep.subr.mxu0 %v77
  %3875 = vmatpush2.msra.mxu0 %v76
  %3876 = vmatprep.subr.mxu0 %v75
  %3877 = vmatpush2.msra.mxu0 %v74
  %3878 = vmatprep.subr.mxu0 %v73
  %3879 = vmatpush2.msra.mxu0 %v72
  %3880 = vmatprep.subr.mxu0 %v71
  %3881 = vmatpush2.msra.mxu0 %v70
  %3882 = vmatprep.subr.mxu0 %v69
  %3883 = vmatpush2.msra.mxu0 %v68
  %3884 = vmatprep.subr.mxu0 %v67
  %3885 = vmatpush2.msra.mxu0 %v66
  %3886 = vmatprep.subr.mxu0 %v65
  %3887 = vmatpush2.msra.mxu0 %v64
  %3888 = vmatprep.subr.mxu0 %v63
  %3889 = vmatpush2.msra.mxu0 %v62
  %3890 = vmatprep.subr.mxu0 %v61
  %3891 = vmatpush2.msra.mxu0 %v60
  %3892 = vmatprep.subr.mxu0 %v59
  %3893 = vmatpush2.msra.mxu0 %v58
  %3894 = vmatprep.subr.mxu0 %v57
  %3895 = vmatpush2.msra.mxu0 %v56
  %3896 = vmatprep.subr.mxu0 %v55
  %3897 = vmatpush2.msra.mxu0 %v54
  %3898 = vmatprep.mubr.f32.mxu0 %v3830
  %3899 = vmatmul.mubr.f32.gmra.mxu0 %v3828
  %v3900 = vpop.f32.mrf.mxu0
  %v3901 = vadd.f32 0.0, %v3900
  %v3902 = vpop.f32.mrf.mxu0
  %v3903 = vadd.f32 0.0, %v3902
  %3904 = vdwg.mxu0
  %v3905 = vmul.f32 %v3901, 0.125
  %v3906 = vmul.f32 %v3903, 0.125
  %v3907 = vsub.f32 %v3828, %v3905
  %v3908 = vsub.f32 %v3830, %v3906
  %v3909 = vmul.f32 %v3907, %v3907
  %v3910 = vmul.f32 %v3908, %v3908
  %3911 = vmatprep.subr.mxu0 %v53
  %3912 = vmatpush1.msra.mxu0 %v52
  %3913 = vmatprep.subr.mxu0 %v51
  %3914 = vmatpush1.msra.mxu0 %v50
  %3915 = vmatprep.subr.mxu0 %v49
  %3916 = vmatpush1.msra.mxu0 %v48
  %3917 = vmatprep.subr.mxu0 %v47
  %3918 = vmatpush1.msra.mxu0 %v46
  %3919 = vmatprep.subr.mxu0 %v45
  %3920 = vmatpush1.msra.mxu0 %v44
  %3921 = vmatprep.subr.mxu0 %v43
  %3922 = vmatpush1.msra.mxu0 %v42
  %3923 = vmatprep.subr.mxu0 %v41
  %3924 = vmatpush1.msra.mxu0 %v40
  %3925 = vmatprep.subr.mxu0 %v39
  %3926 = vmatpush1.msra.mxu0 %v38
  %3927 = vmatprep.subr.mxu0 %v37
  %3928 = vmatpush1.msra.mxu0 %v36
  %3929 = vmatprep.subr.mxu0 %v35
  %3930 = vmatpush1.msra.mxu0 %v34
  %3931 = vmatprep.subr.mxu0 %v33
  %3932 = vmatpush1.msra.mxu0 %v32
  %3933 = vmatprep.subr.mxu0 %v31
  %3934 = vmatpush1.msra.mxu0 %v30
  %3935 = vmatprep.subr.mxu0 %v29
  %3936 = vmatpush1.msra.mxu0 %v28
  %3937 = vmatprep.subr.mxu0 %v27
  %3938 = vmatpush1.msra.mxu0 %v26
  %3939 = vmatprep.subr.mxu0 %v25
  %3940 = vmatpush1.msra.mxu0 %v24
  %3941 = vmatprep.subr.mxu0 %v23
  %3942 = vmatpush1.msra.mxu0 %v22
  %3943 = vmatprep.subr.mxu0 %v85
  %3944 = vmatpush2.msra.mxu0 %v84
  %3945 = vmatprep.subr.mxu0 %v83
  %3946 = vmatpush2.msra.mxu0 %v82
  %3947 = vmatprep.subr.mxu0 %v81
  %3948 = vmatpush2.msra.mxu0 %v80
  %3949 = vmatprep.subr.mxu0 %v79
  %3950 = vmatpush2.msra.mxu0 %v78
  %3951 = vmatprep.subr.mxu0 %v77
  %3952 = vmatpush2.msra.mxu0 %v76
  %3953 = vmatprep.subr.mxu0 %v75
  %3954 = vmatpush2.msra.mxu0 %v74
  %3955 = vmatprep.subr.mxu0 %v73
  %3956 = vmatpush2.msra.mxu0 %v72
  %3957 = vmatprep.subr.mxu0 %v71
  %3958 = vmatpush2.msra.mxu0 %v70
  %3959 = vmatprep.subr.mxu0 %v69
  %3960 = vmatpush2.msra.mxu0 %v68
  %3961 = vmatprep.subr.mxu0 %v67
  %3962 = vmatpush2.msra.mxu0 %v66
  %3963 = vmatprep.subr.mxu0 %v65
  %3964 = vmatpush2.msra.mxu0 %v64
  %3965 = vmatprep.subr.mxu0 %v63
  %3966 = vmatpush2.msra.mxu0 %v62
  %3967 = vmatprep.subr.mxu0 %v61
  %3968 = vmatpush2.msra.mxu0 %v60
  %3969 = vmatprep.subr.mxu0 %v59
  %3970 = vmatpush2.msra.mxu0 %v58
  %3971 = vmatprep.subr.mxu0 %v57
  %3972 = vmatpush2.msra.mxu0 %v56
  %3973 = vmatprep.subr.mxu0 %v55
  %3974 = vmatpush2.msra.mxu0 %v54
  %3975 = vmatprep.mubr.f32.mxu0 %v3910
  %3976 = vmatmul.mubr.f32.gmra.mxu0 %v3909
  %v3977 = vpop.f32.mrf.mxu0
  %v3978 = vadd.f32 0.0, %v3977
  %v3979 = vpop.f32.mrf.mxu0
  %v3980 = vadd.f32 0.0, %v3979
  %3981 = vdwg.mxu0
  %v3982 = vmul.f32 %v3978, 0.125
  %v3983 = vmul.f32 %v3980, 0.125
  %v3984 = vadd.f32 %v3982, 1e-05
  %v3985 = vadd.f32 %v3983, 1e-05
  %v3986 = vrsqrt.pop %v3984
  %v3987 = vrsqrt.pop %v3985
  %v3988 = vmul.f32 %v3907, %v3986
  %v3989 = vmul.f32 %v3908, %v3987
  %v3990 = vmax.f32 %v3988, 0.0
  %v3991 = vmax.f32 %v3989, 0.0
  %v3992 = vpack.c.bf16 %v3990, %v3990
  %v3993 = vpack.c.bf16 %v3991, %v3991
  %s3994 = scalar_lea.vmem %s2, 1792
  %v3995 = vld [vmem:[%s3994] sm:$0xff]
  %v3996 = vld [vmem:[%s3994 + $0x8] sm:$0xff]
  %v3997 = vld [vmem:[%s3994 + $0x10] sm:$0xff]
  %v3998 = vld [vmem:[%s3994 + $0x18] sm:$0xff]
  %v3999 = vld [vmem:[%s3994 + $0x20] sm:$0xff]
  %v4000 = vld [vmem:[%s3994 + $0x28] sm:$0xff]
  %v4001 = vld [vmem:[%s3994 + $0x30] sm:$0xff]
  %v4002 = vld [vmem:[%s3994 + $0x38] sm:$0xff]
  %v4003 = vld [vmem:[%s3994 + $0x40] sm:$0xff]
  %v4004 = vld [vmem:[%s3994 + $0x48] sm:$0xff]
  %v4005 = vld [vmem:[%s3994 + $0x50] sm:$0xff]
  %v4006 = vld [vmem:[%s3994 + $0x58] sm:$0xff]
  %v4007 = vld [vmem:[%s3994 + $0x60] sm:$0xff]
  %v4008 = vld [vmem:[%s3994 + $0x68] sm:$0xff]
  %v4009 = vld [vmem:[%s3994 + $0x70] sm:$0xff]
  %v4010 = vld [vmem:[%s3994 + $0x78] sm:$0xff]
  %v4011 = vld [vmem:[%s3994 + $0x80] sm:$0xff]
  %v4012 = vld [vmem:[%s3994 + $0x88] sm:$0xff]
  %v4013 = vld [vmem:[%s3994 + $0x90] sm:$0xff]
  %v4014 = vld [vmem:[%s3994 + $0x98] sm:$0xff]
  %v4015 = vld [vmem:[%s3994 + $0xa0] sm:$0xff]
  %v4016 = vld [vmem:[%s3994 + $0xa8] sm:$0xff]
  %v4017 = vld [vmem:[%s3994 + $0xb0] sm:$0xff]
  %v4018 = vld [vmem:[%s3994 + $0xb8] sm:$0xff]
  %v4019 = vld [vmem:[%s3994 + $0xc0] sm:$0xff]
  %v4020 = vld [vmem:[%s3994 + $0xc8] sm:$0xff]
  %v4021 = vld [vmem:[%s3994 + $0xd0] sm:$0xff]
  %v4022 = vld [vmem:[%s3994 + $0xd8] sm:$0xff]
  %v4023 = vld [vmem:[%s3994 + $0xe0] sm:$0xff]
  %v4024 = vld [vmem:[%s3994 + $0xe8] sm:$0xff]
  %v4025 = vld [vmem:[%s3994 + $0xf0] sm:$0xff]
  %v4026 = vld [vmem:[%s3994 + $0xf8] sm:$0xff]
  %v4059 = vunpack.c.l.b16 %v3995
  %v4060 = vunpack.c.h.b16 %v3995
  %v4061 = vunpack.c.l.b16 %v3996
  %v4062 = vunpack.c.h.b16 %v3996
  %v4063 = vunpack.c.l.b16 %v3997
  %v4064 = vunpack.c.h.b16 %v3997
  %v4065 = vunpack.c.l.b16 %v3998
  %v4066 = vunpack.c.h.b16 %v3998
  %v4067 = vunpack.c.l.b16 %v3999
  %v4068 = vunpack.c.h.b16 %v3999
  %v4069 = vunpack.c.l.b16 %v4000
  %v4070 = vunpack.c.h.b16 %v4000
  %v4071 = vunpack.c.l.b16 %v4001
  %v4072 = vunpack.c.h.b16 %v4001
  %v4073 = vunpack.c.l.b16 %v4002
  %v4074 = vunpack.c.h.b16 %v4002
  %v4075 = vunpack.c.l.b16 %v4003
  %v4076 = vunpack.c.h.b16 %v4003
  %v4077 = vunpack.c.l.b16 %v4004
  %v4078 = vunpack.c.h.b16 %v4004
  %v4079 = vunpack.c.l.b16 %v4005
  %v4080 = vunpack.c.h.b16 %v4005
  %v4081 = vunpack.c.l.b16 %v4006
  %v4082 = vunpack.c.h.b16 %v4006
  %v4083 = vunpack.c.l.b16 %v4007
  %v4084 = vunpack.c.h.b16 %v4007
  %v4085 = vunpack.c.l.b16 %v4008
  %v4086 = vunpack.c.h.b16 %v4008
  %v4087 = vunpack.c.l.b16 %v4009
  %v4088 = vunpack.c.h.b16 %v4009
  %v4089 = vunpack.c.l.b16 %v4010
  %v4090 = vunpack.c.h.b16 %v4010
  %v4091 = vunpack.c.l.b16 %v4011
  %v4092 = vunpack.c.h.b16 %v4011
  %v4093 = vunpack.c.l.b16 %v4012
  %v4094 = vunpack.c.h.b16 %v4012
  %v4095 = vunpack.c.l.b16 %v4013
  %v4096 = vunpack.c.h.b16 %v4013
  %v4097 = vunpack.c.l.b16 %v4014
  %v4098 = vunpack.c.h.b16 %v4014
  %v4099 = vunpack.c.l.b16 %v4015
  %v4100 = vunpack.c.h.b16 %v4015
  %v4101 = vunpack.c.l.b16 %v4016
  %v4102 = vunpack.c.h.b16 %v4016
  %v4103 = vunpack.c.l.b16 %v4017
  %v4104 = vunpack.c.h.b16 %v4017
  %v4105 = vunpack.c.l.b16 %v4018
  %v4106 = vunpack.c.h.b16 %v4018
  %v4107 = vunpack.c.l.b16 %v4019
  %v4108 = vunpack.c.h.b16 %v4019
  %v4109 = vunpack.c.l.b16 %v4020
  %v4110 = vunpack.c.h.b16 %v4020
  %v4111 = vunpack.c.l.b16 %v4021
  %v4112 = vunpack.c.h.b16 %v4021
  %v4113 = vunpack.c.l.b16 %v4022
  %v4114 = vunpack.c.h.b16 %v4022
  %v4115 = vunpack.c.l.b16 %v4023
  %v4116 = vunpack.c.h.b16 %v4023
  %v4117 = vunpack.c.l.b16 %v4024
  %v4118 = vunpack.c.h.b16 %v4024
  %v4119 = vunpack.c.l.b16 %v4025
  %v4120 = vunpack.c.h.b16 %v4025
  %v4121 = vunpack.c.l.b16 %v4026
  %v4122 = vunpack.c.h.b16 %v4026
  %v4123 = vpack.c.b16 %v4061, %v4059
  %v4124 = vpack.c.b16 %v4062, %v4060
  %v4125 = vpack.c.b16 %v4065, %v4063
  %v4126 = vpack.c.b16 %v4066, %v4064
  %v4127 = vpack.c.b16 %v4069, %v4067
  %v4128 = vpack.c.b16 %v4070, %v4068
  %v4129 = vpack.c.b16 %v4073, %v4071
  %v4130 = vpack.c.b16 %v4074, %v4072
  %v4131 = vpack.c.b16 %v4077, %v4075
  %v4132 = vpack.c.b16 %v4078, %v4076
  %v4133 = vpack.c.b16 %v4081, %v4079
  %v4134 = vpack.c.b16 %v4082, %v4080
  %v4135 = vpack.c.b16 %v4085, %v4083
  %v4136 = vpack.c.b16 %v4086, %v4084
  %v4137 = vpack.c.b16 %v4089, %v4087
  %v4138 = vpack.c.b16 %v4090, %v4088
  %v4139 = vpack.c.b16 %v4093, %v4091
  %v4140 = vpack.c.b16 %v4094, %v4092
  %v4141 = vpack.c.b16 %v4097, %v4095
  %v4142 = vpack.c.b16 %v4098, %v4096
  %v4143 = vpack.c.b16 %v4101, %v4099
  %v4144 = vpack.c.b16 %v4102, %v4100
  %v4145 = vpack.c.b16 %v4105, %v4103
  %v4146 = vpack.c.b16 %v4106, %v4104
  %v4147 = vpack.c.b16 %v4109, %v4107
  %v4148 = vpack.c.b16 %v4110, %v4108
  %v4149 = vpack.c.b16 %v4113, %v4111
  %v4150 = vpack.c.b16 %v4114, %v4112
  %v4151 = vpack.c.b16 %v4117, %v4115
  %v4152 = vpack.c.b16 %v4118, %v4116
  %v4153 = vpack.c.b16 %v4121, %v4119
  %v4154 = vpack.c.b16 %v4122, %v4120
  %4187 = vmatprep.subr.bf16.mxu0 %v4138
  %4188 = vmatpush1.bf16.msra.mxu0 %v4137
  %4189 = vmatprep.subr.bf16.mxu0 %v4136
  %4190 = vmatpush1.bf16.msra.mxu0 %v4135
  %4191 = vmatprep.subr.bf16.mxu0 %v4134
  %4192 = vmatpush1.bf16.msra.mxu0 %v4133
  %4193 = vmatprep.subr.bf16.mxu0 %v4132
  %4194 = vmatpush1.bf16.msra.mxu0 %v4131
  %4195 = vmatprep.subr.bf16.mxu0 %v4130
  %4196 = vmatpush1.bf16.msra.mxu0 %v4129
  %4197 = vmatprep.subr.bf16.mxu0 %v4128
  %4198 = vmatpush1.bf16.msra.mxu0 %v4127
  %4199 = vmatprep.subr.bf16.mxu0 %v4126
  %4200 = vmatpush1.bf16.msra.mxu0 %v4125
  %4201 = vmatprep.subr.bf16.mxu0 %v4124
  %4202 = vmatpush1.bf16.msra.mxu0 %v4123
  %4203 = vmatprep.subr.bf16.mxu0 %v4154
  %4204 = vmatpush2.bf16.msra.mxu0 %v4153
  %4205 = vmatprep.subr.bf16.mxu0 %v4152
  %4206 = vmatpush2.bf16.msra.mxu0 %v4151
  %4207 = vmatprep.subr.bf16.mxu0 %v4150
  %4208 = vmatpush2.bf16.msra.mxu0 %v4149
  %4209 = vmatprep.subr.bf16.mxu0 %v4148
  %4210 = vmatpush2.bf16.msra.mxu0 %v4147
  %4211 = vmatprep.subr.bf16.mxu0 %v4146
  %4212 = vmatpush2.bf16.msra.mxu0 %v4145
  %4213 = vmatprep.subr.bf16.mxu0 %v4144
  %4214 = vmatpush2.bf16.msra.mxu0 %v4143
  %4215 = vmatprep.subr.bf16.mxu0 %v4142
  %4216 = vmatpush2.bf16.msra.mxu0 %v4141
  %4217 = vmatprep.subr.bf16.mxu0 %v4140
  %4218 = vmatpush2.bf16.msra.mxu0 %v4139
  %4219 = vmatprep.mubr.bf16.mxu0 %v3993
  %4220 = vmatmul.mubr.bf16.gmra.mxu0 %v3992
  %v4221 = vpop.f32.mrf.mxu0
  %v4222 = vadd.f32 0.0, %v4221
  %v4223 = vpop.f32.mrf.mxu0
  %v4224 = vadd.f32 0.0, %v4223
  %v4225 = vpop.f32.mrf.mxu0
  %v4226 = vpop.f32.mrf.mxu0
  %4227 = vdwg.mxu0
  %4228 = vmatprep.subr.mxu0 %v53
  %4229 = vmatpush1.msra.mxu0 %v52
  %4230 = vmatprep.subr.mxu0 %v51
  %4231 = vmatpush1.msra.mxu0 %v50
  %4232 = vmatprep.subr.mxu0 %v49
  %4233 = vmatpush1.msra.mxu0 %v48
  %4234 = vmatprep.subr.mxu0 %v47
  %4235 = vmatpush1.msra.mxu0 %v46
  %4236 = vmatprep.subr.mxu0 %v45
  %4237 = vmatpush1.msra.mxu0 %v44
  %4238 = vmatprep.subr.mxu0 %v43
  %4239 = vmatpush1.msra.mxu0 %v42
  %4240 = vmatprep.subr.mxu0 %v41
  %4241 = vmatpush1.msra.mxu0 %v40
  %4242 = vmatprep.subr.mxu0 %v39
  %4243 = vmatpush1.msra.mxu0 %v38
  %4244 = vmatprep.subr.mxu0 %v37
  %4245 = vmatpush1.msra.mxu0 %v36
  %4246 = vmatprep.subr.mxu0 %v35
  %4247 = vmatpush1.msra.mxu0 %v34
  %4248 = vmatprep.subr.mxu0 %v33
  %4249 = vmatpush1.msra.mxu0 %v32
  %4250 = vmatprep.subr.mxu0 %v31
  %4251 = vmatpush1.msra.mxu0 %v30
  %4252 = vmatprep.subr.mxu0 %v29
  %4253 = vmatpush1.msra.mxu0 %v28
  %4254 = vmatprep.subr.mxu0 %v27
  %4255 = vmatpush1.msra.mxu0 %v26
  %4256 = vmatprep.subr.mxu0 %v25
  %4257 = vmatpush1.msra.mxu0 %v24
  %4258 = vmatprep.subr.mxu0 %v23
  %4259 = vmatpush1.msra.mxu0 %v22
  %4260 = vmatprep.subr.mxu0 %v85
  %4261 = vmatpush2.msra.mxu0 %v84
  %4262 = vmatprep.subr.mxu0 %v83
  %4263 = vmatpush2.msra.mxu0 %v82
  %4264 = vmatprep.subr.mxu0 %v81
  %4265 = vmatpush2.msra.mxu0 %v80
  %4266 = vmatprep.subr.mxu0 %v79
  %4267 = vmatpush2.msra.mxu0 %v78
  %4268 = vmatprep.subr.mxu0 %v77
  %4269 = vmatpush2.msra.mxu0 %v76
  %4270 = vmatprep.subr.mxu0 %v75
  %4271 = vmatpush2.msra.mxu0 %v74
  %4272 = vmatprep.subr.mxu0 %v73
  %4273 = vmatpush2.msra.mxu0 %v72
  %4274 = vmatprep.subr.mxu0 %v71
  %4275 = vmatpush2.msra.mxu0 %v70
  %4276 = vmatprep.subr.mxu0 %v69
  %4277 = vmatpush2.msra.mxu0 %v68
  %4278 = vmatprep.subr.mxu0 %v67
  %4279 = vmatpush2.msra.mxu0 %v66
  %4280 = vmatprep.subr.mxu0 %v65
  %4281 = vmatpush2.msra.mxu0 %v64
  %4282 = vmatprep.subr.mxu0 %v63
  %4283 = vmatpush2.msra.mxu0 %v62
  %4284 = vmatprep.subr.mxu0 %v61
  %4285 = vmatpush2.msra.mxu0 %v60
  %4286 = vmatprep.subr.mxu0 %v59
  %4287 = vmatpush2.msra.mxu0 %v58
  %4288 = vmatprep.subr.mxu0 %v57
  %4289 = vmatpush2.msra.mxu0 %v56
  %4290 = vmatprep.subr.mxu0 %v55
  %4291 = vmatpush2.msra.mxu0 %v54
  %4292 = vmatprep.mubr.f32.mxu0 %v4224
  %4293 = vmatmul.mubr.f32.gmra.mxu0 %v4222
  %v4294 = vpop.f32.mrf.mxu0
  %v4295 = vadd.f32 0.0, %v4294
  %v4296 = vpop.f32.mrf.mxu0
  %v4297 = vadd.f32 0.0, %v4296
  %4298 = vdwg.mxu0
  %v4299 = vmul.f32 %v4295, 0.125
  %v4300 = vmul.f32 %v4297, 0.125
  %v4301 = vsub.f32 %v4222, %v4299
  %v4302 = vsub.f32 %v4224, %v4300
  %v4303 = vmul.f32 %v4301, %v4301
  %v4304 = vmul.f32 %v4302, %v4302
  %4305 = vmatprep.subr.mxu0 %v53
  %4306 = vmatpush1.msra.mxu0 %v52
  %4307 = vmatprep.subr.mxu0 %v51
  %4308 = vmatpush1.msra.mxu0 %v50
  %4309 = vmatprep.subr.mxu0 %v49
  %4310 = vmatpush1.msra.mxu0 %v48
  %4311 = vmatprep.subr.mxu0 %v47
  %4312 = vmatpush1.msra.mxu0 %v46
  %4313 = vmatprep.subr.mxu0 %v45
  %4314 = vmatpush1.msra.mxu0 %v44
  %4315 = vmatprep.subr.mxu0 %v43
  %4316 = vmatpush1.msra.mxu0 %v42
  %4317 = vmatprep.subr.mxu0 %v41
  %4318 = vmatpush1.msra.mxu0 %v40
  %4319 = vmatprep.subr.mxu0 %v39
  %4320 = vmatpush1.msra.mxu0 %v38
  %4321 = vmatprep.subr.mxu0 %v37
  %4322 = vmatpush1.msra.mxu0 %v36
  %4323 = vmatprep.subr.mxu0 %v35
  %4324 = vmatpush1.msra.mxu0 %v34
  %4325 = vmatprep.subr.mxu0 %v33
  %4326 = vmatpush1.msra.mxu0 %v32
  %4327 = vmatprep.subr.mxu0 %v31
  %4328 = vmatpush1.msra.mxu0 %v30
  %4329 = vmatprep.subr.mxu0 %v29
  %4330 = vmatpush1.msra.mxu0 %v28
  %4331 = vmatprep.subr.mxu0 %v27
  %4332 = vmatpush1.msra.mxu0 %v26
  %4333 = vmatprep.subr.mxu0 %v25
  %4334 = vmatpush1.msra.mxu0 %v24
  %4335 = vmatprep.subr.mxu0 %v23
  %4336 = vmatpush1.msra.mxu0 %v22
  %4337 = vmatprep.subr.mxu0 %v85
  %4338 = vmatpush2.msra.mxu0 %v84
  %4339 = vmatprep.subr.mxu0 %v83
  %4340 = vmatpush2.msra.mxu0 %v82
  %4341 = vmatprep.subr.mxu0 %v81
  %4342 = vmatpush2.msra.mxu0 %v80
  %4343 = vmatprep.subr.mxu0 %v79
  %4344 = vmatpush2.msra.mxu0 %v78
  %4345 = vmatprep.subr.mxu0 %v77
  %4346 = vmatpush2.msra.mxu0 %v76
  %4347 = vmatprep.subr.mxu0 %v75
  %4348 = vmatpush2.msra.mxu0 %v74
  %4349 = vmatprep.subr.mxu0 %v73
  %4350 = vmatpush2.msra.mxu0 %v72
  %4351 = vmatprep.subr.mxu0 %v71
  %4352 = vmatpush2.msra.mxu0 %v70
  %4353 = vmatprep.subr.mxu0 %v69
  %4354 = vmatpush2.msra.mxu0 %v68
  %4355 = vmatprep.subr.mxu0 %v67
  %4356 = vmatpush2.msra.mxu0 %v66
  %4357 = vmatprep.subr.mxu0 %v65
  %4358 = vmatpush2.msra.mxu0 %v64
  %4359 = vmatprep.subr.mxu0 %v63
  %4360 = vmatpush2.msra.mxu0 %v62
  %4361 = vmatprep.subr.mxu0 %v61
  %4362 = vmatpush2.msra.mxu0 %v60
  %4363 = vmatprep.subr.mxu0 %v59
  %4364 = vmatpush2.msra.mxu0 %v58
  %4365 = vmatprep.subr.mxu0 %v57
  %4366 = vmatpush2.msra.mxu0 %v56
  %4367 = vmatprep.subr.mxu0 %v55
  %4368 = vmatpush2.msra.mxu0 %v54
  %4369 = vmatprep.mubr.f32.mxu0 %v4304
  %4370 = vmatmul.mubr.f32.gmra.mxu0 %v4303
  %v4371 = vpop.f32.mrf.mxu0
  %v4372 = vadd.f32 0.0, %v4371
  %v4373 = vpop.f32.mrf.mxu0
  %v4374 = vadd.f32 0.0, %v4373
  %4375 = vdwg.mxu0
  %v4376 = vmul.f32 %v4372, 0.125
  %v4377 = vmul.f32 %v4374, 0.125
  %v4378 = vadd.f32 %v4376, 1e-05
  %v4379 = vadd.f32 %v4377, 1e-05
  %v4380 = vrsqrt.pop %v4378
  %v4381 = vrsqrt.pop %v4379
  %v4382 = vmul.f32 %v4301, %v4380
  %v4383 = vmul.f32 %v4302, %v4381
  %v4384 = vadd.f32 %v3596, %v4382
  %v4385 = vadd.f32 %v3597, %v4383
  %v4388 = vcombine.low %v4384, %v4385
  %v4390 = vunpack.c.l.s4 1983009808
  %v4391 = vunpack.c.0.s8 %v4390
  %v4392 = vlaneseq
  %v4393 = vshrl.u32 %v4392, 7
  %v4394 = vsub.s32 %v4391, %v4393
  %v4395 = vrot.slane %v4388, %v4394
  %4397 = vst [vmem:[%s5] sm:$0xf] %v4395
  %v4398 = vld [vmem:[%s4] sm:$0xf]
  %v4399 = vadd.f32 %v4398, %v4395
  %4400 = vst [vmem:[%s6] sm:$0xf] %v4399
  // Predicated region
  $region22: #{encoder_forward.5} parent=0 // pred_check
    _
  $region23: #{encoder_forward.5} parent=0 // pred_check_branch
    %4402 = sbr.rel (0) target = $region25
  $region24: #{encoder_forward.5} parent=0 // pred_region
    _
  $region25: #{encoder_forward.5} parent=0 // pred_fallthru
    _
  // Predicated region
  $region26: #{encoder_forward.5} parent=0 // pred_check
    _
  $region27: #{encoder_forward.5} parent=0 // pred_check_branch
    %4404 = sbr.rel (0) target = $region29
  $region28: #{encoder_forward.5} parent=0 // pred_region
    _
  $region29: #{encoder_forward.5} parent=0 // pred_fallthru
    _
  // Predicated region
  $region30: #{encoder_forward.5} parent=0 // pred_check
    _
  $region31: #{encoder_forward.5} parent=0 // pred_check_branch
    %4406 = sbr.rel (0) target = $region33
  $region32: #{encoder_forward.5} parent=0 // pred_region
    _
  $region33: #{encoder_forward.5} parent=0 // pred_fallthru
    _
  // Predicated region
  $region34: #{encoder_forward.5} parent=0 // pred_check
    _
  $region35: #{encoder_forward.5} parent=0 // pred_check_branch
    %4408 = sbr.rel (0) target = $region37
  $region36: #{encoder_forward.5} parent=0 // pred_region
    _
  $region37: #{encoder_forward.5} parent=0 // pred_fallthru
    _

</llo_original>
